<compile_context>
chip_gen: v7x
topology: tpu7x:2x2x1
jax: 0.10.0
libtpu: 0.0.40
codegen_flags: <defaults>
</compile_context>

<pallas_src>
import functools

import numpy as np

import jax
import jax.numpy as jnp
from jax.experimental import pallas as pl
from jax.experimental.pallas import tpu as pltpu


def _round_up(x, m):
    return ((x + m - 1) // m) * m


# --------------------------------------------------------------------------
# Fused kernel: one batch tile (TB examples) per grid step; only 2-D dots,
# static ref indexing, adds and relus — everything stays in VMEM/vregs.
# --------------------------------------------------------------------------
def _dqn_fused_kernel(x_ref, w1_ref, b1_ref, w2_ref, b2_ref,
                      w3_ref, b3_ref, w4_ref, b4_ref, o_ref):
    f32 = jnp.float32

    # ---- conv1 + ReLU: 5 output rows, each = 3 row-Toeplitz matmuls --------
    # x_ref:  (7, TB, 7*C)   row-major rows lead, (batch, width*chan) tiled.
    # w1_ref: (3, 7*C, 5*32) Toeplitz block per kernel row offset di.
    h1 = []                                                  # 5 x (TB, 160)
    for i in range(5):
        acc = jnp.dot(x_ref[i], w1_ref[0], preferred_element_type=f32)
        for di in (1, 2):
            acc += jnp.dot(x_ref[i + di], w1_ref[di], preferred_element_type=f32)
        h1.append(jnp.maximum(acc + b1_ref[...], 0.0))

    # ---- conv2 + ReLU: 3 output rows ---------------------------------------
    # w2_ref: (3, 5*32, 3*64) Toeplitz block per kernel row offset di.
    h2 = []                                                  # 3 x (TB, 192)
    for i in range(3):
        acc = jnp.dot(h1[i], w2_ref[0], preferred_element_type=f32)
        for di in (1, 2):
            acc += jnp.dot(h1[i + di], w2_ref[di], preferred_element_type=f32)
        h2.append(jnp.maximum(acc + b2_ref[...], 0.0))

    # ---- fc1 + ReLU: 3 accumulated (TB,192)@(192,128) matmuls --------------
    acc = jnp.dot(h2[0], w3_ref[0], preferred_element_type=f32)
    for i in (1, 2):
        acc += jnp.dot(h2[i], w3_ref[i], preferred_element_type=f32)
    h3 = jnp.maximum(acc + b3_ref[...], 0.0)                 # (TB, 128)

    # ---- fc2: (TB,128)@(128,128), lane-dense padded store ------------------
    out = jnp.dot(h3, w4_ref[...], preferred_element_type=f32) + b4_ref[...]
    o_ref[...] = out.astype(o_ref.dtype)


# --------------------------------------------------------------------------
# Parameters: torch layouts at init, one-time re-layout for the kernel.
# --------------------------------------------------------------------------
def init_params(input_dim, output_dim, key):
    """Parameters in the original PyTorch layouts (OIHW conv, (out,in) fc)."""
    ks = jax.random.split(key, 8)
    s = 0.05
    return {
        "conv1_w": jax.random.normal(ks[0], (32, input_dim, 3, 3), jnp.float32) * s,
        "conv1_b": jax.random.normal(ks[1], (32,), jnp.float32) * s,
        "conv2_w": jax.random.normal(ks[2], (64, 32, 3, 3), jnp.float32) * s,
        "conv2_b": jax.random.normal(ks[3], (64,), jnp.float32) * s,
        "fc1_w": jax.random.normal(ks[4], (128, 64 * 3 * 3), jnp.float32) * s,
        "fc1_b": jax.random.normal(ks[5], (128,), jnp.float32) * s,
        "fc2_w": jax.random.normal(ks[6], (output_dim, 128), jnp.float32) * s,
        "fc2_b": jax.random.normal(ks[7], (output_dim,), jnp.float32) * s,
    }


def prepare_kernel_params(params):
    """One-time re-layout of torch-format weights into kernel-friendly blocks."""
    conv1_w = np.asarray(params["conv1_w"])   # (32, C, 3, 3) OIHW
    conv1_b = np.asarray(params["conv1_b"])
    conv2_w = np.asarray(params["conv2_w"])   # (64, 32, 3, 3)
    conv2_b = np.asarray(params["conv2_b"])
    fc1_w = np.asarray(params["fc1_w"])       # (128, 576)
    fc1_b = np.asarray(params["fc1_b"])
    fc2_w = np.asarray(params["fc2_w"])       # (out_dim, 128)
    fc2_b = np.asarray(params["fc2_b"])

    C = conv1_w.shape[1]
    out_dim = fc2_w.shape[0]
    assert out_dim <= 128, "fc2 output is lane-padded to 128; output_dim must be <= 128"

    # conv1 row-Toeplitz blocks: w1t[di, jin*C + c, jout*32 + o] = W1[o, c, di, jin - jout]
    w1t = np.zeros((3, 7 * C, 5 * 32), np.float32)
    for di in range(3):
        for j in range(5):
            for dj in range(3):
                w1t[di, (j + dj) * C:(j + dj + 1) * C, j * 32:(j + 1) * 32] = \
                    conv1_w[:, :, di, dj].T
    b1 = np.tile(conv1_b, 5).reshape(1, 5 * 32).astype(np.float32)

    # conv2 row-Toeplitz blocks: w2t[di, jin*32 + c, jout*64 + o] = W2[o, c, di, jin - jout]
    w2t = np.zeros((3, 5 * 32, 3 * 64), np.float32)
    for di in range(3):
        for j in range(3):
            for dj in range(3):
                w2t[di, (j + dj) * 32:(j + dj + 1) * 32, j * 64:(j + 1) * 64] = \
                    conv2_w[:, :, di, dj].T
    b2 = np.tile(conv2_b, 3).reshape(1, 3 * 64).astype(np.float32)

    # fc1: torch flattens NCHW (col = c*9 + i*3 + j); kernel consumes
    # h2[i][b, j*64 + c], so w3[i, j*64 + c, n] = fc1_w[n, c*9 + i*3 + j].
    w3 = (fc1_w.reshape(128, 64, 3, 3)         # [n, c, i, j]
          .transpose(2, 3, 1, 0)               # [i, j, c, n]
          .reshape(3, 3 * 64, 128)
          .astype(np.float32))
    b3 = fc1_b.reshape(1, 128).astype(np.float32)

    # fc2 stored (K, N) and zero-padded to 128 lanes for a lane-dense store.
    w4 = np.zeros((128, 128), np.float32)
    w4[:, :out_dim] = fc2_w.T
    b4 = np.zeros((1, 128), np.float32)
    b4[0, :out_dim] = fc2_b

    raw = {"w1": w1t, "b1": b1, "w2": w2t, "b2": b2,
           "w3": w3, "b3": b3, "w4": w4, "b4": b4}
    return {k: jnp.asarray(v) for k, v in raw.items()}


# --------------------------------------------------------------------------
# Forward: single fused pallas_call, batch-tiled grid.
# --------------------------------------------------------------------------
@functools.partial(jax.jit, static_argnames=("output_dim",))
def dqn_pacman_forward(kparams, x_nchw, *, output_dim):
    B, C, H, W = x_nchw.shape
    assert (H, W) == (7, 7), "fc1 = Linear(64*3*3, 128) implies 7x7 spatial input"
    assert output_dim <= 128

    # Batch tile: up to 128 examples per grid step (sublane-aligned), so large
    # batches get >= 2 tiles (lights up both v7x TensorCores via "parallel").
    TB = min(128, _round_up(B, 8))
    B_pad = _round_up(B, TB)

    # One-time input re-layout: (B,C,7,7) -> (7, B, 7*C): rows lead,
    # (batch, width*channel) are the tiled (sublane, lane) dims.
    x_slab = jnp.transpose(x_nchw, (2, 0, 3, 1)).reshape(7, B, 7 * C)
    if B_pad != B:
        x_slab = jnp.pad(x_slab, ((0, 0), (0, B_pad - B), (0, 0)))

    out_padded = pl.pallas_call(
        _dqn_fused_kernel,
        out_shape=jax.ShapeDtypeStruct((B_pad, 128), jnp.float32),
        grid=(B_pad // TB,),
        in_specs=[
            pl.BlockSpec((7, TB, 7 * C), lambda b: (0, b, 0)),        # x tile
            pl.BlockSpec((3, 7 * C, 5 * 32), lambda b: (0, 0, 0)),    # conv1 Toeplitz
            pl.BlockSpec((1, 5 * 32), lambda b: (0, 0)),              # conv1 bias
            pl.BlockSpec((3, 5 * 32, 3 * 64), lambda b: (0, 0, 0)),   # conv2 Toeplitz
            pl.BlockSpec((1, 3 * 64), lambda b: (0, 0)),              # conv2 bias
            pl.BlockSpec((3, 3 * 64, 128), lambda b: (0, 0, 0)),      # fc1 blocks
            pl.BlockSpec((1, 128), lambda b: (0, 0)),                 # fc1 bias
            pl.BlockSpec((128, 128), lambda b: (0, 0)),               # fc2 (padded)
            pl.BlockSpec((1, 128), lambda b: (0, 0)),                 # fc2 bias (padded)
        ],
        out_specs=pl.BlockSpec((TB, 128), lambda b: (b, 0)),
        compiler_params=pltpu.CompilerParams(
            dimension_semantics=("parallel",)),
    )(x_slab, kparams["w1"], kparams["b1"], kparams["w2"], kparams["b2"],
      kparams["w3"], kparams["b3"], kparams["w4"], kparams["b4"])

    return out_padded[:B, :output_dim]


# --------------------------------------------------------------------------
# Pure-JAX reference (torch-layout params) for correctness check.
# --------------------------------------------------------------------------
def reference_forward(params, x_nchw):
    def conv(x, w, b):
        y = jax.lax.conv_general_dilated(
            x, w, window_strides=(1, 1), padding="VALID",
            dimension_numbers=("NCHW", "OIHW", "NCHW"))
        return y + b.reshape(1, -1, 1, 1)

    y = jax.nn.relu(conv(x_nchw, params["conv1_w"], params["conv1_b"]))
    y = jax.nn.relu(conv(y, params["conv2_w"], params["conv2_b"]))
    y = y.reshape(y.shape[0], -1)
    y = jax.nn.relu(y @ params["fc1_w"].T + params["fc1_b"])
    return y @ params["fc2_w"].T + params["fc2_b"]


if __name__ == "__main__":
    key = jax.random.PRNGKey(0)
    k_x, k_p = jax.random.split(key)

    B, C, H, W = 2, 4, 7, 7        # 7x7 spatial implied by fc1 = Linear(64*3*3, 128)
    output_dim = 8

    x = jax.random.normal(k_x, (B, C, H, W), jnp.float32)
    params = init_params(C, output_dim, k_p)
    kparams = prepare_kernel_params(params)   # one-time weight re-layout

    out = dqn_pacman_forward(kparams, x, output_dim=output_dim)
    out = jax.block_until_ready(out)

    ref = reference_forward(params, x)
    assert out.shape == (B, output_dim), out.shape
    max_err = float(jnp.max(jnp.abs(out - ref)))
    assert max_err < 1e-4, f"max abs err {max_err}"

    print("KERNEL_OK")
</pallas_src>

<mosaic_0001>
module attributes {stable_mosaic.version = 11 : i64} {
  func.func @_dqn_fused_kernel(%arg0: i32, %arg1: memref<7x8x28xf32, #tpu.memory_space<vmem>>, %arg2: memref<3x28x160xf32, #tpu.memory_space<vmem>>, %arg3: memref<1x160xf32, #tpu.memory_space<vmem>>, %arg4: memref<3x160x192xf32, #tpu.memory_space<vmem>>, %arg5: memref<1x192xf32, #tpu.memory_space<vmem>>, %arg6: memref<3x192x128xf32, #tpu.memory_space<vmem>>, %arg7: memref<1x128xf32, #tpu.memory_space<vmem>>, %arg8: memref<128x128xf32, #tpu.memory_space<vmem>>, %arg9: memref<1x128xf32, #tpu.memory_space<vmem>>, %arg10: memref<8x128xf32, #tpu.memory_space<vmem>>) attributes {dimension_semantics = [#tpu.dimension_semantics<parallel>], iteration_bounds = array<i64: 1>, scalar_prefetch = 0 : i64, scratch_operands = 0 : i64, tpu.core_type = #tpu.core_type<tc>, window_params = [{transform_indices = @transform_0, window_bounds = array<i64: 7, 8, 28>}, {pipeline_mode = #tpu.pipeline_mode<synchronous>, transform_indices = @transform_1, window_bounds = array<i64: 3, 28, 160>}, {pipeline_mode = #tpu.pipeline_mode<synchronous>, transform_indices = @transform_2, window_bounds = array<i64: 1, 160>}, {pipeline_mode = #tpu.pipeline_mode<synchronous>, transform_indices = @transform_3, window_bounds = array<i64: 3, 160, 192>}, {pipeline_mode = #tpu.pipeline_mode<synchronous>, transform_indices = @transform_4, window_bounds = array<i64: 1, 192>}, {pipeline_mode = #tpu.pipeline_mode<synchronous>, transform_indices = @transform_5, window_bounds = array<i64: 3, 192, 128>}, {pipeline_mode = #tpu.pipeline_mode<synchronous>, transform_indices = @transform_6, window_bounds = array<i64: 1, 128>}, {pipeline_mode = #tpu.pipeline_mode<synchronous>, transform_indices = @transform_7, window_bounds = array<i64: 128, 128>}, {pipeline_mode = #tpu.pipeline_mode<synchronous>, transform_indices = @transform_8, window_bounds = array<i64: 1, 128>}, {transform_indices = @transform_9, window_bounds = array<i64: 8, 128>}]} {
    %c0 = arith.constant 0 : index
    %c0_0 = arith.constant 0 : index
    %c0_1 = arith.constant 0 : index
    %0 = vector.load %arg1[%c0, %c0_0, %c0_1] : memref<7x8x28xf32, #tpu.memory_space<vmem>>, vector<1x8x28xf32>
    %1 = vector.shape_cast %0 : vector<1x8x28xf32> to vector<8x28xf32>
    %c0_2 = arith.constant 0 : index
    %c0_3 = arith.constant 0 : index
    %c0_4 = arith.constant 0 : index
    %2 = vector.load %arg2[%c0_2, %c0_3, %c0_4] : memref<3x28x160xf32, #tpu.memory_space<vmem>>, vector<1x28x160xf32>
    %3 = vector.shape_cast %2 : vector<1x28x160xf32> to vector<28x160xf32>
    %cst = arith.constant dense<0.000000e+00> : vector<8x160xf32>
    %4 = tpu.matmul %1, %3, %cst {dimension_numbers = #tpu.dot_dimension_numbers<[1], [0], [0], [1], [0, 0, 1, 1], [], []>} : vector<8x28xf32>, vector<28x160xf32>, vector<8x160xf32> -> vector<8x160xf32>
    %c1 = arith.constant 1 : index
    %c0_5 = arith.constant 0 : index
    %c0_6 = arith.constant 0 : index
    %5 = vector.load %arg1[%c1, %c0_5, %c0_6] : memref<7x8x28xf32, #tpu.memory_space<vmem>>, vector<1x8x28xf32>
    %6 = vector.shape_cast %5 : vector<1x8x28xf32> to vector<8x28xf32>
    %c1_7 = arith.constant 1 : index
    %c0_8 = arith.constant 0 : index
    %c0_9 = arith.constant 0 : index
    %7 = vector.load %arg2[%c1_7, %c0_8, %c0_9] : memref<3x28x160xf32, #tpu.memory_space<vmem>>, vector<1x28x160xf32>
    %8 = vector.shape_cast %7 : vector<1x28x160xf32> to vector<28x160xf32>
    %cst_10 = arith.constant dense<0.000000e+00> : vector<8x160xf32>
    %9 = tpu.matmul %6, %8, %cst_10 {dimension_numbers = #tpu.dot_dimension_numbers<[1], [0], [0], [1], [0, 0, 1, 1], [], []>} : vector<8x28xf32>, vector<28x160xf32>, vector<8x160xf32> -> vector<8x160xf32>
    %10 = arith.addf %4, %9 : vector<8x160xf32>
    %c2 = arith.constant 2 : index
    %c0_11 = arith.constant 0 : index
    %c0_12 = arith.constant 0 : index
    %11 = vector.load %arg1[%c2, %c0_11, %c0_12] : memref<7x8x28xf32, #tpu.memory_space<vmem>>, vector<1x8x28xf32>
    %12 = vector.shape_cast %11 : vector<1x8x28xf32> to vector<8x28xf32>
    %c2_13 = arith.constant 2 : index
    %c0_14 = arith.constant 0 : index
    %c0_15 = arith.constant 0 : index
    %13 = vector.load %arg2[%c2_13, %c0_14, %c0_15] : memref<3x28x160xf32, #tpu.memory_space<vmem>>, vector<1x28x160xf32>
    %14 = vector.shape_cast %13 : vector<1x28x160xf32> to vector<28x160xf32>
    %cst_16 = arith.constant dense<0.000000e+00> : vector<8x160xf32>
    %15 = tpu.matmul %12, %14, %cst_16 {dimension_numbers = #tpu.dot_dimension_numbers<[1], [0], [0], [1], [0, 0, 1, 1], [], []>} : vector<8x28xf32>, vector<28x160xf32>, vector<8x160xf32> -> vector<8x160xf32>
    %16 = arith.addf %10, %15 : vector<8x160xf32>
    %c0_17 = arith.constant 0 : index
    %c0_18 = arith.constant 0 : index
    %17 = vector.load %arg3[%c0_17, %c0_18] : memref<1x160xf32, #tpu.memory_space<vmem>>, vector<1x160xf32>
    %18 = vector.broadcast %17 : vector<1x160xf32> to vector<8x160xf32>
    %19 = arith.addf %16, %18 : vector<8x160xf32>
    %cst_19 = arith.constant 0.000000e+00 : f32
    %20 = vector.broadcast %cst_19 : f32 to vector<8x160xf32>
    %21 = arith.maximumf %19, %20 : vector<8x160xf32>
    %c1_20 = arith.constant 1 : index
    %c0_21 = arith.constant 0 : index
    %c0_22 = arith.constant 0 : index
    %22 = vector.load %arg1[%c1_20, %c0_21, %c0_22] : memref<7x8x28xf32, #tpu.memory_space<vmem>>, vector<1x8x28xf32>
    %23 = vector.shape_cast %22 : vector<1x8x28xf32> to vector<8x28xf32>
    %c0_23 = arith.constant 0 : index
    %c0_24 = arith.constant 0 : index
    %c0_25 = arith.constant 0 : index
    %24 = vector.load %arg2[%c0_23, %c0_24, %c0_25] : memref<3x28x160xf32, #tpu.memory_space<vmem>>, vector<1x28x160xf32>
    %25 = vector.shape_cast %24 : vector<1x28x160xf32> to vector<28x160xf32>
    %cst_26 = arith.constant dense<0.000000e+00> : vector<8x160xf32>
    %26 = tpu.matmul %23, %25, %cst_26 {dimension_numbers = #tpu.dot_dimension_numbers<[1], [0], [0], [1], [0, 0, 1, 1], [], []>} : vector<8x28xf32>, vector<28x160xf32>, vector<8x160xf32> -> vector<8x160xf32>
    %c2_27 = arith.constant 2 : index
    %c0_28 = arith.constant 0 : index
    %c0_29 = arith.constant 0 : index
    %27 = vector.load %arg1[%c2_27, %c0_28, %c0_29] : memref<7x8x28xf32, #tpu.memory_space<vmem>>, vector<1x8x28xf32>
    %28 = vector.shape_cast %27 : vector<1x8x28xf32> to vector<8x28xf32>
    %c1_30 = arith.constant 1 : index
    %c0_31 = arith.constant 0 : index
    %c0_32 = arith.constant 0 : index
    %29 = vector.load %arg2[%c1_30, %c0_31, %c0_32] : memref<3x28x160xf32, #tpu.memory_space<vmem>>, vector<1x28x160xf32>
    %30 = vector.shape_cast %29 : vector<1x28x160xf32> to vector<28x160xf32>
    %cst_33 = arith.constant dense<0.000000e+00> : vector<8x160xf32>
    %31 = tpu.matmul %28, %30, %cst_33 {dimension_numbers = #tpu.dot_dimension_numbers<[1], [0], [0], [1], [0, 0, 1, 1], [], []>} : vector<8x28xf32>, vector<28x160xf32>, vector<8x160xf32> -> vector<8x160xf32>
    %32 = arith.addf %26, %31 : vector<8x160xf32>
    %c3 = arith.constant 3 : index
    %c0_34 = arith.constant 0 : index
    %c0_35 = arith.constant 0 : index
    %33 = vector.load %arg1[%c3, %c0_34, %c0_35] : memref<7x8x28xf32, #tpu.memory_space<vmem>>, vector<1x8x28xf32>
    %34 = vector.shape_cast %33 : vector<1x8x28xf32> to vector<8x28xf32>
    %c2_36 = arith.constant 2 : index
    %c0_37 = arith.constant 0 : index
    %c0_38 = arith.constant 0 : index
    %35 = vector.load %arg2[%c2_36, %c0_37, %c0_38] : memref<3x28x160xf32, #tpu.memory_space<vmem>>, vector<1x28x160xf32>
    %36 = vector.shape_cast %35 : vector<1x28x160xf32> to vector<28x160xf32>
    %cst_39 = arith.constant dense<0.000000e+00> : vector<8x160xf32>
    %37 = tpu.matmul %34, %36, %cst_39 {dimension_numbers = #tpu.dot_dimension_numbers<[1], [0], [0], [1], [0, 0, 1, 1], [], []>} : vector<8x28xf32>, vector<28x160xf32>, vector<8x160xf32> -> vector<8x160xf32>
    %38 = arith.addf %32, %37 : vector<8x160xf32>
    %c0_40 = arith.constant 0 : index
    %c0_41 = arith.constant 0 : index
    %39 = vector.load %arg3[%c0_40, %c0_41] : memref<1x160xf32, #tpu.memory_space<vmem>>, vector<1x160xf32>
    %40 = vector.broadcast %39 : vector<1x160xf32> to vector<8x160xf32>
    %41 = arith.addf %38, %40 : vector<8x160xf32>
    %cst_42 = arith.constant 0.000000e+00 : f32
    %42 = vector.broadcast %cst_42 : f32 to vector<8x160xf32>
    %43 = arith.maximumf %41, %42 : vector<8x160xf32>
    %c2_43 = arith.constant 2 : index
    %c0_44 = arith.constant 0 : index
    %c0_45 = arith.constant 0 : index
    %44 = vector.load %arg1[%c2_43, %c0_44, %c0_45] : memref<7x8x28xf32, #tpu.memory_space<vmem>>, vector<1x8x28xf32>
    %45 = vector.shape_cast %44 : vector<1x8x28xf32> to vector<8x28xf32>
    %c0_46 = arith.constant 0 : index
    %c0_47 = arith.constant 0 : index
    %c0_48 = arith.constant 0 : index
    %46 = vector.load %arg2[%c0_46, %c0_47, %c0_48] : memref<3x28x160xf32, #tpu.memory_space<vmem>>, vector<1x28x160xf32>
    %47 = vector.shape_cast %46 : vector<1x28x160xf32> to vector<28x160xf32>
    %cst_49 = arith.constant dense<0.000000e+00> : vector<8x160xf32>
    %48 = tpu.matmul %45, %47, %cst_49 {dimension_numbers = #tpu.dot_dimension_numbers<[1], [0], [0], [1], [0, 0, 1, 1], [], []>} : vector<8x28xf32>, vector<28x160xf32>, vector<8x160xf32> -> vector<8x160xf32>
    %c3_50 = arith.constant 3 : index
    %c0_51 = arith.constant 0 : index
    %c0_52 = arith.constant 0 : index
    %49 = vector.load %arg1[%c3_50, %c0_51, %c0_52] : memref<7x8x28xf32, #tpu.memory_space<vmem>>, vector<1x8x28xf32>
    %50 = vector.shape_cast %49 : vector<1x8x28xf32> to vector<8x28xf32>
    %c1_53 = arith.constant 1 : index
    %c0_54 = arith.constant 0 : index
    %c0_55 = arith.constant 0 : index
    %51 = vector.load %arg2[%c1_53, %c0_54, %c0_55] : memref<3x28x160xf32, #tpu.memory_space<vmem>>, vector<1x28x160xf32>
    %52 = vector.shape_cast %51 : vector<1x28x160xf32> to vector<28x160xf32>
    %cst_56 = arith.constant dense<0.000000e+00> : vector<8x160xf32>
    %53 = tpu.matmul %50, %52, %cst_56 {dimension_numbers = #tpu.dot_dimension_numbers<[1], [0], [0], [1], [0, 0, 1, 1], [], []>} : vector<8x28xf32>, vector<28x160xf32>, vector<8x160xf32> -> vector<8x160xf32>
    %54 = arith.addf %48, %53 : vector<8x160xf32>
    %c4 = arith.constant 4 : index
    %c0_57 = arith.constant 0 : index
    %c0_58 = arith.constant 0 : index
    %55 = vector.load %arg1[%c4, %c0_57, %c0_58] : memref<7x8x28xf32, #tpu.memory_space<vmem>>, vector<1x8x28xf32>
    %56 = vector.shape_cast %55 : vector<1x8x28xf32> to vector<8x28xf32>
    %c2_59 = arith.constant 2 : index
    %c0_60 = arith.constant 0 : index
    %c0_61 = arith.constant 0 : index
    %57 = vector.load %arg2[%c2_59, %c0_60, %c0_61] : memref<3x28x160xf32, #tpu.memory_space<vmem>>, vector<1x28x160xf32>
    %58 = vector.shape_cast %57 : vector<1x28x160xf32> to vector<28x160xf32>
    %cst_62 = arith.constant dense<0.000000e+00> : vector<8x160xf32>
    %59 = tpu.matmul %56, %58, %cst_62 {dimension_numbers = #tpu.dot_dimension_numbers<[1], [0], [0], [1], [0, 0, 1, 1], [], []>} : vector<8x28xf32>, vector<28x160xf32>, vector<8x160xf32> -> vector<8x160xf32>
    %60 = arith.addf %54, %59 : vector<8x160xf32>
    %c0_63 = arith.constant 0 : index
    %c0_64 = arith.constant 0 : index
    %61 = vector.load %arg3[%c0_63, %c0_64] : memref<1x160xf32, #tpu.memory_space<vmem>>, vector<1x160xf32>
    %62 = vector.broadcast %61 : vector<1x160xf32> to vector<8x160xf32>
    %63 = arith.addf %60, %62 : vector<8x160xf32>
    %cst_65 = arith.constant 0.000000e+00 : f32
    %64 = vector.broadcast %cst_65 : f32 to vector<8x160xf32>
    %65 = arith.maximumf %63, %64 : vector<8x160xf32>
    %c3_66 = arith.constant 3 : index
    %c0_67 = arith.constant 0 : index
    %c0_68 = arith.constant 0 : index
    %66 = vector.load %arg1[%c3_66, %c0_67, %c0_68] : memref<7x8x28xf32, #tpu.memory_space<vmem>>, vector<1x8x28xf32>
    %67 = vector.shape_cast %66 : vector<1x8x28xf32> to vector<8x28xf32>
    %c0_69 = arith.constant 0 : index
    %c0_70 = arith.constant 0 : index
    %c0_71 = arith.constant 0 : index
    %68 = vector.load %arg2[%c0_69, %c0_70, %c0_71] : memref<3x28x160xf32, #tpu.memory_space<vmem>>, vector<1x28x160xf32>
    %69 = vector.shape_cast %68 : vector<1x28x160xf32> to vector<28x160xf32>
    %cst_72 = arith.constant dense<0.000000e+00> : vector<8x160xf32>
    %70 = tpu.matmul %67, %69, %cst_72 {dimension_numbers = #tpu.dot_dimension_numbers<[1], [0], [0], [1], [0, 0, 1, 1], [], []>} : vector<8x28xf32>, vector<28x160xf32>, vector<8x160xf32> -> vector<8x160xf32>
    %c4_73 = arith.constant 4 : index
    %c0_74 = arith.constant 0 : index
    %c0_75 = arith.constant 0 : index
    %71 = vector.load %arg1[%c4_73, %c0_74, %c0_75] : memref<7x8x28xf32, #tpu.memory_space<vmem>>, vector<1x8x28xf32>
    %72 = vector.shape_cast %71 : vector<1x8x28xf32> to vector<8x28xf32>
    %c1_76 = arith.constant 1 : index
    %c0_77 = arith.constant 0 : index
    %c0_78 = arith.constant 0 : index
    %73 = vector.load %arg2[%c1_76, %c0_77, %c0_78] : memref<3x28x160xf32, #tpu.memory_space<vmem>>, vector<1x28x160xf32>
    %74 = vector.shape_cast %73 : vector<1x28x160xf32> to vector<28x160xf32>
    %cst_79 = arith.constant dense<0.000000e+00> : vector<8x160xf32>
    %75 = tpu.matmul %72, %74, %cst_79 {dimension_numbers = #tpu.dot_dimension_numbers<[1], [0], [0], [1], [0, 0, 1, 1], [], []>} : vector<8x28xf32>, vector<28x160xf32>, vector<8x160xf32> -> vector<8x160xf32>
    %76 = arith.addf %70, %75 : vector<8x160xf32>
    %c5 = arith.constant 5 : index
    %c0_80 = arith.constant 0 : index
    %c0_81 = arith.constant 0 : index
    %77 = vector.load %arg1[%c5, %c0_80, %c0_81] : memref<7x8x28xf32, #tpu.memory_space<vmem>>, vector<1x8x28xf32>
    %78 = vector.shape_cast %77 : vector<1x8x28xf32> to vector<8x28xf32>
    %c2_82 = arith.constant 2 : index
    %c0_83 = arith.constant 0 : index
    %c0_84 = arith.constant 0 : index
    %79 = vector.load %arg2[%c2_82, %c0_83, %c0_84] : memref<3x28x160xf32, #tpu.memory_space<vmem>>, vector<1x28x160xf32>
    %80 = vector.shape_cast %79 : vector<1x28x160xf32> to vector<28x160xf32>
    %cst_85 = arith.constant dense<0.000000e+00> : vector<8x160xf32>
    %81 = tpu.matmul %78, %80, %cst_85 {dimension_numbers = #tpu.dot_dimension_numbers<[1], [0], [0], [1], [0, 0, 1, 1], [], []>} : vector<8x28xf32>, vector<28x160xf32>, vector<8x160xf32> -> vector<8x160xf32>
    %82 = arith.addf %76, %81 : vector<8x160xf32>
    %c0_86 = arith.constant 0 : index
    %c0_87 = arith.constant 0 : index
    %83 = vector.load %arg3[%c0_86, %c0_87] : memref<1x160xf32, #tpu.memory_space<vmem>>, vector<1x160xf32>
    %84 = vector.broadcast %83 : vector<1x160xf32> to vector<8x160xf32>
    %85 = arith.addf %82, %84 : vector<8x160xf32>
    %cst_88 = arith.constant 0.000000e+00 : f32
    %86 = vector.broadcast %cst_88 : f32 to vector<8x160xf32>
    %87 = arith.maximumf %85, %86 : vector<8x160xf32>
    %c4_89 = arith.constant 4 : index
    %c0_90 = arith.constant 0 : index
    %c0_91 = arith.constant 0 : index
    %88 = vector.load %arg1[%c4_89, %c0_90, %c0_91] : memref<7x8x28xf32, #tpu.memory_space<vmem>>, vector<1x8x28xf32>
    %89 = vector.shape_cast %88 : vector<1x8x28xf32> to vector<8x28xf32>
    %c0_92 = arith.constant 0 : index
    %c0_93 = arith.constant 0 : index
    %c0_94 = arith.constant 0 : index
    %90 = vector.load %arg2[%c0_92, %c0_93, %c0_94] : memref<3x28x160xf32, #tpu.memory_space<vmem>>, vector<1x28x160xf32>
    %91 = vector.shape_cast %90 : vector<1x28x160xf32> to vector<28x160xf32>
    %cst_95 = arith.constant dense<0.000000e+00> : vector<8x160xf32>
    %92 = tpu.matmul %89, %91, %cst_95 {dimension_numbers = #tpu.dot_dimension_numbers<[1], [0], [0], [1], [0, 0, 1, 1], [], []>} : vector<8x28xf32>, vector<28x160xf32>, vector<8x160xf32> -> vector<8x160xf32>
    %c5_96 = arith.constant 5 : index
    %c0_97 = arith.constant 0 : index
    %c0_98 = arith.constant 0 : index
    %93 = vector.load %arg1[%c5_96, %c0_97, %c0_98] : memref<7x8x28xf32, #tpu.memory_space<vmem>>, vector<1x8x28xf32>
    %94 = vector.shape_cast %93 : vector<1x8x28xf32> to vector<8x28xf32>
    %c1_99 = arith.constant 1 : index
    %c0_100 = arith.constant 0 : index
    %c0_101 = arith.constant 0 : index
    %95 = vector.load %arg2[%c1_99, %c0_100, %c0_101] : memref<3x28x160xf32, #tpu.memory_space<vmem>>, vector<1x28x160xf32>
    %96 = vector.shape_cast %95 : vector<1x28x160xf32> to vector<28x160xf32>
    %cst_102 = arith.constant dense<0.000000e+00> : vector<8x160xf32>
    %97 = tpu.matmul %94, %96, %cst_102 {dimension_numbers = #tpu.dot_dimension_numbers<[1], [0], [0], [1], [0, 0, 1, 1], [], []>} : vector<8x28xf32>, vector<28x160xf32>, vector<8x160xf32> -> vector<8x160xf32>
    %98 = arith.addf %92, %97 : vector<8x160xf32>
    %c6 = arith.constant 6 : index
    %c0_103 = arith.constant 0 : index
    %c0_104 = arith.constant 0 : index
    %99 = vector.load %arg1[%c6, %c0_103, %c0_104] : memref<7x8x28xf32, #tpu.memory_space<vmem>>, vector<1x8x28xf32>
    %100 = vector.shape_cast %99 : vector<1x8x28xf32> to vector<8x28xf32>
    %c2_105 = arith.constant 2 : index
    %c0_106 = arith.constant 0 : index
    %c0_107 = arith.constant 0 : index
    %101 = vector.load %arg2[%c2_105, %c0_106, %c0_107] : memref<3x28x160xf32, #tpu.memory_space<vmem>>, vector<1x28x160xf32>
    %102 = vector.shape_cast %101 : vector<1x28x160xf32> to vector<28x160xf32>
    %cst_108 = arith.constant dense<0.000000e+00> : vector<8x160xf32>
    %103 = tpu.matmul %100, %102, %cst_108 {dimension_numbers = #tpu.dot_dimension_numbers<[1], [0], [0], [1], [0, 0, 1, 1], [], []>} : vector<8x28xf32>, vector<28x160xf32>, vector<8x160xf32> -> vector<8x160xf32>
    %104 = arith.addf %98, %103 : vector<8x160xf32>
    %c0_109 = arith.constant 0 : index
    %c0_110 = arith.constant 0 : index
    %105 = vector.load %arg3[%c0_109, %c0_110] : memref<1x160xf32, #tpu.memory_space<vmem>>, vector<1x160xf32>
    %106 = vector.broadcast %105 : vector<1x160xf32> to vector<8x160xf32>
    %107 = arith.addf %104, %106 : vector<8x160xf32>
    %cst_111 = arith.constant 0.000000e+00 : f32
    %108 = vector.broadcast %cst_111 : f32 to vector<8x160xf32>
    %109 = arith.maximumf %107, %108 : vector<8x160xf32>
    %c0_112 = arith.constant 0 : index
    %c0_113 = arith.constant 0 : index
    %c0_114 = arith.constant 0 : index
    %110 = vector.load %arg4[%c0_112, %c0_113, %c0_114] : memref<3x160x192xf32, #tpu.memory_space<vmem>>, vector<1x160x192xf32>
    %111 = vector.shape_cast %110 : vector<1x160x192xf32> to vector<160x192xf32>
    %cst_115 = arith.constant dense<0.000000e+00> : vector<8x192xf32>
    %112 = tpu.matmul %21, %111, %cst_115 {dimension_numbers = #tpu.dot_dimension_numbers<[1], [0], [0], [1], [0, 0, 1, 1], [], []>} : vector<8x160xf32>, vector<160x192xf32>, vector<8x192xf32> -> vector<8x192xf32>
    %c1_116 = arith.constant 1 : index
    %c0_117 = arith.constant 0 : index
    %c0_118 = arith.constant 0 : index
    %113 = vector.load %arg4[%c1_116, %c0_117, %c0_118] : memref<3x160x192xf32, #tpu.memory_space<vmem>>, vector<1x160x192xf32>
    %114 = vector.shape_cast %113 : vector<1x160x192xf32> to vector<160x192xf32>
    %cst_119 = arith.constant dense<0.000000e+00> : vector<8x192xf32>
    %115 = tpu.matmul %43, %114, %cst_119 {dimension_numbers = #tpu.dot_dimension_numbers<[1], [0], [0], [1], [0, 0, 1, 1], [], []>} : vector<8x160xf32>, vector<160x192xf32>, vector<8x192xf32> -> vector<8x192xf32>
    %116 = arith.addf %112, %115 : vector<8x192xf32>
    %c2_120 = arith.constant 2 : index
    %c0_121 = arith.constant 0 : index
    %c0_122 = arith.constant 0 : index
    %117 = vector.load %arg4[%c2_120, %c0_121, %c0_122] : memref<3x160x192xf32, #tpu.memory_space<vmem>>, vector<1x160x192xf32>
    %118 = vector.shape_cast %117 : vector<1x160x192xf32> to vector<160x192xf32>
    %cst_123 = arith.constant dense<0.000000e+00> : vector<8x192xf32>
    %119 = tpu.matmul %65, %118, %cst_123 {dimension_numbers = #tpu.dot_dimension_numbers<[1], [0], [0], [1], [0, 0, 1, 1], [], []>} : vector<8x160xf32>, vector<160x192xf32>, vector<8x192xf32> -> vector<8x192xf32>
    %120 = arith.addf %116, %119 : vector<8x192xf32>
    %c0_124 = arith.constant 0 : index
    %c0_125 = arith.constant 0 : index
    %121 = vector.load %arg5[%c0_124, %c0_125] : memref<1x192xf32, #tpu.memory_space<vmem>>, vector<1x192xf32>
    %122 = vector.broadcast %121 : vector<1x192xf32> to vector<8x192xf32>
    %123 = arith.addf %120, %122 : vector<8x192xf32>
    %cst_126 = arith.constant 0.000000e+00 : f32
    %124 = vector.broadcast %cst_126 : f32 to vector<8x192xf32>
    %125 = arith.maximumf %123, %124 : vector<8x192xf32>
    %c0_127 = arith.constant 0 : index
    %c0_128 = arith.constant 0 : index
    %c0_129 = arith.constant 0 : index
    %126 = vector.load %arg4[%c0_127, %c0_128, %c0_129] : memref<3x160x192xf32, #tpu.memory_space<vmem>>, vector<1x160x192xf32>
    %127 = vector.shape_cast %126 : vector<1x160x192xf32> to vector<160x192xf32>
    %cst_130 = arith.constant dense<0.000000e+00> : vector<8x192xf32>
    %128 = tpu.matmul %43, %127, %cst_130 {dimension_numbers = #tpu.dot_dimension_numbers<[1], [0], [0], [1], [0, 0, 1, 1], [], []>} : vector<8x160xf32>, vector<160x192xf32>, vector<8x192xf32> -> vector<8x192xf32>
    %c1_131 = arith.constant 1 : index
    %c0_132 = arith.constant 0 : index
    %c0_133 = arith.constant 0 : index
    %129 = vector.load %arg4[%c1_131, %c0_132, %c0_133] : memref<3x160x192xf32, #tpu.memory_space<vmem>>, vector<1x160x192xf32>
    %130 = vector.shape_cast %129 : vector<1x160x192xf32> to vector<160x192xf32>
    %cst_134 = arith.constant dense<0.000000e+00> : vector<8x192xf32>
    %131 = tpu.matmul %65, %130, %cst_134 {dimension_numbers = #tpu.dot_dimension_numbers<[1], [0], [0], [1], [0, 0, 1, 1], [], []>} : vector<8x160xf32>, vector<160x192xf32>, vector<8x192xf32> -> vector<8x192xf32>
    %132 = arith.addf %128, %131 : vector<8x192xf32>
    %c2_135 = arith.constant 2 : index
    %c0_136 = arith.constant 0 : index
    %c0_137 = arith.constant 0 : index
    %133 = vector.load %arg4[%c2_135, %c0_136, %c0_137] : memref<3x160x192xf32, #tpu.memory_space<vmem>>, vector<1x160x192xf32>
    %134 = vector.shape_cast %133 : vector<1x160x192xf32> to vector<160x192xf32>
    %cst_138 = arith.constant dense<0.000000e+00> : vector<8x192xf32>
    %135 = tpu.matmul %87, %134, %cst_138 {dimension_numbers = #tpu.dot_dimension_numbers<[1], [0], [0], [1], [0, 0, 1, 1], [], []>} : vector<8x160xf32>, vector<160x192xf32>, vector<8x192xf32> -> vector<8x192xf32>
    %136 = arith.addf %132, %135 : vector<8x192xf32>
    %c0_139 = arith.constant 0 : index
    %c0_140 = arith.constant 0 : index
    %137 = vector.load %arg5[%c0_139, %c0_140] : memref<1x192xf32, #tpu.memory_space<vmem>>, vector<1x192xf32>
    %138 = vector.broadcast %137 : vector<1x192xf32> to vector<8x192xf32>
    %139 = arith.addf %136, %138 : vector<8x192xf32>
    %cst_141 = arith.constant 0.000000e+00 : f32
    %140 = vector.broadcast %cst_141 : f32 to vector<8x192xf32>
    %141 = arith.maximumf %139, %140 : vector<8x192xf32>
    %c0_142 = arith.constant 0 : index
    %c0_143 = arith.constant 0 : index
    %c0_144 = arith.constant 0 : index
    %142 = vector.load %arg4[%c0_142, %c0_143, %c0_144] : memref<3x160x192xf32, #tpu.memory_space<vmem>>, vector<1x160x192xf32>
    %143 = vector.shape_cast %142 : vector<1x160x192xf32> to vector<160x192xf32>
    %cst_145 = arith.constant dense<0.000000e+00> : vector<8x192xf32>
    %144 = tpu.matmul %65, %143, %cst_145 {dimension_numbers = #tpu.dot_dimension_numbers<[1], [0], [0], [1], [0, 0, 1, 1], [], []>} : vector<8x160xf32>, vector<160x192xf32>, vector<8x192xf32> -> vector<8x192xf32>
    %c1_146 = arith.constant 1 : index
    %c0_147 = arith.constant 0 : index
    %c0_148 = arith.constant 0 : index
    %145 = vector.load %arg4[%c1_146, %c0_147, %c0_148] : memref<3x160x192xf32, #tpu.memory_space<vmem>>, vector<1x160x192xf32>
    %146 = vector.shape_cast %145 : vector<1x160x192xf32> to vector<160x192xf32>
    %cst_149 = arith.constant dense<0.000000e+00> : vector<8x192xf32>
    %147 = tpu.matmul %87, %146, %cst_149 {dimension_numbers = #tpu.dot_dimension_numbers<[1], [0], [0], [1], [0, 0, 1, 1], [], []>} : vector<8x160xf32>, vector<160x192xf32>, vector<8x192xf32> -> vector<8x192xf32>
    %148 = arith.addf %144, %147 : vector<8x192xf32>
    %c2_150 = arith.constant 2 : index
    %c0_151 = arith.constant 0 : index
    %c0_152 = arith.constant 0 : index
    %149 = vector.load %arg4[%c2_150, %c0_151, %c0_152] : memref<3x160x192xf32, #tpu.memory_space<vmem>>, vector<1x160x192xf32>
    %150 = vector.shape_cast %149 : vector<1x160x192xf32> to vector<160x192xf32>
    %cst_153 = arith.constant dense<0.000000e+00> : vector<8x192xf32>
    %151 = tpu.matmul %109, %150, %cst_153 {dimension_numbers = #tpu.dot_dimension_numbers<[1], [0], [0], [1], [0, 0, 1, 1], [], []>} : vector<8x160xf32>, vector<160x192xf32>, vector<8x192xf32> -> vector<8x192xf32>
    %152 = arith.addf %148, %151 : vector<8x192xf32>
    %c0_154 = arith.constant 0 : index
    %c0_155 = arith.constant 0 : index
    %153 = vector.load %arg5[%c0_154, %c0_155] : memref<1x192xf32, #tpu.memory_space<vmem>>, vector<1x192xf32>
    %154 = vector.broadcast %153 : vector<1x192xf32> to vector<8x192xf32>
    %155 = arith.addf %152, %154 : vector<8x192xf32>
    %cst_156 = arith.constant 0.000000e+00 : f32
    %156 = vector.broadcast %cst_156 : f32 to vector<8x192xf32>
    %157 = arith.maximumf %155, %156 : vector<8x192xf32>
    %c0_157 = arith.constant 0 : index
    %c0_158 = arith.constant 0 : index
    %c0_159 = arith.constant 0 : index
    %158 = vector.load %arg6[%c0_157, %c0_158, %c0_159] : memref<3x192x128xf32, #tpu.memory_space<vmem>>, vector<1x192x128xf32>
    %159 = vector.shape_cast %158 : vector<1x192x128xf32> to vector<192x128xf32>
    %cst_160 = arith.constant dense<0.000000e+00> : vector<8x128xf32>
    %160 = tpu.matmul %125, %159, %cst_160 {dimension_numbers = #tpu.dot_dimension_numbers<[1], [0], [0], [1], [0, 0, 1, 1], [], []>} : vector<8x192xf32>, vector<192x128xf32>, vector<8x128xf32> -> vector<8x128xf32>
    %c1_161 = arith.constant 1 : index
    %c0_162 = arith.constant 0 : index
    %c0_163 = arith.constant 0 : index
    %161 = vector.load %arg6[%c1_161, %c0_162, %c0_163] : memref<3x192x128xf32, #tpu.memory_space<vmem>>, vector<1x192x128xf32>
    %162 = vector.shape_cast %161 : vector<1x192x128xf32> to vector<192x128xf32>
    %cst_164 = arith.constant dense<0.000000e+00> : vector<8x128xf32>
    %163 = tpu.matmul %141, %162, %cst_164 {dimension_numbers = #tpu.dot_dimension_numbers<[1], [0], [0], [1], [0, 0, 1, 1], [], []>} : vector<8x192xf32>, vector<192x128xf32>, vector<8x128xf32> -> vector<8x128xf32>
    %164 = arith.addf %160, %163 : vector<8x128xf32>
    %c2_165 = arith.constant 2 : index
    %c0_166 = arith.constant 0 : index
    %c0_167 = arith.constant 0 : index
    %165 = vector.load %arg6[%c2_165, %c0_166, %c0_167] : memref<3x192x128xf32, #tpu.memory_space<vmem>>, vector<1x192x128xf32>
    %166 = vector.shape_cast %165 : vector<1x192x128xf32> to vector<192x128xf32>
    %cst_168 = arith.constant dense<0.000000e+00> : vector<8x128xf32>
    %167 = tpu.matmul %157, %166, %cst_168 {dimension_numbers = #tpu.dot_dimension_numbers<[1], [0], [0], [1], [0, 0, 1, 1], [], []>} : vector<8x192xf32>, vector<192x128xf32>, vector<8x128xf32> -> vector<8x128xf32>
    %168 = arith.addf %164, %167 : vector<8x128xf32>
    %c0_169 = arith.constant 0 : index
    %c0_170 = arith.constant 0 : index
    %169 = vector.load %arg7[%c0_169, %c0_170] : memref<1x128xf32, #tpu.memory_space<vmem>>, vector<1x128xf32>
    %170 = vector.broadcast %169 : vector<1x128xf32> to vector<8x128xf32>
    %171 = arith.addf %168, %170 : vector<8x128xf32>
    %cst_171 = arith.constant 0.000000e+00 : f32
    %172 = vector.broadcast %cst_171 : f32 to vector<8x128xf32>
    %173 = arith.maximumf %171, %172 : vector<8x128xf32>
    %c0_172 = arith.constant 0 : index
    %c0_173 = arith.constant 0 : index
    %174 = vector.load %arg8[%c0_172, %c0_173] : memref<128x128xf32, #tpu.memory_space<vmem>>, vector<128x128xf32>
    %cst_174 = arith.constant dense<0.000000e+00> : vector<8x128xf32>
    %175 = tpu.matmul %173, %174, %cst_174 {dimension_numbers = #tpu.dot_dimension_numbers<[1], [0], [0], [1], [0, 0, 1, 1], [], []>} : vector<8x128xf32>, vector<128x128xf32>, vector<8x128xf32> -> vector<8x128xf32>
    %c0_175 = arith.constant 0 : index
    %c0_176 = arith.constant 0 : index
    %176 = vector.load %arg9[%c0_175, %c0_176] : memref<1x128xf32, #tpu.memory_space<vmem>>, vector<1x128xf32>
    %177 = vector.broadcast %176 : vector<1x128xf32> to vector<8x128xf32>
    %178 = arith.addf %175, %177 : vector<8x128xf32>
    %c0_177 = arith.constant 0 : index
    %c0_178 = arith.constant 0 : index
    %179 = vector.load %arg10[%c0_177, %c0_178] : memref<8x128xf32, #tpu.memory_space<vmem>>, vector<8x128xf32>
    tpu.vector_store %arg10[%c0_177, %c0_178], %178 {strides = array<i32>} : memref<8x128xf32, #tpu.memory_space<vmem>>, vector<8x128xf32>,
    return
  }
  func.func @transform_0(%arg0: i32) -> (i32, i32, i32) {
    %c0_i32 = arith.constant 0 : i32
    %c0_i32_0 = arith.constant 0 : i32
    %c0_i32_1 = arith.constant 0 : i32
    return %c0_i32, %arg0, %c0_i32_0 : i32, i32, i32
  }
  func.func @transform_1(%arg0: i32) -> (i32, i32, i32) {
    %c0_i32 = arith.constant 0 : i32
    %c0_i32_0 = arith.constant 0 : i32
    %c0_i32_1 = arith.constant 0 : i32
    %c0_i32_2 = arith.constant 0 : i32
    return %c0_i32, %c0_i32_0, %c0_i32_1 : i32, i32, i32
  }
  func.func @transform_2(%arg0: i32) -> (i32, i32) {
    %c0_i32 = arith.constant 0 : i32
    %c0_i32_0 = arith.constant 0 : i32
    %c0_i32_1 = arith.constant 0 : i32
    return %c0_i32, %c0_i32_0 : i32, i32
  }
  func.func @transform_3(%arg0: i32) -> (i32, i32, i32) {
    %c0_i32 = arith.constant 0 : i32
    %c0_i32_0 = arith.constant 0 : i32
    %c0_i32_1 = arith.constant 0 : i32
    %c0_i32_2 = arith.constant 0 : i32
    return %c0_i32, %c0_i32_0, %c0_i32_1 : i32, i32, i32
  }
  func.func @transform_4(%arg0: i32) -> (i32, i32) {
    %c0_i32 = arith.constant 0 : i32
    %c0_i32_0 = arith.constant 0 : i32
    %c0_i32_1 = arith.constant 0 : i32
    return %c0_i32, %c0_i32_0 : i32, i32
  }
  func.func @transform_5(%arg0: i32) -> (i32, i32, i32) {
    %c0_i32 = arith.constant 0 : i32
    %c0_i32_0 = arith.constant 0 : i32
    %c0_i32_1 = arith.constant 0 : i32
    %c0_i32_2 = arith.constant 0 : i32
    return %c0_i32, %c0_i32_0, %c0_i32_1 : i32, i32, i32
  }
  func.func @transform_6(%arg0: i32) -> (i32, i32) {
    %c0_i32 = arith.constant 0 : i32
    %c0_i32_0 = arith.constant 0 : i32
    %c0_i32_1 = arith.constant 0 : i32
    return %c0_i32, %c0_i32_0 : i32, i32
  }
  func.func @transform_7(%arg0: i32) -> (i32, i32) {
    %c0_i32 = arith.constant 0 : i32
    %c0_i32_0 = arith.constant 0 : i32
    %c0_i32_1 = arith.constant 0 : i32
    return %c0_i32, %c0_i32_0 : i32, i32
  }
  func.func @transform_8(%arg0: i32) -> (i32, i32) {
    %c0_i32 = arith.constant 0 : i32
    %c0_i32_0 = arith.constant 0 : i32
    %c0_i32_1 = arith.constant 0 : i32
    return %c0_i32, %c0_i32_0 : i32, i32
  }
  func.func @transform_9(%arg0: i32) -> (i32, i32) {
    %c0_i32 = arith.constant 0 : i32
    %c0_i32_0 = arith.constant 0 : i32
    return %arg0, %c0_i32 : i32, i32
  }
}

</mosaic_0001>

<llo_original>
// kernel: dqn_pacman_forward.1
$region0: #{dqn_pacman_forward.1}
  #allocation0 [shape = 'u32[]', space=smem, size = 0x4, offset = 0x4, fixed_abs, tag = 'smem constant byte address 0x4 - core index']
  #allocation1 [shape = 'u32[144,128]{1,0:T(1,128)}', space=vmem, size = 0x12000, scoped, tag = 'internal scratch']
  %s0 = inlined_call_operand.vmem [shape: f32[7,8,28], index: 0, kind: input, shape index: {}]
  %s1 = inlined_call_operand.vmem [shape: f32[3,28,160], index: 1, kind: input, shape index: {}]
  %s2 = inlined_call_operand.vmem [shape: f32[1,160], index: 2, kind: input, shape index: {}]
  %s3 = inlined_call_operand.hbm [shape: f32[3,160,192], index: 3, kind: input, shape index: {}]
  %s4 = inlined_call_operand.vmem [shape: f32[1,192], index: 4, kind: input, shape index: {}]
  %s5 = inlined_call_operand.hbm [shape: f32[3,192,128], index: 5, kind: input, shape index: {}]
  %s6 = inlined_call_operand.vmem [shape: f32[1,128], index: 6, kind: input, shape index: {}]
  %s7 = inlined_call_operand.hbm [shape: f32[128,128], index: 7, kind: input, shape index: {}]
  %s8 = inlined_call_operand.vmem [shape: f32[1,128], index: 8, kind: input, shape index: {}]
  %s9 = inlined_call_operand.vmem [shape: f32[8,128], index: 9, kind: output, shape index: {}]
  %s10 = sld [smem:[#allocation0]]
  $region58: #{dqn_pacman_forward.1} parent=0
    _
  %s12 = ssub.s32 1, %s10
  %s13 = scalar_select 0, %s12, %s10
  $region1: #{dqn_pacman_forward.1} parent=0
    #allocation2 [shape = 'u8[491520]{0}', space=vmem, size = 0x78000, scoped, tag = 'input window, operand 3, single buffered']
    #allocation3 [shape = 's32[1]{0}', space=sflag, size = 0x4, scoped, tag = 'scoped memory for dqn_pacman_forward.1']
    #allocation4 [shape = 'u8[294912]{0}', space=vmem, size = 0x48000, scoped, tag = 'input window, operand 5, single buffered']
    #allocation5 [shape = 's32[1]{0}', space=sflag, size = 0x4, scoped, tag = 'scoped memory for dqn_pacman_forward.1']
    #allocation6 [shape = 'u8[65536]{0}', space=vmem, size = 0x10000, scoped, tag = 'input window, operand 7, single buffered']
    %14 = vsyncpa [#allocation3], 0
    %15 = vsyncpa [#allocation5], 0
    // Predicated region
    $region2: #{dqn_pacman_forward.1} parent=1 // pred_check
      _
    $region3: #{dqn_pacman_forward.1} parent=1 // pred_check_branch
      %17 = sbr.rel (0) target = $region5
    $region4: #{dqn_pacman_forward.1} parent=1 // pred_region
      _
    $region5: #{dqn_pacman_forward.1} parent=1 // pred_fallthru
      _
    // Predicated region
    $region6: #{dqn_pacman_forward.1} parent=1 // pred_check
      _
    $region7: #{dqn_pacman_forward.1} parent=1 // pred_check_branch
      %19 = sbr.rel (0) target = $region9
    $region8: #{dqn_pacman_forward.1} parent=1 // pred_region
      _
    $region9: #{dqn_pacman_forward.1} parent=1 // pred_fallthru
      _
    // Predicated region
    $region10: #{dqn_pacman_forward.1} parent=1 // pred_check
      _
    $region11: #{dqn_pacman_forward.1} parent=1 // pred_check_branch
      %21 = sbr.rel (0) target = $region13
    $region12: #{dqn_pacman_forward.1} parent=1 // pred_region
      _
    $region13: #{dqn_pacman_forward.1} parent=1 // pred_fallthru
      _
    // Predicated region
    $region14: #{dqn_pacman_forward.1} parent=1 // pred_check
      _
    $region15: #{dqn_pacman_forward.1} parent=1 // pred_check_branch
      %23 = sbr.rel (0) target = $region17
    $region16: #{dqn_pacman_forward.1} parent=1 // pred_region
      %s25 = ssub.s32 15360, 15360
      %26 = vsyncadd [#allocation3], %s25
      %s27 = sshll.u32 [#allocation2], 4
      %s28 = int_to_ptr.vmem [resolvable:$true] %s27
      %33 = dma.hbm_to_vmem [thread:$0]  %s3, 15360, %s28, [#allocation3], 256, 256, 16
    $region17: #{dqn_pacman_forward.1} parent=1 // pred_fallthru
      _
    // Predicated region
    $region18: #{dqn_pacman_forward.1} parent=1 // pred_check
      _
    $region19: #{dqn_pacman_forward.1} parent=1 // pred_check_branch
      %35 = sbr.rel (0) target = $region21
    $region20: #{dqn_pacman_forward.1} parent=1 // pred_region
      _
    $region21: #{dqn_pacman_forward.1} parent=1 // pred_fallthru
      _
    // Predicated region
    $region22: #{dqn_pacman_forward.1} parent=1 // pred_check
      _
    $region23: #{dqn_pacman_forward.1} parent=1 // pred_check_branch
      %37 = sbr.rel (0) target = $region25
    $region24: #{dqn_pacman_forward.1} parent=1 // pred_region
      %s39 = ssub.s32 9216, 9216
      %40 = vsyncadd [#allocation5], %s39
      %s41 = sshll.u32 [#allocation4], 4
      %s42 = int_to_ptr.vmem [resolvable:$true] %s41
      %47 = dma.hbm_to_vmem [thread:$0]  %s5, 9216, %s42, [#allocation5], 128, 128, 8
    $region25: #{dqn_pacman_forward.1} parent=1 // pred_fallthru
      _
    // Predicated region
    $region26: #{dqn_pacman_forward.1} parent=1 // pred_check
      _
    $region27: #{dqn_pacman_forward.1} parent=1 // pred_check_branch
      %49 = sbr.rel (0) target = $region29
    $region28: #{dqn_pacman_forward.1} parent=1 // pred_region
      _
    $region29: #{dqn_pacman_forward.1} parent=1 // pred_fallthru
      _
    // Predicated region
    $region30: #{dqn_pacman_forward.1} parent=1 // pred_check
      _
    $region31: #{dqn_pacman_forward.1} parent=1 // pred_check_branch
      %51 = sbr.rel (0) target = $region33
    $region32: #{dqn_pacman_forward.1} parent=1 // pred_region
      %s53 = ssub.s32 2048, 2048
      %54 = vsyncadd [#allocation5], %s53
      %s55 = sshll.u32 [#allocation6], 4
      %s56 = int_to_ptr.vmem [resolvable:$true] %s55
      %61 = dma.hbm_to_vmem [thread:$0]  %s7, 2048, %s56, [#allocation5], 128, 128, 8
    $region33: #{dqn_pacman_forward.1} parent=1 // pred_fallthru
      _
    // Predicated region
    $region34: #{dqn_pacman_forward.1} parent=1 // pred_check
      _
    $region35: #{dqn_pacman_forward.1} parent=1 // pred_check_branch
      %63 = sbr.rel (0) target = $region37
    $region36: #{dqn_pacman_forward.1} parent=1 // pred_region
      _
    $region37: #{dqn_pacman_forward.1} parent=1 // pred_fallthru
      _
    // Predicated region
    $region38: #{dqn_pacman_forward.1} parent=1 // pred_check
      _
    $region39: #{dqn_pacman_forward.1} parent=1 // pred_check_branch
      %65 = sbr.rel (0) target = $region41
    $region40: #{dqn_pacman_forward.1} parent=1 // pred_region
      %66 = dma.done [#allocation3], 15360
    $region41: #{dqn_pacman_forward.1} parent=1 // pred_fallthru
      _
    // Predicated region
    $region42: #{dqn_pacman_forward.1} parent=1 // pred_check
      _
    $region43: #{dqn_pacman_forward.1} parent=1 // pred_check_branch
      %68 = sbr.rel (0) target = $region45
    $region44: #{dqn_pacman_forward.1} parent=1 // pred_region
      %69 = dma.done [#allocation5], 9216
    $region45: #{dqn_pacman_forward.1} parent=1 // pred_fallthru
      _
    // Predicated region
    $region46: #{dqn_pacman_forward.1} parent=1 // pred_check
      _
    $region47: #{dqn_pacman_forward.1} parent=1 // pred_check_branch
      %71 = sbr.rel (0) target = $region49
    $region48: #{dqn_pacman_forward.1} parent=1 // pred_region
      %72 = dma.done [#allocation5], 2048
    $region49: #{dqn_pacman_forward.1} parent=1 // pred_fallthru
      _
    %v73 = vld [vmem:[%s0] sm:$0xff]
    %v74 = vld [vmem:[%s1] sm:$0xff]
    %v75 = vld [vmem:[%s1 + $0x8] sm:$0xff]
    %v76 = vld [vmem:[%s1 + $0x10] sm:$0xff]
    %v77 = vld [vmem:[%s1 + $0x18] sm:$0xff]
    %v78 = vld [vmem:[%s1 + $0x20] sm:$0xff]
    %v79 = vld [vmem:[%s1 + $0x28] sm:$0xff]
    %v80 = vld [vmem:[%s1 + $0x30] sm:$0xf]
    %v81 = vld [vmem:[%s1 + $0x38] sm:$0xf]
    %s82 = scalar_lea.vmem %s0, 8
    %v83 = vld [vmem:[%s82] sm:$0xff]
    %s84 = scalar_lea.vmem %s1, 64
    %v85 = vld [vmem:[%s84] sm:$0xff]
    %v86 = vld [vmem:[%s84 + $0x8] sm:$0xff]
    %v87 = vld [vmem:[%s84 + $0x10] sm:$0xff]
    %v88 = vld [vmem:[%s84 + $0x18] sm:$0xff]
    %v89 = vld [vmem:[%s84 + $0x20] sm:$0xff]
    %v90 = vld [vmem:[%s84 + $0x28] sm:$0xff]
    %v91 = vld [vmem:[%s84 + $0x30] sm:$0xf]
    %v92 = vld [vmem:[%s84 + $0x38] sm:$0xf]
    %vm93 = vcmask 228352
    %v95 = vsel %vm93, %v83, 0
    %vm97 = vcmask 1043456
    %v99 = vsel %vm97, %v91, 0
    %v102 = vsel %vm97, %v92, 0
    %104 = vmatprep.subr.mxu0 %v86
    %105 = vmatpush1.msra.mxu0 %v85
    %106 = vmatprep.subr.mxu0 %v88
    %107 = vmatpush1.msra.mxu0 %v87
    %108 = vmatprep.subr.mxu0 %v90
    %109 = vmatpush1.msra.mxu0 %v89
    %110 = vmatprep.subr.mxu0 %v102
    %111 = vmatpush1.msra.mxu0 %v99
    %112 = vmatprep.subr.mxu0 0.0
    %113 = vmatpush1.msra.mxu0 0.0
    %114 = vmatprep.subr.mxu0 0.0
    %115 = vmatpush1.msra.mxu0 0.0
    %116 = vmatprep.subr.mxu0 0.0
    %117 = vmatpush1.msra.mxu0 0.0
    %118 = vmatprep.subr.mxu0 0.0
    %119 = vmatpush1.msra.mxu0 0.0
    %120 = vmatprep.subr.mxu0 0.0
    %121 = vmatpush1.msra.mxu0 0.0
    %122 = vmatprep.subr.mxu0 0.0
    %123 = vmatpush1.msra.mxu0 0.0
    %124 = vmatprep.subr.mxu0 0.0
    %125 = vmatpush1.msra.mxu0 0.0
    %126 = vmatprep.subr.mxu0 0.0
    %127 = vmatpush1.msra.mxu0 0.0
    %128 = vmatprep.subr.mxu0 0.0
    %129 = vmatpush1.msra.mxu0 0.0
    %130 = vmatprep.subr.mxu0 0.0
    %131 = vmatpush1.msra.mxu0 0.0
    %132 = vmatprep.subr.mxu0 0.0
    %133 = vmatpush1.msra.mxu0 0.0
    %134 = vmatprep.subr.mxu0 0.0
    %135 = vmatpush1.msra.mxu0 0.0
    %136 = vmatprep.subr.mxu0 0.0
    %137 = vmatpush1.msra.mxu0 0.0
    %138 = vmatprep.subr.mxu0 0.0
    %139 = vmatpush1.msra.mxu0 0.0
    %140 = vmatprep.subr.mxu0 0.0
    %141 = vmatpush1.msra.mxu0 0.0
    %142 = vmatprep.subr.mxu0 0.0
    %143 = vmatpush1.msra.mxu0 0.0
    %144 = vmatprep.subr.mxu0 0.0
    %145 = vmatpush1.msra.mxu0 0.0
    %146 = vmatprep.subr.mxu0 0.0
    %147 = vmatpush1.msra.mxu0 0.0
    %148 = vmatprep.subr.mxu0 0.0
    %149 = vmatpush1.msra.mxu0 0.0
    %150 = vmatprep.subr.mxu0 0.0
    %151 = vmatpush1.msra.mxu0 0.0
    %152 = vmatprep.subr.mxu0 0.0
    %153 = vmatpush1.msra.mxu0 0.0
    %154 = vmatprep.subr.mxu0 0.0
    %155 = vmatpush1.msra.mxu0 0.0
    %156 = vmatprep.subr.mxu0 0.0
    %157 = vmatpush1.msra.mxu0 0.0
    %158 = vmatprep.subr.mxu0 0.0
    %159 = vmatpush1.msra.mxu0 0.0
    %160 = vmatprep.subr.mxu0 0.0
    %161 = vmatpush1.msra.mxu0 0.0
    %162 = vmatprep.subr.mxu0 0.0
    %163 = vmatpush1.msra.mxu0 0.0
    %164 = vmatprep.subr.mxu0 0.0
    %165 = vmatpush1.msra.mxu0 0.0
    %166 = vmatprep.subr.mxu0 0.0
    %167 = vmatpush1.msra.mxu0 0.0
    %168 = vmatprep.mubr.f32.mxu0 0.0
    %169 = vmatmul.mubr.f32.gmra.mrb[0].mxu0 %v95
    %v170 = vpop.f32.mrb[0].mxu0
    %v171 = vadd.f32 0.0, %v170
    %v172 = vpop.f32.mrb[0].mxu0
    %v173 = vadd.f32 0.0, %v172
    %174 = vdwg.mxu0
    %v176 = vsel %vm93, %v73, 0
    %v179 = vsel %vm97, %v80, 0
    %v182 = vsel %vm97, %v81, 0
    %184 = vmatprep.subr.mxu0 %v75
    %185 = vmatpush1.msra.mxu0 %v74
    %186 = vmatprep.subr.mxu0 %v77
    %187 = vmatpush1.msra.mxu0 %v76
    %188 = vmatprep.subr.mxu0 %v79
    %189 = vmatpush1.msra.mxu0 %v78
    %190 = vmatprep.subr.mxu0 %v182
    %191 = vmatpush1.msra.mxu0 %v179
    %192 = vmatprep.subr.mxu0 0.0
    %193 = vmatpush1.msra.mxu0 0.0
    %194 = vmatprep.subr.mxu0 0.0
    %195 = vmatpush1.msra.mxu0 0.0
    %196 = vmatprep.subr.mxu0 0.0
    %197 = vmatpush1.msra.mxu0 0.0
    %198 = vmatprep.subr.mxu0 0.0
    %199 = vmatpush1.msra.mxu0 0.0
    %200 = vmatprep.subr.mxu0 0.0
    %201 = vmatpush1.msra.mxu0 0.0
    %202 = vmatprep.subr.mxu0 0.0
    %203 = vmatpush1.msra.mxu0 0.0
    %204 = vmatprep.subr.mxu0 0.0
    %205 = vmatpush1.msra.mxu0 0.0
    %206 = vmatprep.subr.mxu0 0.0
    %207 = vmatpush1.msra.mxu0 0.0
    %208 = vmatprep.subr.mxu0 0.0
    %209 = vmatpush1.msra.mxu0 0.0
    %210 = vmatprep.subr.mxu0 0.0
    %211 = vmatpush1.msra.mxu0 0.0
    %212 = vmatprep.subr.mxu0 0.0
    %213 = vmatpush1.msra.mxu0 0.0
    %214 = vmatprep.subr.mxu0 0.0
    %215 = vmatpush1.msra.mxu0 0.0
    %216 = vmatprep.subr.mxu0 0.0
    %217 = vmatpush1.msra.mxu0 0.0
    %218 = vmatprep.subr.mxu0 0.0
    %219 = vmatpush1.msra.mxu0 0.0
    %220 = vmatprep.subr.mxu0 0.0
    %221 = vmatpush1.msra.mxu0 0.0
    %222 = vmatprep.subr.mxu0 0.0
    %223 = vmatpush1.msra.mxu0 0.0
    %224 = vmatprep.subr.mxu0 0.0
    %225 = vmatpush1.msra.mxu0 0.0
    %226 = vmatprep.subr.mxu0 0.0
    %227 = vmatpush1.msra.mxu0 0.0
    %228 = vmatprep.subr.mxu0 0.0
    %229 = vmatpush1.msra.mxu0 0.0
    %230 = vmatprep.subr.mxu0 0.0
    %231 = vmatpush1.msra.mxu0 0.0
    %232 = vmatprep.subr.mxu0 0.0
    %233 = vmatpush1.msra.mxu0 0.0
    %234 = vmatprep.subr.mxu0 0.0
    %235 = vmatpush1.msra.mxu0 0.0
    %236 = vmatprep.subr.mxu0 0.0
    %237 = vmatpush1.msra.mxu0 0.0
    %238 = vmatprep.subr.mxu0 0.0
    %239 = vmatpush1.msra.mxu0 0.0
    %240 = vmatprep.subr.mxu0 0.0
    %241 = vmatpush1.msra.mxu0 0.0
    %242 = vmatprep.subr.mxu0 0.0
    %243 = vmatpush1.msra.mxu0 0.0
    %244 = vmatprep.subr.mxu0 0.0
    %245 = vmatpush1.msra.mxu0 0.0
    %246 = vmatprep.subr.mxu0 0.0
    %247 = vmatpush1.msra.mxu0 0.0
    %248 = vmatprep.mubr.f32.mxu0 0.0
    %249 = vmatmul.mubr.f32.gmra.mrb[0].mxu0 %v176
    %v250 = vpop.f32.mrb[0].mxu0
    %v251 = vadd.f32 %v171, %v250
    %v252 = vpop.f32.mrb[0].mxu0
    %v253 = vadd.f32 %v173, %v252
    %254 = vdwg.mxu0
    %s255 = scalar_lea.vmem %s0, 16
    %v256 = vld [vmem:[%s255] sm:$0xff]
    %s257 = scalar_lea.vmem %s1, 128
    %v258 = vld [vmem:[%s257] sm:$0xff]
    %v259 = vld [vmem:[%s257 + $0x8] sm:$0xff]
    %v260 = vld [vmem:[%s257 + $0x10] sm:$0xff]
    %v261 = vld [vmem:[%s257 + $0x18] sm:$0xff]
    %v262 = vld [vmem:[%s257 + $0x20] sm:$0xff]
    %v263 = vld [vmem:[%s257 + $0x28] sm:$0xff]
    %v264 = vld [vmem:[%s257 + $0x30] sm:$0xf]
    %v265 = vld [vmem:[%s257 + $0x38] sm:$0xf]
    %v267 = vsel %vm93, %v256, 0
    %v270 = vsel %vm97, %v264, 0
    %v273 = vsel %vm97, %v265, 0
    %275 = vmatprep.subr.mxu0 %v259
    %276 = vmatpush1.msra.mxu0 %v258
    %277 = vmatprep.subr.mxu0 %v261
    %278 = vmatpush1.msra.mxu0 %v260
    %279 = vmatprep.subr.mxu0 %v263
    %280 = vmatpush1.msra.mxu0 %v262
    %281 = vmatprep.subr.mxu0 %v273
    %282 = vmatpush1.msra.mxu0 %v270
    %283 = vmatprep.subr.mxu0 0.0
    %284 = vmatpush1.msra.mxu0 0.0
    %285 = vmatprep.subr.mxu0 0.0
    %286 = vmatpush1.msra.mxu0 0.0
    %287 = vmatprep.subr.mxu0 0.0
    %288 = vmatpush1.msra.mxu0 0.0
    %289 = vmatprep.subr.mxu0 0.0
    %290 = vmatpush1.msra.mxu0 0.0
    %291 = vmatprep.subr.mxu0 0.0
    %292 = vmatpush1.msra.mxu0 0.0
    %293 = vmatprep.subr.mxu0 0.0
    %294 = vmatpush1.msra.mxu0 0.0
    %295 = vmatprep.subr.mxu0 0.0
    %296 = vmatpush1.msra.mxu0 0.0
    %297 = vmatprep.subr.mxu0 0.0
    %298 = vmatpush1.msra.mxu0 0.0
    %299 = vmatprep.subr.mxu0 0.0
    %300 = vmatpush1.msra.mxu0 0.0
    %301 = vmatprep.subr.mxu0 0.0
    %302 = vmatpush1.msra.mxu0 0.0
    %303 = vmatprep.subr.mxu0 0.0
    %304 = vmatpush1.msra.mxu0 0.0
    %305 = vmatprep.subr.mxu0 0.0
    %306 = vmatpush1.msra.mxu0 0.0
    %307 = vmatprep.subr.mxu0 0.0
    %308 = vmatpush1.msra.mxu0 0.0
    %309 = vmatprep.subr.mxu0 0.0
    %310 = vmatpush1.msra.mxu0 0.0
    %311 = vmatprep.subr.mxu0 0.0
    %312 = vmatpush1.msra.mxu0 0.0
    %313 = vmatprep.subr.mxu0 0.0
    %314 = vmatpush1.msra.mxu0 0.0
    %315 = vmatprep.subr.mxu0 0.0
    %316 = vmatpush1.msra.mxu0 0.0
    %317 = vmatprep.subr.mxu0 0.0
    %318 = vmatpush1.msra.mxu0 0.0
    %319 = vmatprep.subr.mxu0 0.0
    %320 = vmatpush1.msra.mxu0 0.0
    %321 = vmatprep.subr.mxu0 0.0
    %322 = vmatpush1.msra.mxu0 0.0
    %323 = vmatprep.subr.mxu0 0.0
    %324 = vmatpush1.msra.mxu0 0.0
    %325 = vmatprep.subr.mxu0 0.0
    %326 = vmatpush1.msra.mxu0 0.0
    %327 = vmatprep.subr.mxu0 0.0
    %328 = vmatpush1.msra.mxu0 0.0
    %329 = vmatprep.subr.mxu0 0.0
    %330 = vmatpush1.msra.mxu0 0.0
    %331 = vmatprep.subr.mxu0 0.0
    %332 = vmatpush1.msra.mxu0 0.0
    %333 = vmatprep.subr.mxu0 0.0
    %334 = vmatpush1.msra.mxu0 0.0
    %335 = vmatprep.subr.mxu0 0.0
    %336 = vmatpush1.msra.mxu0 0.0
    %337 = vmatprep.subr.mxu0 0.0
    %338 = vmatpush1.msra.mxu0 0.0
    %339 = vmatprep.mubr.f32.mxu0 0.0
    %340 = vmatmul.mubr.f32.gmra.mrb[0].mxu0 %v267
    %v341 = vpop.f32.mrb[0].mxu0
    %v342 = vadd.f32 0.0, %v341
    %v343 = vpop.f32.mrb[0].mxu0
    %v344 = vadd.f32 0.0, %v343
    %345 = vdwg.mxu0
    %v346 = vadd.f32 %v251, %v342
    %v347 = vadd.f32 %v253, %v344
    %v348 = vld [vmem:[%s2] sm:$0x3]
    %v350 = vlaneseq
    %v351 = vshrl.u32 %v350, 7
    %v352 = vsub.s32 0, %v351
    %v353 = vrot.slane %v348, %v352
    %v354 = vlaneseq
    %v355 = vshrl.u32 %v354, 7
    %v356 = vsub.s32 1, %v355
    %v357 = vrot.slane %v348, %v356
    %v360 = vadd.f32 %v346, %v353
    %v361 = vadd.f32 %v347, %v357
    %v362 = vmax.f32 %v360, 0.0
    %v363 = vmax.f32 %v361, 0.0
    %364 = vmatprep.subr.mxu0 %v86
    %365 = vmatpush1.msra.mxu0 %v85
    %366 = vmatprep.subr.mxu0 %v88
    %367 = vmatpush1.msra.mxu0 %v87
    %368 = vmatprep.subr.mxu0 %v90
    %369 = vmatpush1.msra.mxu0 %v89
    %370 = vmatprep.subr.mxu0 %v102
    %371 = vmatpush1.msra.mxu0 %v99
    %372 = vmatprep.subr.mxu0 0.0
    %373 = vmatpush1.msra.mxu0 0.0
    %374 = vmatprep.subr.mxu0 0.0
    %375 = vmatpush1.msra.mxu0 0.0
    %376 = vmatprep.subr.mxu0 0.0
    %377 = vmatpush1.msra.mxu0 0.0
    %378 = vmatprep.subr.mxu0 0.0
    %379 = vmatpush1.msra.mxu0 0.0
    %380 = vmatprep.subr.mxu0 0.0
    %381 = vmatpush1.msra.mxu0 0.0
    %382 = vmatprep.subr.mxu0 0.0
    %383 = vmatpush1.msra.mxu0 0.0
    %384 = vmatprep.subr.mxu0 0.0
    %385 = vmatpush1.msra.mxu0 0.0
    %386 = vmatprep.subr.mxu0 0.0
    %387 = vmatpush1.msra.mxu0 0.0
    %388 = vmatprep.subr.mxu0 0.0
    %389 = vmatpush1.msra.mxu0 0.0
    %390 = vmatprep.subr.mxu0 0.0
    %391 = vmatpush1.msra.mxu0 0.0
    %392 = vmatprep.subr.mxu0 0.0
    %393 = vmatpush1.msra.mxu0 0.0
    %394 = vmatprep.subr.mxu0 0.0
    %395 = vmatpush1.msra.mxu0 0.0
    %396 = vmatprep.subr.mxu0 0.0
    %397 = vmatpush1.msra.mxu0 0.0
    %398 = vmatprep.subr.mxu0 0.0
    %399 = vmatpush1.msra.mxu0 0.0
    %400 = vmatprep.subr.mxu0 0.0
    %401 = vmatpush1.msra.mxu0 0.0
    %402 = vmatprep.subr.mxu0 0.0
    %403 = vmatpush1.msra.mxu0 0.0
    %404 = vmatprep.subr.mxu0 0.0
    %405 = vmatpush1.msra.mxu0 0.0
    %406 = vmatprep.subr.mxu0 0.0
    %407 = vmatpush1.msra.mxu0 0.0
    %408 = vmatprep.subr.mxu0 0.0
    %409 = vmatpush1.msra.mxu0 0.0
    %410 = vmatprep.subr.mxu0 0.0
    %411 = vmatpush1.msra.mxu0 0.0
    %412 = vmatprep.subr.mxu0 0.0
    %413 = vmatpush1.msra.mxu0 0.0
    %414 = vmatprep.subr.mxu0 0.0
    %415 = vmatpush1.msra.mxu0 0.0
    %416 = vmatprep.subr.mxu0 0.0
    %417 = vmatpush1.msra.mxu0 0.0
    %418 = vmatprep.subr.mxu0 0.0
    %419 = vmatpush1.msra.mxu0 0.0
    %420 = vmatprep.subr.mxu0 0.0
    %421 = vmatpush1.msra.mxu0 0.0
    %422 = vmatprep.subr.mxu0 0.0
    %423 = vmatpush1.msra.mxu0 0.0
    %424 = vmatprep.subr.mxu0 0.0
    %425 = vmatpush1.msra.mxu0 0.0
    %426 = vmatprep.subr.mxu0 0.0
    %427 = vmatpush1.msra.mxu0 0.0
    %428 = vmatprep.mubr.f32.mxu0 0.0
    %429 = vmatmul.mubr.f32.gmra.mrb[0].mxu0 %v267
    %v430 = vpop.f32.mrb[0].mxu0
    %v431 = vadd.f32 0.0, %v430
    %v432 = vpop.f32.mrb[0].mxu0
    %v433 = vadd.f32 0.0, %v432
    %434 = vdwg.mxu0
    %435 = vmatprep.subr.mxu0 %v75
    %436 = vmatpush1.msra.mxu0 %v74
    %437 = vmatprep.subr.mxu0 %v77
    %438 = vmatpush1.msra.mxu0 %v76
    %439 = vmatprep.subr.mxu0 %v79
    %440 = vmatpush1.msra.mxu0 %v78
    %441 = vmatprep.subr.mxu0 %v182
    %442 = vmatpush1.msra.mxu0 %v179
    %443 = vmatprep.subr.mxu0 0.0
    %444 = vmatpush1.msra.mxu0 0.0
    %445 = vmatprep.subr.mxu0 0.0
    %446 = vmatpush1.msra.mxu0 0.0
    %447 = vmatprep.subr.mxu0 0.0
    %448 = vmatpush1.msra.mxu0 0.0
    %449 = vmatprep.subr.mxu0 0.0
    %450 = vmatpush1.msra.mxu0 0.0
    %451 = vmatprep.subr.mxu0 0.0
    %452 = vmatpush1.msra.mxu0 0.0
    %453 = vmatprep.subr.mxu0 0.0
    %454 = vmatpush1.msra.mxu0 0.0
    %455 = vmatprep.subr.mxu0 0.0
    %456 = vmatpush1.msra.mxu0 0.0
    %457 = vmatprep.subr.mxu0 0.0
    %458 = vmatpush1.msra.mxu0 0.0
    %459 = vmatprep.subr.mxu0 0.0
    %460 = vmatpush1.msra.mxu0 0.0
    %461 = vmatprep.subr.mxu0 0.0
    %462 = vmatpush1.msra.mxu0 0.0
    %463 = vmatprep.subr.mxu0 0.0
    %464 = vmatpush1.msra.mxu0 0.0
    %465 = vmatprep.subr.mxu0 0.0
    %466 = vmatpush1.msra.mxu0 0.0
    %467 = vmatprep.subr.mxu0 0.0
    %468 = vmatpush1.msra.mxu0 0.0
    %469 = vmatprep.subr.mxu0 0.0
    %470 = vmatpush1.msra.mxu0 0.0
    %471 = vmatprep.subr.mxu0 0.0
    %472 = vmatpush1.msra.mxu0 0.0
    %473 = vmatprep.subr.mxu0 0.0
    %474 = vmatpush1.msra.mxu0 0.0
    %475 = vmatprep.subr.mxu0 0.0
    %476 = vmatpush1.msra.mxu0 0.0
    %477 = vmatprep.subr.mxu0 0.0
    %478 = vmatpush1.msra.mxu0 0.0
    %479 = vmatprep.subr.mxu0 0.0
    %480 = vmatpush1.msra.mxu0 0.0
    %481 = vmatprep.subr.mxu0 0.0
    %482 = vmatpush1.msra.mxu0 0.0
    %483 = vmatprep.subr.mxu0 0.0
    %484 = vmatpush1.msra.mxu0 0.0
    %485 = vmatprep.subr.mxu0 0.0
    %486 = vmatpush1.msra.mxu0 0.0
    %487 = vmatprep.subr.mxu0 0.0
    %488 = vmatpush1.msra.mxu0 0.0
    %489 = vmatprep.subr.mxu0 0.0
    %490 = vmatpush1.msra.mxu0 0.0
    %491 = vmatprep.subr.mxu0 0.0
    %492 = vmatpush1.msra.mxu0 0.0
    %493 = vmatprep.subr.mxu0 0.0
    %494 = vmatpush1.msra.mxu0 0.0
    %495 = vmatprep.subr.mxu0 0.0
    %496 = vmatpush1.msra.mxu0 0.0
    %497 = vmatprep.subr.mxu0 0.0
    %498 = vmatpush1.msra.mxu0 0.0
    %499 = vmatprep.mubr.f32.mxu0 0.0
    %500 = vmatmul.mubr.f32.gmra.mrb[0].mxu0 %v95
    %v501 = vpop.f32.mrb[0].mxu0
    %v502 = vadd.f32 %v431, %v501
    %v503 = vpop.f32.mrb[0].mxu0
    %v504 = vadd.f32 %v433, %v503
    %505 = vdwg.mxu0
    %s506 = scalar_lea.vmem %s0, 24
    %v507 = vld [vmem:[%s506] sm:$0xff]
    %v509 = vsel %vm93, %v507, 0
    %511 = vmatprep.subr.mxu0 %v259
    %512 = vmatpush1.msra.mxu0 %v258
    %513 = vmatprep.subr.mxu0 %v261
    %514 = vmatpush1.msra.mxu0 %v260
    %515 = vmatprep.subr.mxu0 %v263
    %516 = vmatpush1.msra.mxu0 %v262
    %517 = vmatprep.subr.mxu0 %v273
    %518 = vmatpush1.msra.mxu0 %v270
    %519 = vmatprep.subr.mxu0 0.0
    %520 = vmatpush1.msra.mxu0 0.0
    %521 = vmatprep.subr.mxu0 0.0
    %522 = vmatpush1.msra.mxu0 0.0
    %523 = vmatprep.subr.mxu0 0.0
    %524 = vmatpush1.msra.mxu0 0.0
    %525 = vmatprep.subr.mxu0 0.0
    %526 = vmatpush1.msra.mxu0 0.0
    %527 = vmatprep.subr.mxu0 0.0
    %528 = vmatpush1.msra.mxu0 0.0
    %529 = vmatprep.subr.mxu0 0.0
    %530 = vmatpush1.msra.mxu0 0.0
    %531 = vmatprep.subr.mxu0 0.0
    %532 = vmatpush1.msra.mxu0 0.0
    %533 = vmatprep.subr.mxu0 0.0
    %534 = vmatpush1.msra.mxu0 0.0
    %535 = vmatprep.subr.mxu0 0.0
    %536 = vmatpush1.msra.mxu0 0.0
    %537 = vmatprep.subr.mxu0 0.0
    %538 = vmatpush1.msra.mxu0 0.0
    %539 = vmatprep.subr.mxu0 0.0
    %540 = vmatpush1.msra.mxu0 0.0
    %541 = vmatprep.subr.mxu0 0.0
    %542 = vmatpush1.msra.mxu0 0.0
    %543 = vmatprep.subr.mxu0 0.0
    %544 = vmatpush1.msra.mxu0 0.0
    %545 = vmatprep.subr.mxu0 0.0
    %546 = vmatpush1.msra.mxu0 0.0
    %547 = vmatprep.subr.mxu0 0.0
    %548 = vmatpush1.msra.mxu0 0.0
    %549 = vmatprep.subr.mxu0 0.0
    %550 = vmatpush1.msra.mxu0 0.0
    %551 = vmatprep.subr.mxu0 0.0
    %552 = vmatpush1.msra.mxu0 0.0
    %553 = vmatprep.subr.mxu0 0.0
    %554 = vmatpush1.msra.mxu0 0.0
    %555 = vmatprep.subr.mxu0 0.0
    %556 = vmatpush1.msra.mxu0 0.0
    %557 = vmatprep.subr.mxu0 0.0
    %558 = vmatpush1.msra.mxu0 0.0
    %559 = vmatprep.subr.mxu0 0.0
    %560 = vmatpush1.msra.mxu0 0.0
    %561 = vmatprep.subr.mxu0 0.0
    %562 = vmatpush1.msra.mxu0 0.0
    %563 = vmatprep.subr.mxu0 0.0
    %564 = vmatpush1.msra.mxu0 0.0
    %565 = vmatprep.subr.mxu0 0.0
    %566 = vmatpush1.msra.mxu0 0.0
    %567 = vmatprep.subr.mxu0 0.0
    %568 = vmatpush1.msra.mxu0 0.0
    %569 = vmatprep.subr.mxu0 0.0
    %570 = vmatpush1.msra.mxu0 0.0
    %571 = vmatprep.subr.mxu0 0.0
    %572 = vmatpush1.msra.mxu0 0.0
    %573 = vmatprep.subr.mxu0 0.0
    %574 = vmatpush1.msra.mxu0 0.0
    %575 = vmatprep.mubr.f32.mxu0 0.0
    %576 = vmatmul.mubr.f32.gmra.mrb[0].mxu0 %v509
    %v577 = vpop.f32.mrb[0].mxu0
    %v578 = vadd.f32 0.0, %v577
    %v579 = vpop.f32.mrb[0].mxu0
    %v580 = vadd.f32 0.0, %v579
    %581 = vdwg.mxu0
    %v582 = vadd.f32 %v502, %v578
    %v583 = vadd.f32 %v504, %v580
    %v584 = vadd.f32 %v582, %v353
    %v585 = vadd.f32 %v583, %v357
    %v586 = vmax.f32 %v584, 0.0
    %v587 = vmax.f32 %v585, 0.0
    %588 = vmatprep.subr.mxu0 %v86
    %589 = vmatpush1.msra.mxu0 %v85
    %590 = vmatprep.subr.mxu0 %v88
    %591 = vmatpush1.msra.mxu0 %v87
    %592 = vmatprep.subr.mxu0 %v90
    %593 = vmatpush1.msra.mxu0 %v89
    %594 = vmatprep.subr.mxu0 %v102
    %595 = vmatpush1.msra.mxu0 %v99
    %596 = vmatprep.subr.mxu0 0.0
    %597 = vmatpush1.msra.mxu0 0.0
    %598 = vmatprep.subr.mxu0 0.0
    %599 = vmatpush1.msra.mxu0 0.0
    %600 = vmatprep.subr.mxu0 0.0
    %601 = vmatpush1.msra.mxu0 0.0
    %602 = vmatprep.subr.mxu0 0.0
    %603 = vmatpush1.msra.mxu0 0.0
    %604 = vmatprep.subr.mxu0 0.0
    %605 = vmatpush1.msra.mxu0 0.0
    %606 = vmatprep.subr.mxu0 0.0
    %607 = vmatpush1.msra.mxu0 0.0
    %608 = vmatprep.subr.mxu0 0.0
    %609 = vmatpush1.msra.mxu0 0.0
    %610 = vmatprep.subr.mxu0 0.0
    %611 = vmatpush1.msra.mxu0 0.0
    %612 = vmatprep.subr.mxu0 0.0
    %613 = vmatpush1.msra.mxu0 0.0
    %614 = vmatprep.subr.mxu0 0.0
    %615 = vmatpush1.msra.mxu0 0.0
    %616 = vmatprep.subr.mxu0 0.0
    %617 = vmatpush1.msra.mxu0 0.0
    %618 = vmatprep.subr.mxu0 0.0
    %619 = vmatpush1.msra.mxu0 0.0
    %620 = vmatprep.subr.mxu0 0.0
    %621 = vmatpush1.msra.mxu0 0.0
    %622 = vmatprep.subr.mxu0 0.0
    %623 = vmatpush1.msra.mxu0 0.0
    %624 = vmatprep.subr.mxu0 0.0
    %625 = vmatpush1.msra.mxu0 0.0
    %626 = vmatprep.subr.mxu0 0.0
    %627 = vmatpush1.msra.mxu0 0.0
    %628 = vmatprep.subr.mxu0 0.0
    %629 = vmatpush1.msra.mxu0 0.0
    %630 = vmatprep.subr.mxu0 0.0
    %631 = vmatpush1.msra.mxu0 0.0
    %632 = vmatprep.subr.mxu0 0.0
    %633 = vmatpush1.msra.mxu0 0.0
    %634 = vmatprep.subr.mxu0 0.0
    %635 = vmatpush1.msra.mxu0 0.0
    %636 = vmatprep.subr.mxu0 0.0
    %637 = vmatpush1.msra.mxu0 0.0
    %638 = vmatprep.subr.mxu0 0.0
    %639 = vmatpush1.msra.mxu0 0.0
    %640 = vmatprep.subr.mxu0 0.0
    %641 = vmatpush1.msra.mxu0 0.0
    %642 = vmatprep.subr.mxu0 0.0
    %643 = vmatpush1.msra.mxu0 0.0
    %644 = vmatprep.subr.mxu0 0.0
    %645 = vmatpush1.msra.mxu0 0.0
    %646 = vmatprep.subr.mxu0 0.0
    %647 = vmatpush1.msra.mxu0 0.0
    %648 = vmatprep.subr.mxu0 0.0
    %649 = vmatpush1.msra.mxu0 0.0
    %650 = vmatprep.subr.mxu0 0.0
    %651 = vmatpush1.msra.mxu0 0.0
    %652 = vmatprep.mubr.f32.mxu0 0.0
    %653 = vmatmul.mubr.f32.gmra.mrb[0].mxu0 %v509
    %v654 = vpop.f32.mrb[0].mxu0
    %v655 = vadd.f32 0.0, %v654
    %v656 = vpop.f32.mrb[0].mxu0
    %v657 = vadd.f32 0.0, %v656
    %658 = vdwg.mxu0
    %659 = vmatprep.subr.mxu0 %v75
    %660 = vmatpush1.msra.mxu0 %v74
    %661 = vmatprep.subr.mxu0 %v77
    %662 = vmatpush1.msra.mxu0 %v76
    %663 = vmatprep.subr.mxu0 %v79
    %664 = vmatpush1.msra.mxu0 %v78
    %665 = vmatprep.subr.mxu0 %v182
    %666 = vmatpush1.msra.mxu0 %v179
    %667 = vmatprep.subr.mxu0 0.0
    %668 = vmatpush1.msra.mxu0 0.0
    %669 = vmatprep.subr.mxu0 0.0
    %670 = vmatpush1.msra.mxu0 0.0
    %671 = vmatprep.subr.mxu0 0.0
    %672 = vmatpush1.msra.mxu0 0.0
    %673 = vmatprep.subr.mxu0 0.0
    %674 = vmatpush1.msra.mxu0 0.0
    %675 = vmatprep.subr.mxu0 0.0
    %676 = vmatpush1.msra.mxu0 0.0
    %677 = vmatprep.subr.mxu0 0.0
    %678 = vmatpush1.msra.mxu0 0.0
    %679 = vmatprep.subr.mxu0 0.0
    %680 = vmatpush1.msra.mxu0 0.0
    %681 = vmatprep.subr.mxu0 0.0
    %682 = vmatpush1.msra.mxu0 0.0
    %683 = vmatprep.subr.mxu0 0.0
    %684 = vmatpush1.msra.mxu0 0.0
    %685 = vmatprep.subr.mxu0 0.0
    %686 = vmatpush1.msra.mxu0 0.0
    %687 = vmatprep.subr.mxu0 0.0
    %688 = vmatpush1.msra.mxu0 0.0
    %689 = vmatprep.subr.mxu0 0.0
    %690 = vmatpush1.msra.mxu0 0.0
    %691 = vmatprep.subr.mxu0 0.0
    %692 = vmatpush1.msra.mxu0 0.0
    %693 = vmatprep.subr.mxu0 0.0
    %694 = vmatpush1.msra.mxu0 0.0
    %695 = vmatprep.subr.mxu0 0.0
    %696 = vmatpush1.msra.mxu0 0.0
    %697 = vmatprep.subr.mxu0 0.0
    %698 = vmatpush1.msra.mxu0 0.0
    %699 = vmatprep.subr.mxu0 0.0
    %700 = vmatpush1.msra.mxu0 0.0
    %701 = vmatprep.subr.mxu0 0.0
    %702 = vmatpush1.msra.mxu0 0.0
    %703 = vmatprep.subr.mxu0 0.0
    %704 = vmatpush1.msra.mxu0 0.0
    %705 = vmatprep.subr.mxu0 0.0
    %706 = vmatpush1.msra.mxu0 0.0
    %707 = vmatprep.subr.mxu0 0.0
    %708 = vmatpush1.msra.mxu0 0.0
    %709 = vmatprep.subr.mxu0 0.0
    %710 = vmatpush1.msra.mxu0 0.0
    %711 = vmatprep.subr.mxu0 0.0
    %712 = vmatpush1.msra.mxu0 0.0
    %713 = vmatprep.subr.mxu0 0.0
    %714 = vmatpush1.msra.mxu0 0.0
    %715 = vmatprep.subr.mxu0 0.0
    %716 = vmatpush1.msra.mxu0 0.0
    %717 = vmatprep.subr.mxu0 0.0
    %718 = vmatpush1.msra.mxu0 0.0
    %719 = vmatprep.subr.mxu0 0.0
    %720 = vmatpush1.msra.mxu0 0.0
    %721 = vmatprep.subr.mxu0 0.0
    %722 = vmatpush1.msra.mxu0 0.0
    %723 = vmatprep.mubr.f32.mxu0 0.0
    %724 = vmatmul.mubr.f32.gmra.mrb[0].mxu0 %v267
    %v725 = vpop.f32.mrb[0].mxu0
    %v726 = vadd.f32 %v655, %v725
    %v727 = vpop.f32.mrb[0].mxu0
    %v728 = vadd.f32 %v657, %v727
    %729 = vdwg.mxu0
    %s730 = scalar_lea.vmem %s0, 32
    %v731 = vld [vmem:[%s730] sm:$0xff]
    %v733 = vsel %vm93, %v731, 0
    %735 = vmatprep.subr.mxu0 %v259
    %736 = vmatpush1.msra.mxu0 %v258
    %737 = vmatprep.subr.mxu0 %v261
    %738 = vmatpush1.msra.mxu0 %v260
    %739 = vmatprep.subr.mxu0 %v263
    %740 = vmatpush1.msra.mxu0 %v262
    %741 = vmatprep.subr.mxu0 %v273
    %742 = vmatpush1.msra.mxu0 %v270
    %743 = vmatprep.subr.mxu0 0.0
    %744 = vmatpush1.msra.mxu0 0.0
    %745 = vmatprep.subr.mxu0 0.0
    %746 = vmatpush1.msra.mxu0 0.0
    %747 = vmatprep.subr.mxu0 0.0
    %748 = vmatpush1.msra.mxu0 0.0
    %749 = vmatprep.subr.mxu0 0.0
    %750 = vmatpush1.msra.mxu0 0.0
    %751 = vmatprep.subr.mxu0 0.0
    %752 = vmatpush1.msra.mxu0 0.0
    %753 = vmatprep.subr.mxu0 0.0
    %754 = vmatpush1.msra.mxu0 0.0
    %755 = vmatprep.subr.mxu0 0.0
    %756 = vmatpush1.msra.mxu0 0.0
    %757 = vmatprep.subr.mxu0 0.0
    %758 = vmatpush1.msra.mxu0 0.0
    %759 = vmatprep.subr.mxu0 0.0
    %760 = vmatpush1.msra.mxu0 0.0
    %761 = vmatprep.subr.mxu0 0.0
    %762 = vmatpush1.msra.mxu0 0.0
    %763 = vmatprep.subr.mxu0 0.0
    %764 = vmatpush1.msra.mxu0 0.0
    %765 = vmatprep.subr.mxu0 0.0
    %766 = vmatpush1.msra.mxu0 0.0
    %767 = vmatprep.subr.mxu0 0.0
    %768 = vmatpush1.msra.mxu0 0.0
    %769 = vmatprep.subr.mxu0 0.0
    %770 = vmatpush1.msra.mxu0 0.0
    %771 = vmatprep.subr.mxu0 0.0
    %772 = vmatpush1.msra.mxu0 0.0
    %773 = vmatprep.subr.mxu0 0.0
    %774 = vmatpush1.msra.mxu0 0.0
    %775 = vmatprep.subr.mxu0 0.0
    %776 = vmatpush1.msra.mxu0 0.0
    %777 = vmatprep.subr.mxu0 0.0
    %778 = vmatpush1.msra.mxu0 0.0
    %779 = vmatprep.subr.mxu0 0.0
    %780 = vmatpush1.msra.mxu0 0.0
    %781 = vmatprep.subr.mxu0 0.0
    %782 = vmatpush1.msra.mxu0 0.0
    %783 = vmatprep.subr.mxu0 0.0
    %784 = vmatpush1.msra.mxu0 0.0
    %785 = vmatprep.subr.mxu0 0.0
    %786 = vmatpush1.msra.mxu0 0.0
    %787 = vmatprep.subr.mxu0 0.0
    %788 = vmatpush1.msra.mxu0 0.0
    %789 = vmatprep.subr.mxu0 0.0
    %790 = vmatpush1.msra.mxu0 0.0
    %791 = vmatprep.subr.mxu0 0.0
    %792 = vmatpush1.msra.mxu0 0.0
    %793 = vmatprep.subr.mxu0 0.0
    %794 = vmatpush1.msra.mxu0 0.0
    %795 = vmatprep.subr.mxu0 0.0
    %796 = vmatpush1.msra.mxu0 0.0
    %797 = vmatprep.subr.mxu0 0.0
    %798 = vmatpush1.msra.mxu0 0.0
    %799 = vmatprep.mubr.f32.mxu0 0.0
    %800 = vmatmul.mubr.f32.gmra.mrb[0].mxu0 %v733
    %v801 = vpop.f32.mrb[0].mxu0
    %v802 = vadd.f32 0.0, %v801
    %v803 = vpop.f32.mrb[0].mxu0
    %v804 = vadd.f32 0.0, %v803
    %805 = vdwg.mxu0
    %v806 = vadd.f32 %v726, %v802
    %v807 = vadd.f32 %v728, %v804
    %v808 = vadd.f32 %v806, %v353
    %v809 = vadd.f32 %v807, %v357
    %v810 = vmax.f32 %v808, 0.0
    %v811 = vmax.f32 %v809, 0.0
    %812 = vmatprep.subr.mxu0 %v86
    %813 = vmatpush1.msra.mxu0 %v85
    %814 = vmatprep.subr.mxu0 %v88
    %815 = vmatpush1.msra.mxu0 %v87
    %816 = vmatprep.subr.mxu0 %v90
    %817 = vmatpush1.msra.mxu0 %v89
    %818 = vmatprep.subr.mxu0 %v102
    %819 = vmatpush1.msra.mxu0 %v99
    %820 = vmatprep.subr.mxu0 0.0
    %821 = vmatpush1.msra.mxu0 0.0
    %822 = vmatprep.subr.mxu0 0.0
    %823 = vmatpush1.msra.mxu0 0.0
    %824 = vmatprep.subr.mxu0 0.0
    %825 = vmatpush1.msra.mxu0 0.0
    %826 = vmatprep.subr.mxu0 0.0
    %827 = vmatpush1.msra.mxu0 0.0
    %828 = vmatprep.subr.mxu0 0.0
    %829 = vmatpush1.msra.mxu0 0.0
    %830 = vmatprep.subr.mxu0 0.0
    %831 = vmatpush1.msra.mxu0 0.0
    %832 = vmatprep.subr.mxu0 0.0
    %833 = vmatpush1.msra.mxu0 0.0
    %834 = vmatprep.subr.mxu0 0.0
    %835 = vmatpush1.msra.mxu0 0.0
    %836 = vmatprep.subr.mxu0 0.0
    %837 = vmatpush1.msra.mxu0 0.0
    %838 = vmatprep.subr.mxu0 0.0
    %839 = vmatpush1.msra.mxu0 0.0
    %840 = vmatprep.subr.mxu0 0.0
    %841 = vmatpush1.msra.mxu0 0.0
    %842 = vmatprep.subr.mxu0 0.0
    %843 = vmatpush1.msra.mxu0 0.0
    %844 = vmatprep.subr.mxu0 0.0
    %845 = vmatpush1.msra.mxu0 0.0
    %846 = vmatprep.subr.mxu0 0.0
    %847 = vmatpush1.msra.mxu0 0.0
    %848 = vmatprep.subr.mxu0 0.0
    %849 = vmatpush1.msra.mxu0 0.0
    %850 = vmatprep.subr.mxu0 0.0
    %851 = vmatpush1.msra.mxu0 0.0
    %852 = vmatprep.subr.mxu0 0.0
    %853 = vmatpush1.msra.mxu0 0.0
    %854 = vmatprep.subr.mxu0 0.0
    %855 = vmatpush1.msra.mxu0 0.0
    %856 = vmatprep.subr.mxu0 0.0
    %857 = vmatpush1.msra.mxu0 0.0
    %858 = vmatprep.subr.mxu0 0.0
    %859 = vmatpush1.msra.mxu0 0.0
    %860 = vmatprep.subr.mxu0 0.0
    %861 = vmatpush1.msra.mxu0 0.0
    %862 = vmatprep.subr.mxu0 0.0
    %863 = vmatpush1.msra.mxu0 0.0
    %864 = vmatprep.subr.mxu0 0.0
    %865 = vmatpush1.msra.mxu0 0.0
    %866 = vmatprep.subr.mxu0 0.0
    %867 = vmatpush1.msra.mxu0 0.0
    %868 = vmatprep.subr.mxu0 0.0
    %869 = vmatpush1.msra.mxu0 0.0
    %870 = vmatprep.subr.mxu0 0.0
    %871 = vmatpush1.msra.mxu0 0.0
    %872 = vmatprep.subr.mxu0 0.0
    %873 = vmatpush1.msra.mxu0 0.0
    %874 = vmatprep.subr.mxu0 0.0
    %875 = vmatpush1.msra.mxu0 0.0
    %876 = vmatprep.mubr.f32.mxu0 0.0
    %877 = vmatmul.mubr.f32.gmra.mrb[0].mxu0 %v733
    %v878 = vpop.f32.mrb[0].mxu0
    %v879 = vadd.f32 0.0, %v878
    %v880 = vpop.f32.mrb[0].mxu0
    %v881 = vadd.f32 0.0, %v880
    %882 = vdwg.mxu0
    %883 = vmatprep.subr.mxu0 %v75
    %884 = vmatpush1.msra.mxu0 %v74
    %885 = vmatprep.subr.mxu0 %v77
    %886 = vmatpush1.msra.mxu0 %v76
    %887 = vmatprep.subr.mxu0 %v79
    %888 = vmatpush1.msra.mxu0 %v78
    %889 = vmatprep.subr.mxu0 %v182
    %890 = vmatpush1.msra.mxu0 %v179
    %891 = vmatprep.subr.mxu0 0.0
    %892 = vmatpush1.msra.mxu0 0.0
    %893 = vmatprep.subr.mxu0 0.0
    %894 = vmatpush1.msra.mxu0 0.0
    %895 = vmatprep.subr.mxu0 0.0
    %896 = vmatpush1.msra.mxu0 0.0
    %897 = vmatprep.subr.mxu0 0.0
    %898 = vmatpush1.msra.mxu0 0.0
    %899 = vmatprep.subr.mxu0 0.0
    %900 = vmatpush1.msra.mxu0 0.0
    %901 = vmatprep.subr.mxu0 0.0
    %902 = vmatpush1.msra.mxu0 0.0
    %903 = vmatprep.subr.mxu0 0.0
    %904 = vmatpush1.msra.mxu0 0.0
    %905 = vmatprep.subr.mxu0 0.0
    %906 = vmatpush1.msra.mxu0 0.0
    %907 = vmatprep.subr.mxu0 0.0
    %908 = vmatpush1.msra.mxu0 0.0
    %909 = vmatprep.subr.mxu0 0.0
    %910 = vmatpush1.msra.mxu0 0.0
    %911 = vmatprep.subr.mxu0 0.0
    %912 = vmatpush1.msra.mxu0 0.0
    %913 = vmatprep.subr.mxu0 0.0
    %914 = vmatpush1.msra.mxu0 0.0
    %915 = vmatprep.subr.mxu0 0.0
    %916 = vmatpush1.msra.mxu0 0.0
    %917 = vmatprep.subr.mxu0 0.0
    %918 = vmatpush1.msra.mxu0 0.0
    %919 = vmatprep.subr.mxu0 0.0
    %920 = vmatpush1.msra.mxu0 0.0
    %921 = vmatprep.subr.mxu0 0.0
    %922 = vmatpush1.msra.mxu0 0.0
    %923 = vmatprep.subr.mxu0 0.0
    %924 = vmatpush1.msra.mxu0 0.0
    %925 = vmatprep.subr.mxu0 0.0
    %926 = vmatpush1.msra.mxu0 0.0
    %927 = vmatprep.subr.mxu0 0.0
    %928 = vmatpush1.msra.mxu0 0.0
    %929 = vmatprep.subr.mxu0 0.0
    %930 = vmatpush1.msra.mxu0 0.0
    %931 = vmatprep.subr.mxu0 0.0
    %932 = vmatpush1.msra.mxu0 0.0
    %933 = vmatprep.subr.mxu0 0.0
    %934 = vmatpush1.msra.mxu0 0.0
    %935 = vmatprep.subr.mxu0 0.0
    %936 = vmatpush1.msra.mxu0 0.0
    %937 = vmatprep.subr.mxu0 0.0
    %938 = vmatpush1.msra.mxu0 0.0
    %939 = vmatprep.subr.mxu0 0.0
    %940 = vmatpush1.msra.mxu0 0.0
    %941 = vmatprep.subr.mxu0 0.0
    %942 = vmatpush1.msra.mxu0 0.0
    %943 = vmatprep.subr.mxu0 0.0
    %944 = vmatpush1.msra.mxu0 0.0
    %945 = vmatprep.subr.mxu0 0.0
    %946 = vmatpush1.msra.mxu0 0.0
    %947 = vmatprep.mubr.f32.mxu0 0.0
    %948 = vmatmul.mubr.f32.gmra.mrb[0].mxu0 %v509
    %v949 = vpop.f32.mrb[0].mxu0
    %v950 = vadd.f32 %v879, %v949
    %v951 = vpop.f32.mrb[0].mxu0
    %v952 = vadd.f32 %v881, %v951
    %953 = vdwg.mxu0
    %s954 = scalar_lea.vmem %s0, 40
    %v955 = vld [vmem:[%s954] sm:$0xff]
    %v957 = vsel %vm93, %v955, 0
    %959 = vmatprep.subr.mxu0 %v259
    %960 = vmatpush1.msra.mxu0 %v258
    %961 = vmatprep.subr.mxu0 %v261
    %962 = vmatpush1.msra.mxu0 %v260
    %963 = vmatprep.subr.mxu0 %v263
    %964 = vmatpush1.msra.mxu0 %v262
    %965 = vmatprep.subr.mxu0 %v273
    %966 = vmatpush1.msra.mxu0 %v270
    %967 = vmatprep.subr.mxu0 0.0
    %968 = vmatpush1.msra.mxu0 0.0
    %969 = vmatprep.subr.mxu0 0.0
    %970 = vmatpush1.msra.mxu0 0.0
    %971 = vmatprep.subr.mxu0 0.0
    %972 = vmatpush1.msra.mxu0 0.0
    %973 = vmatprep.subr.mxu0 0.0
    %974 = vmatpush1.msra.mxu0 0.0
    %975 = vmatprep.subr.mxu0 0.0
    %976 = vmatpush1.msra.mxu0 0.0
    %977 = vmatprep.subr.mxu0 0.0
    %978 = vmatpush1.msra.mxu0 0.0
    %979 = vmatprep.subr.mxu0 0.0
    %980 = vmatpush1.msra.mxu0 0.0
    %981 = vmatprep.subr.mxu0 0.0
    %982 = vmatpush1.msra.mxu0 0.0
    %983 = vmatprep.subr.mxu0 0.0
    %984 = vmatpush1.msra.mxu0 0.0
    %985 = vmatprep.subr.mxu0 0.0
    %986 = vmatpush1.msra.mxu0 0.0
    %987 = vmatprep.subr.mxu0 0.0
    %988 = vmatpush1.msra.mxu0 0.0
    %989 = vmatprep.subr.mxu0 0.0
    %990 = vmatpush1.msra.mxu0 0.0
    %991 = vmatprep.subr.mxu0 0.0
    %992 = vmatpush1.msra.mxu0 0.0
    %993 = vmatprep.subr.mxu0 0.0
    %994 = vmatpush1.msra.mxu0 0.0
    %995 = vmatprep.subr.mxu0 0.0
    %996 = vmatpush1.msra.mxu0 0.0
    %997 = vmatprep.subr.mxu0 0.0
    %998 = vmatpush1.msra.mxu0 0.0
    %999 = vmatprep.subr.mxu0 0.0
    %1000 = vmatpush1.msra.mxu0 0.0
    %1001 = vmatprep.subr.mxu0 0.0
    %1002 = vmatpush1.msra.mxu0 0.0
    %1003 = vmatprep.subr.mxu0 0.0
    %1004 = vmatpush1.msra.mxu0 0.0
    %1005 = vmatprep.subr.mxu0 0.0
    %1006 = vmatpush1.msra.mxu0 0.0
    %1007 = vmatprep.subr.mxu0 0.0
    %1008 = vmatpush1.msra.mxu0 0.0
    %1009 = vmatprep.subr.mxu0 0.0
    %1010 = vmatpush1.msra.mxu0 0.0
    %1011 = vmatprep.subr.mxu0 0.0
    %1012 = vmatpush1.msra.mxu0 0.0
    %1013 = vmatprep.subr.mxu0 0.0
    %1014 = vmatpush1.msra.mxu0 0.0
    %1015 = vmatprep.subr.mxu0 0.0
    %1016 = vmatpush1.msra.mxu0 0.0
    %1017 = vmatprep.subr.mxu0 0.0
    %1018 = vmatpush1.msra.mxu0 0.0
    %1019 = vmatprep.subr.mxu0 0.0
    %1020 = vmatpush1.msra.mxu0 0.0
    %1021 = vmatprep.subr.mxu0 0.0
    %1022 = vmatpush1.msra.mxu0 0.0
    %1023 = vmatprep.mubr.f32.mxu0 0.0
    %1024 = vmatmul.mubr.f32.gmra.mrb[0].mxu0 %v957
    %v1025 = vpop.f32.mrb[0].mxu0
    %v1026 = vadd.f32 0.0, %v1025
    %v1027 = vpop.f32.mrb[0].mxu0
    %v1028 = vadd.f32 0.0, %v1027
    %1029 = vdwg.mxu0
    %v1030 = vadd.f32 %v950, %v1026
    %v1031 = vadd.f32 %v952, %v1028
    %v1032 = vadd.f32 %v1030, %v353
    %v1033 = vadd.f32 %v1031, %v357
    %v1034 = vmax.f32 %v1032, 0.0
    %v1035 = vmax.f32 %v1033, 0.0
    %1036 = vmatprep.subr.mxu0 %v86
    %1037 = vmatpush1.msra.mxu0 %v85
    %1038 = vmatprep.subr.mxu0 %v88
    %1039 = vmatpush1.msra.mxu0 %v87
    %1040 = vmatprep.subr.mxu0 %v90
    %1041 = vmatpush1.msra.mxu0 %v89
    %1042 = vmatprep.subr.mxu0 %v102
    %1043 = vmatpush1.msra.mxu0 %v99
    %1044 = vmatprep.subr.mxu0 0.0
    %1045 = vmatpush1.msra.mxu0 0.0
    %1046 = vmatprep.subr.mxu0 0.0
    %1047 = vmatpush1.msra.mxu0 0.0
    %1048 = vmatprep.subr.mxu0 0.0
    %1049 = vmatpush1.msra.mxu0 0.0
    %1050 = vmatprep.subr.mxu0 0.0
    %1051 = vmatpush1.msra.mxu0 0.0
    %1052 = vmatprep.subr.mxu0 0.0
    %1053 = vmatpush1.msra.mxu0 0.0
    %1054 = vmatprep.subr.mxu0 0.0
    %1055 = vmatpush1.msra.mxu0 0.0
    %1056 = vmatprep.subr.mxu0 0.0
    %1057 = vmatpush1.msra.mxu0 0.0
    %1058 = vmatprep.subr.mxu0 0.0
    %1059 = vmatpush1.msra.mxu0 0.0
    %1060 = vmatprep.subr.mxu0 0.0
    %1061 = vmatpush1.msra.mxu0 0.0
    %1062 = vmatprep.subr.mxu0 0.0
    %1063 = vmatpush1.msra.mxu0 0.0
    %1064 = vmatprep.subr.mxu0 0.0
    %1065 = vmatpush1.msra.mxu0 0.0
    %1066 = vmatprep.subr.mxu0 0.0
    %1067 = vmatpush1.msra.mxu0 0.0
    %1068 = vmatprep.subr.mxu0 0.0
    %1069 = vmatpush1.msra.mxu0 0.0
    %1070 = vmatprep.subr.mxu0 0.0
    %1071 = vmatpush1.msra.mxu0 0.0
    %1072 = vmatprep.subr.mxu0 0.0
    %1073 = vmatpush1.msra.mxu0 0.0
    %1074 = vmatprep.subr.mxu0 0.0
    %1075 = vmatpush1.msra.mxu0 0.0
    %1076 = vmatprep.subr.mxu0 0.0
    %1077 = vmatpush1.msra.mxu0 0.0
    %1078 = vmatprep.subr.mxu0 0.0
    %1079 = vmatpush1.msra.mxu0 0.0
    %1080 = vmatprep.subr.mxu0 0.0
    %1081 = vmatpush1.msra.mxu0 0.0
    %1082 = vmatprep.subr.mxu0 0.0
    %1083 = vmatpush1.msra.mxu0 0.0
    %1084 = vmatprep.subr.mxu0 0.0
    %1085 = vmatpush1.msra.mxu0 0.0
    %1086 = vmatprep.subr.mxu0 0.0
    %1087 = vmatpush1.msra.mxu0 0.0
    %1088 = vmatprep.subr.mxu0 0.0
    %1089 = vmatpush1.msra.mxu0 0.0
    %1090 = vmatprep.subr.mxu0 0.0
    %1091 = vmatpush1.msra.mxu0 0.0
    %1092 = vmatprep.subr.mxu0 0.0
    %1093 = vmatpush1.msra.mxu0 0.0
    %1094 = vmatprep.subr.mxu0 0.0
    %1095 = vmatpush1.msra.mxu0 0.0
    %1096 = vmatprep.subr.mxu0 0.0
    %1097 = vmatpush1.msra.mxu0 0.0
    %1098 = vmatprep.subr.mxu0 0.0
    %1099 = vmatpush1.msra.mxu0 0.0
    %1100 = vmatprep.mubr.f32.mxu0 0.0
    %1101 = vmatmul.mubr.f32.gmra.mrb[0].mxu0 %v957
    %v1102 = vpop.f32.mrb[0].mxu0
    %v1103 = vadd.f32 0.0, %v1102
    %v1104 = vpop.f32.mrb[0].mxu0
    %v1105 = vadd.f32 0.0, %v1104
    %1106 = vdwg.mxu0
    %1107 = vmatprep.subr.mxu0 %v75
    %1108 = vmatpush1.msra.mxu0 %v74
    %1109 = vmatprep.subr.mxu0 %v77
    %1110 = vmatpush1.msra.mxu0 %v76
    %1111 = vmatprep.subr.mxu0 %v79
    %1112 = vmatpush1.msra.mxu0 %v78
    %1113 = vmatprep.subr.mxu0 %v182
    %1114 = vmatpush1.msra.mxu0 %v179
    %1115 = vmatprep.subr.mxu0 0.0
    %1116 = vmatpush1.msra.mxu0 0.0
    %1117 = vmatprep.subr.mxu0 0.0
    %1118 = vmatpush1.msra.mxu0 0.0
    %1119 = vmatprep.subr.mxu0 0.0
    %1120 = vmatpush1.msra.mxu0 0.0
    %1121 = vmatprep.subr.mxu0 0.0
    %1122 = vmatpush1.msra.mxu0 0.0
    %1123 = vmatprep.subr.mxu0 0.0
    %1124 = vmatpush1.msra.mxu0 0.0
    %1125 = vmatprep.subr.mxu0 0.0
    %1126 = vmatpush1.msra.mxu0 0.0
    %1127 = vmatprep.subr.mxu0 0.0
    %1128 = vmatpush1.msra.mxu0 0.0
    %1129 = vmatprep.subr.mxu0 0.0
    %1130 = vmatpush1.msra.mxu0 0.0
    %1131 = vmatprep.subr.mxu0 0.0
    %1132 = vmatpush1.msra.mxu0 0.0
    %1133 = vmatprep.subr.mxu0 0.0
    %1134 = vmatpush1.msra.mxu0 0.0
    %1135 = vmatprep.subr.mxu0 0.0
    %1136 = vmatpush1.msra.mxu0 0.0
    %1137 = vmatprep.subr.mxu0 0.0
    %1138 = vmatpush1.msra.mxu0 0.0
    %1139 = vmatprep.subr.mxu0 0.0
    %1140 = vmatpush1.msra.mxu0 0.0
    %1141 = vmatprep.subr.mxu0 0.0
    %1142 = vmatpush1.msra.mxu0 0.0
    %1143 = vmatprep.subr.mxu0 0.0
    %1144 = vmatpush1.msra.mxu0 0.0
    %1145 = vmatprep.subr.mxu0 0.0
    %1146 = vmatpush1.msra.mxu0 0.0
    %1147 = vmatprep.subr.mxu0 0.0
    %1148 = vmatpush1.msra.mxu0 0.0
    %1149 = vmatprep.subr.mxu0 0.0
    %1150 = vmatpush1.msra.mxu0 0.0
    %1151 = vmatprep.subr.mxu0 0.0
    %1152 = vmatpush1.msra.mxu0 0.0
    %1153 = vmatprep.subr.mxu0 0.0
    %1154 = vmatpush1.msra.mxu0 0.0
    %1155 = vmatprep.subr.mxu0 0.0
    %1156 = vmatpush1.msra.mxu0 0.0
    %1157 = vmatprep.subr.mxu0 0.0
    %1158 = vmatpush1.msra.mxu0 0.0
    %1159 = vmatprep.subr.mxu0 0.0
    %1160 = vmatpush1.msra.mxu0 0.0
    %1161 = vmatprep.subr.mxu0 0.0
    %1162 = vmatpush1.msra.mxu0 0.0
    %1163 = vmatprep.subr.mxu0 0.0
    %1164 = vmatpush1.msra.mxu0 0.0
    %1165 = vmatprep.subr.mxu0 0.0
    %1166 = vmatpush1.msra.mxu0 0.0
    %1167 = vmatprep.subr.mxu0 0.0
    %1168 = vmatpush1.msra.mxu0 0.0
    %1169 = vmatprep.subr.mxu0 0.0
    %1170 = vmatpush1.msra.mxu0 0.0
    %1171 = vmatprep.mubr.f32.mxu0 0.0
    %1172 = vmatmul.mubr.f32.gmra.mrb[0].mxu0 %v733
    %v1173 = vpop.f32.mrb[0].mxu0
    %v1174 = vadd.f32 %v1103, %v1173
    %v1175 = vpop.f32.mrb[0].mxu0
    %v1176 = vadd.f32 %v1105, %v1175
    %1177 = vdwg.mxu0
    %s1178 = scalar_lea.vmem %s0, 48
    %v1179 = vld [vmem:[%s1178] sm:$0xff]
    %v1181 = vsel %vm93, %v1179, 0
    %1183 = vmatprep.subr.mxu0 %v259
    %1184 = vmatpush1.msra.mxu0 %v258
    %1185 = vmatprep.subr.mxu0 %v261
    %1186 = vmatpush1.msra.mxu0 %v260
    %1187 = vmatprep.subr.mxu0 %v263
    %1188 = vmatpush1.msra.mxu0 %v262
    %1189 = vmatprep.subr.mxu0 %v273
    %1190 = vmatpush1.msra.mxu0 %v270
    %1191 = vmatprep.subr.mxu0 0.0
    %1192 = vmatpush1.msra.mxu0 0.0
    %1193 = vmatprep.subr.mxu0 0.0
    %1194 = vmatpush1.msra.mxu0 0.0
    %1195 = vmatprep.subr.mxu0 0.0
    %1196 = vmatpush1.msra.mxu0 0.0
    %1197 = vmatprep.subr.mxu0 0.0
    %1198 = vmatpush1.msra.mxu0 0.0
    %1199 = vmatprep.subr.mxu0 0.0
    %1200 = vmatpush1.msra.mxu0 0.0
    %1201 = vmatprep.subr.mxu0 0.0
    %1202 = vmatpush1.msra.mxu0 0.0
    %1203 = vmatprep.subr.mxu0 0.0
    %1204 = vmatpush1.msra.mxu0 0.0
    %1205 = vmatprep.subr.mxu0 0.0
    %1206 = vmatpush1.msra.mxu0 0.0
    %1207 = vmatprep.subr.mxu0 0.0
    %1208 = vmatpush1.msra.mxu0 0.0
    %1209 = vmatprep.subr.mxu0 0.0
    %1210 = vmatpush1.msra.mxu0 0.0
    %1211 = vmatprep.subr.mxu0 0.0
    %1212 = vmatpush1.msra.mxu0 0.0
    %1213 = vmatprep.subr.mxu0 0.0
    %1214 = vmatpush1.msra.mxu0 0.0
    %1215 = vmatprep.subr.mxu0 0.0
    %1216 = vmatpush1.msra.mxu0 0.0
    %1217 = vmatprep.subr.mxu0 0.0
    %1218 = vmatpush1.msra.mxu0 0.0
    %1219 = vmatprep.subr.mxu0 0.0
    %1220 = vmatpush1.msra.mxu0 0.0
    %1221 = vmatprep.subr.mxu0 0.0
    %1222 = vmatpush1.msra.mxu0 0.0
    %1223 = vmatprep.subr.mxu0 0.0
    %1224 = vmatpush1.msra.mxu0 0.0
    %1225 = vmatprep.subr.mxu0 0.0
    %1226 = vmatpush1.msra.mxu0 0.0
    %1227 = vmatprep.subr.mxu0 0.0
    %1228 = vmatpush1.msra.mxu0 0.0
    %1229 = vmatprep.subr.mxu0 0.0
    %1230 = vmatpush1.msra.mxu0 0.0
    %1231 = vmatprep.subr.mxu0 0.0
    %1232 = vmatpush1.msra.mxu0 0.0
    %1233 = vmatprep.subr.mxu0 0.0
    %1234 = vmatpush1.msra.mxu0 0.0
    %1235 = vmatprep.subr.mxu0 0.0
    %1236 = vmatpush1.msra.mxu0 0.0
    %1237 = vmatprep.subr.mxu0 0.0
    %1238 = vmatpush1.msra.mxu0 0.0
    %1239 = vmatprep.subr.mxu0 0.0
    %1240 = vmatpush1.msra.mxu0 0.0
    %1241 = vmatprep.subr.mxu0 0.0
    %1242 = vmatpush1.msra.mxu0 0.0
    %1243 = vmatprep.subr.mxu0 0.0
    %1244 = vmatpush1.msra.mxu0 0.0
    %1245 = vmatprep.subr.mxu0 0.0
    %1246 = vmatpush1.msra.mxu0 0.0
    %1247 = vmatprep.mubr.f32.mxu0 0.0
    %1248 = vmatmul.mubr.f32.gmra.mrb[0].mxu0 %v1181
    %v1249 = vpop.f32.mrb[0].mxu0
    %v1250 = vadd.f32 0.0, %v1249
    %v1251 = vpop.f32.mrb[0].mxu0
    %v1252 = vadd.f32 0.0, %v1251
    %1253 = vdwg.mxu0
    %v1254 = vadd.f32 %v1174, %v1250
    %v1255 = vadd.f32 %v1176, %v1252
    %v1256 = vadd.f32 %v1254, %v353
    %v1257 = vadd.f32 %v1255, %v357
    %v1258 = vmax.f32 %v1256, 0.0
    %v1259 = vmax.f32 %v1257, 0.0
    %v1260 = vld [vmem:[#allocation2] sm:$0xff]
    %v1261 = vld [vmem:[#allocation2 + $0x8] sm:$0xff]
    %v1262 = vld [vmem:[#allocation2 + $0x10] sm:$0xff]
    %v1263 = vld [vmem:[#allocation2 + $0x18] sm:$0xff]
    %v1264 = vld [vmem:[#allocation2 + $0x20] sm:$0xff]
    %v1265 = vld [vmem:[#allocation2 + $0x28] sm:$0xff]
    %v1266 = vld [vmem:[#allocation2 + $0x30] sm:$0xff]
    %v1267 = vld [vmem:[#allocation2 + $0x38] sm:$0xff]
    %v1268 = vld [vmem:[#allocation2 + $0x40] sm:$0xff]
    %v1269 = vld [vmem:[#allocation2 + $0x48] sm:$0xff]
    %v1270 = vld [vmem:[#allocation2 + $0x50] sm:$0xff]
    %v1271 = vld [vmem:[#allocation2 + $0x58] sm:$0xff]
    %v1272 = vld [vmem:[#allocation2 + $0x60] sm:$0xff]
    %v1273 = vld [vmem:[#allocation2 + $0x68] sm:$0xff]
    %v1274 = vld [vmem:[#allocation2 + $0x70] sm:$0xff]
    %v1275 = vld [vmem:[#allocation2 + $0x78] sm:$0xff]
    %v1276 = vld [vmem:[#allocation2 + $0x80] sm:$0xff]
    %v1277 = vld [vmem:[#allocation2 + $0x88] sm:$0xff]
    %v1278 = vld [vmem:[#allocation2 + $0x90] sm:$0xff]
    %v1279 = vld [vmem:[#allocation2 + $0x98] sm:$0xff]
    %v1280 = vld [vmem:[#allocation2 + $0xa0] sm:$0xff]
    %v1281 = vld [vmem:[#allocation2 + $0xa8] sm:$0xff]
    %v1282 = vld [vmem:[#allocation2 + $0xb0] sm:$0xff]
    %v1283 = vld [vmem:[#allocation2 + $0xb8] sm:$0xff]
    %v1284 = vld [vmem:[#allocation2 + $0xc0] sm:$0xff]
    %v1285 = vld [vmem:[#allocation2 + $0xc8] sm:$0xff]
    %v1286 = vld [vmem:[#allocation2 + $0xd0] sm:$0xff]
    %v1287 = vld [vmem:[#allocation2 + $0xd8] sm:$0xff]
    %v1288 = vld [vmem:[#allocation2 + $0xe0] sm:$0xff]
    %v1289 = vld [vmem:[#allocation2 + $0xe8] sm:$0xff]
    %v1290 = vld [vmem:[#allocation2 + $0xf0] sm:$0xff]
    %v1291 = vld [vmem:[#allocation2 + $0xf8] sm:$0xff]
    %v1292 = vld [vmem:[#allocation2 + $0x100] sm:$0xff]
    %v1293 = vld [vmem:[#allocation2 + $0x108] sm:$0xff]
    %v1294 = vld [vmem:[#allocation2 + $0x110] sm:$0xff]
    %v1295 = vld [vmem:[#allocation2 + $0x118] sm:$0xff]
    %v1296 = vld [vmem:[#allocation2 + $0x120] sm:$0xff]
    %v1297 = vld [vmem:[#allocation2 + $0x128] sm:$0xff]
    %v1298 = vld [vmem:[#allocation2 + $0x130] sm:$0xff]
    %v1299 = vld [vmem:[#allocation2 + $0x138] sm:$0xff]
    %s1300 = scalar_lea.vmem [#allocation2], 320
    %v1301 = vld [vmem:[%s1300] sm:$0xff]
    %v1302 = vld [vmem:[%s1300 + $0x8] sm:$0xff]
    %v1303 = vld [vmem:[%s1300 + $0x10] sm:$0xff]
    %v1304 = vld [vmem:[%s1300 + $0x18] sm:$0xff]
    %v1305 = vld [vmem:[%s1300 + $0x20] sm:$0xff]
    %v1306 = vld [vmem:[%s1300 + $0x28] sm:$0xff]
    %v1307 = vld [vmem:[%s1300 + $0x30] sm:$0xff]
    %v1308 = vld [vmem:[%s1300 + $0x38] sm:$0xff]
    %v1309 = vld [vmem:[%s1300 + $0x40] sm:$0xff]
    %v1310 = vld [vmem:[%s1300 + $0x48] sm:$0xff]
    %v1311 = vld [vmem:[%s1300 + $0x50] sm:$0xff]
    %v1312 = vld [vmem:[%s1300 + $0x58] sm:$0xff]
    %v1313 = vld [vmem:[%s1300 + $0x60] sm:$0xff]
    %v1314 = vld [vmem:[%s1300 + $0x68] sm:$0xff]
    %v1315 = vld [vmem:[%s1300 + $0x70] sm:$0xff]
    %v1316 = vld [vmem:[%s1300 + $0x78] sm:$0xff]
    %v1317 = vld [vmem:[%s1300 + $0x80] sm:$0xff]
    %v1318 = vld [vmem:[%s1300 + $0x88] sm:$0xff]
    %v1319 = vld [vmem:[%s1300 + $0x90] sm:$0xff]
    %v1320 = vld [vmem:[%s1300 + $0x98] sm:$0xff]
    %v1321 = vld [vmem:[%s1300 + $0xa0] sm:$0xff]
    %v1322 = vld [vmem:[%s1300 + $0xa8] sm:$0xff]
    %v1323 = vld [vmem:[%s1300 + $0xb0] sm:$0xff]
    %v1324 = vld [vmem:[%s1300 + $0xb8] sm:$0xff]
    %v1325 = vld [vmem:[%s1300 + $0xc0] sm:$0xff]
    %v1326 = vld [vmem:[%s1300 + $0xc8] sm:$0xff]
    %v1327 = vld [vmem:[%s1300 + $0xd0] sm:$0xff]
    %v1328 = vld [vmem:[%s1300 + $0xd8] sm:$0xff]
    %v1329 = vld [vmem:[%s1300 + $0xe0] sm:$0xff]
    %v1330 = vld [vmem:[%s1300 + $0xe8] sm:$0xff]
    %v1331 = vld [vmem:[%s1300 + $0xf0] sm:$0xff]
    %v1332 = vld [vmem:[%s1300 + $0xf8] sm:$0xff]
    %v1333 = vld [vmem:[%s1300 + $0x100] sm:$0xff]
    %v1334 = vld [vmem:[%s1300 + $0x108] sm:$0xff]
    %v1335 = vld [vmem:[%s1300 + $0x110] sm:$0xff]
    %v1336 = vld [vmem:[%s1300 + $0x118] sm:$0xff]
    %v1337 = vld [vmem:[%s1300 + $0x120] sm:$0xff]
    %v1338 = vld [vmem:[%s1300 + $0x128] sm:$0xff]
    %v1339 = vld [vmem:[%s1300 + $0x130] sm:$0xff]
    %v1340 = vld [vmem:[%s1300 + $0x138] sm:$0xff]
    %vm1341 = vcmask 261120
    %v1343 = vsel %vm1341, %v587, 0
    %1345 = vmatprep.subr.mxu0 %v1302
    %1346 = vmatpush1.msra.mxu0 %v1301
    %1347 = vmatprep.subr.mxu0 %v1304
    %1348 = vmatpush1.msra.mxu0 %v1303
    %1349 = vmatprep.subr.mxu0 %v1306
    %1350 = vmatpush1.msra.mxu0 %v1305
    %1351 = vmatprep.subr.mxu0 %v1308
    %1352 = vmatpush1.msra.mxu0 %v1307
    %1353 = vmatprep.subr.mxu0 %v1310
    %1354 = vmatpush1.msra.mxu0 %v1309
    %1355 = vmatprep.subr.mxu0 %v1312
    %1356 = vmatpush1.msra.mxu0 %v1311
    %1357 = vmatprep.subr.mxu0 %v1314
    %1358 = vmatpush1.msra.mxu0 %v1313
    %1359 = vmatprep.subr.mxu0 %v1316
    %1360 = vmatpush1.msra.mxu0 %v1315
    %1361 = vmatprep.subr.mxu0 %v1318
    %1362 = vmatpush1.msra.mxu0 %v1317
    %1363 = vmatprep.subr.mxu0 %v1320
    %1364 = vmatpush1.msra.mxu0 %v1319
    %1365 = vmatprep.subr.mxu0 %v1322
    %1366 = vmatpush1.msra.mxu0 %v1321
    %1367 = vmatprep.subr.mxu0 %v1324
    %1368 = vmatpush1.msra.mxu0 %v1323
    %1369 = vmatprep.subr.mxu0 %v1326
    %1370 = vmatpush1.msra.mxu0 %v1325
    %1371 = vmatprep.subr.mxu0 %v1328
    %1372 = vmatpush1.msra.mxu0 %v1327
    %1373 = vmatprep.subr.mxu0 %v1330
    %1374 = vmatpush1.msra.mxu0 %v1329
    %1375 = vmatprep.subr.mxu0 %v1332
    %1376 = vmatpush1.msra.mxu0 %v1331
    %1377 = vmatprep.subr.mxu0 %v1334
    %1378 = vmatpush1.msra.mxu0 %v1333
    %1379 = vmatprep.subr.mxu0 %v1336
    %1380 = vmatpush1.msra.mxu0 %v1335
    %1381 = vmatprep.subr.mxu0 %v1338
    %1382 = vmatpush1.msra.mxu0 %v1337
    %1383 = vmatprep.subr.mxu0 %v1340
    %1384 = vmatpush1.msra.mxu0 %v1339
    %1385 = vmatprep.subr.mxu0 0.0
    %1386 = vmatpush1.msra.mxu0 0.0
    %1387 = vmatprep.subr.mxu0 0.0
    %1388 = vmatpush1.msra.mxu0 0.0
    %1389 = vmatprep.subr.mxu0 0.0
    %1390 = vmatpush1.msra.mxu0 0.0
    %1391 = vmatprep.subr.mxu0 0.0
    %1392 = vmatpush1.msra.mxu0 0.0
    %1393 = vmatprep.subr.mxu0 0.0
    %1394 = vmatpush1.msra.mxu0 0.0
    %1395 = vmatprep.subr.mxu0 0.0
    %1396 = vmatpush1.msra.mxu0 0.0
    %1397 = vmatprep.subr.mxu0 0.0
    %1398 = vmatpush1.msra.mxu0 0.0
    %1399 = vmatprep.subr.mxu0 0.0
    %1400 = vmatpush1.msra.mxu0 0.0
    %1401 = vmatprep.subr.mxu0 0.0
    %1402 = vmatpush1.msra.mxu0 0.0
    %1403 = vmatprep.subr.mxu0 0.0
    %1404 = vmatpush1.msra.mxu0 0.0
    %1405 = vmatprep.subr.mxu0 0.0
    %1406 = vmatpush1.msra.mxu0 0.0
    %1407 = vmatprep.subr.mxu0 0.0
    %1408 = vmatpush1.msra.mxu0 0.0
    %1409 = vmatprep.mubr.f32.mxu0 %v1343
    %1410 = vmatmul.mubr.f32.gmra.mrb[0].mxu0 %v586
    %v1411 = vpop.f32.mrb[0].mxu0
    %v1412 = vadd.f32 0.0, %v1411
    %v1413 = vpop.f32.mrb[0].mxu0
    %v1414 = vadd.f32 0.0, %v1413
    %1415 = vdwg.mxu0
    %v1417 = vsel %vm1341, %v363, 0
    %1419 = vmatprep.subr.mxu0 %v1261
    %1420 = vmatpush1.msra.mxu0 %v1260
    %1421 = vmatprep.subr.mxu0 %v1263
    %1422 = vmatpush1.msra.mxu0 %v1262
    %1423 = vmatprep.subr.mxu0 %v1265
    %1424 = vmatpush1.msra.mxu0 %v1264
    %1425 = vmatprep.subr.mxu0 %v1267
    %1426 = vmatpush1.msra.mxu0 %v1266
    %1427 = vmatprep.subr.mxu0 %v1269
    %1428 = vmatpush1.msra.mxu0 %v1268
    %1429 = vmatprep.subr.mxu0 %v1271
    %1430 = vmatpush1.msra.mxu0 %v1270
    %1431 = vmatprep.subr.mxu0 %v1273
    %1432 = vmatpush1.msra.mxu0 %v1272
    %1433 = vmatprep.subr.mxu0 %v1275
    %1434 = vmatpush1.msra.mxu0 %v1274
    %1435 = vmatprep.subr.mxu0 %v1277
    %1436 = vmatpush1.msra.mxu0 %v1276
    %1437 = vmatprep.subr.mxu0 %v1279
    %1438 = vmatpush1.msra.mxu0 %v1278
    %1439 = vmatprep.subr.mxu0 %v1281
    %1440 = vmatpush1.msra.mxu0 %v1280
    %1441 = vmatprep.subr.mxu0 %v1283
    %1442 = vmatpush1.msra.mxu0 %v1282
    %1443 = vmatprep.subr.mxu0 %v1285
    %1444 = vmatpush1.msra.mxu0 %v1284
    %1445 = vmatprep.subr.mxu0 %v1287
    %1446 = vmatpush1.msra.mxu0 %v1286
    %1447 = vmatprep.subr.mxu0 %v1289
    %1448 = vmatpush1.msra.mxu0 %v1288
    %1449 = vmatprep.subr.mxu0 %v1291
    %1450 = vmatpush1.msra.mxu0 %v1290
    %1451 = vmatprep.subr.mxu0 %v1293
    %1452 = vmatpush1.msra.mxu0 %v1292
    %1453 = vmatprep.subr.mxu0 %v1295
    %1454 = vmatpush1.msra.mxu0 %v1294
    %1455 = vmatprep.subr.mxu0 %v1297
    %1456 = vmatpush1.msra.mxu0 %v1296
    %1457 = vmatprep.subr.mxu0 %v1299
    %1458 = vmatpush1.msra.mxu0 %v1298
    %1459 = vmatprep.subr.mxu0 0.0
    %1460 = vmatpush1.msra.mxu0 0.0
    %1461 = vmatprep.subr.mxu0 0.0
    %1462 = vmatpush1.msra.mxu0 0.0
    %1463 = vmatprep.subr.mxu0 0.0
    %1464 = vmatpush1.msra.mxu0 0.0
    %1465 = vmatprep.subr.mxu0 0.0
    %1466 = vmatpush1.msra.mxu0 0.0
    %1467 = vmatprep.subr.mxu0 0.0
    %1468 = vmatpush1.msra.mxu0 0.0
    %1469 = vmatprep.subr.mxu0 0.0
    %1470 = vmatpush1.msra.mxu0 0.0
    %1471 = vmatprep.subr.mxu0 0.0
    %1472 = vmatpush1.msra.mxu0 0.0
    %1473 = vmatprep.subr.mxu0 0.0
    %1474 = vmatpush1.msra.mxu0 0.0
    %1475 = vmatprep.subr.mxu0 0.0
    %1476 = vmatpush1.msra.mxu0 0.0
    %1477 = vmatprep.subr.mxu0 0.0
    %1478 = vmatpush1.msra.mxu0 0.0
    %1479 = vmatprep.subr.mxu0 0.0
    %1480 = vmatpush1.msra.mxu0 0.0
    %1481 = vmatprep.subr.mxu0 0.0
    %1482 = vmatpush1.msra.mxu0 0.0
    %1483 = vmatprep.mubr.f32.mxu0 %v1417
    %1484 = vmatmul.mubr.f32.gmra.mrb[0].mxu0 %v362
    %v1485 = vpop.f32.mrb[0].mxu0
    %v1486 = vadd.f32 %v1412, %v1485
    %v1487 = vpop.f32.mrb[0].mxu0
    %v1488 = vadd.f32 %v1414, %v1487
    %1489 = vdwg.mxu0
    %s1490 = scalar_lea.vmem [#allocation2], 640
    %v1491 = vld [vmem:[%s1490] sm:$0xff]
    %v1492 = vld [vmem:[%s1490 + $0x8] sm:$0xff]
    %v1493 = vld [vmem:[%s1490 + $0x10] sm:$0xff]
    %v1494 = vld [vmem:[%s1490 + $0x18] sm:$0xff]
    %v1495 = vld [vmem:[%s1490 + $0x20] sm:$0xff]
    %v1496 = vld [vmem:[%s1490 + $0x28] sm:$0xff]
    %v1497 = vld [vmem:[%s1490 + $0x30] sm:$0xff]
    %v1498 = vld [vmem:[%s1490 + $0x38] sm:$0xff]
    %v1499 = vld [vmem:[%s1490 + $0x40] sm:$0xff]
    %v1500 = vld [vmem:[%s1490 + $0x48] sm:$0xff]
    %v1501 = vld [vmem:[%s1490 + $0x50] sm:$0xff]
    %v1502 = vld [vmem:[%s1490 + $0x58] sm:$0xff]
    %v1503 = vld [vmem:[%s1490 + $0x60] sm:$0xff]
    %v1504 = vld [vmem:[%s1490 + $0x68] sm:$0xff]
    %v1505 = vld [vmem:[%s1490 + $0x70] sm:$0xff]
    %v1506 = vld [vmem:[%s1490 + $0x78] sm:$0xff]
    %v1507 = vld [vmem:[%s1490 + $0x80] sm:$0xff]
    %v1508 = vld [vmem:[%s1490 + $0x88] sm:$0xff]
    %v1509 = vld [vmem:[%s1490 + $0x90] sm:$0xff]
    %v1510 = vld [vmem:[%s1490 + $0x98] sm:$0xff]
    %v1511 = vld [vmem:[%s1490 + $0xa0] sm:$0xff]
    %v1512 = vld [vmem:[%s1490 + $0xa8] sm:$0xff]
    %v1513 = vld [vmem:[%s1490 + $0xb0] sm:$0xff]
    %v1514 = vld [vmem:[%s1490 + $0xb8] sm:$0xff]
    %v1515 = vld [vmem:[%s1490 + $0xc0] sm:$0xff]
    %v1516 = vld [vmem:[%s1490 + $0xc8] sm:$0xff]
    %v1517 = vld [vmem:[%s1490 + $0xd0] sm:$0xff]
    %v1518 = vld [vmem:[%s1490 + $0xd8] sm:$0xff]
    %v1519 = vld [vmem:[%s1490 + $0xe0] sm:$0xff]
    %v1520 = vld [vmem:[%s1490 + $0xe8] sm:$0xff]
    %v1521 = vld [vmem:[%s1490 + $0xf0] sm:$0xff]
    %v1522 = vld [vmem:[%s1490 + $0xf8] sm:$0xff]
    %v1523 = vld [vmem:[%s1490 + $0x100] sm:$0xff]
    %v1524 = vld [vmem:[%s1490 + $0x108] sm:$0xff]
    %v1525 = vld [vmem:[%s1490 + $0x110] sm:$0xff]
    %v1526 = vld [vmem:[%s1490 + $0x118] sm:$0xff]
    %v1527 = vld [vmem:[%s1490 + $0x120] sm:$0xff]
    %v1528 = vld [vmem:[%s1490 + $0x128] sm:$0xff]
    %v1529 = vld [vmem:[%s1490 + $0x130] sm:$0xff]
    %v1530 = vld [vmem:[%s1490 + $0x138] sm:$0xff]
    %v1532 = vsel %vm1341, %v811, 0
    %1534 = vmatprep.subr.mxu0 %v1492
    %1535 = vmatpush1.msra.mxu0 %v1491
    %1536 = vmatprep.subr.mxu0 %v1494
    %1537 = vmatpush1.msra.mxu0 %v1493
    %1538 = vmatprep.subr.mxu0 %v1496
    %1539 = vmatpush1.msra.mxu0 %v1495
    %1540 = vmatprep.subr.mxu0 %v1498
    %1541 = vmatpush1.msra.mxu0 %v1497
    %1542 = vmatprep.subr.mxu0 %v1500
    %1543 = vmatpush1.msra.mxu0 %v1499
    %1544 = vmatprep.subr.mxu0 %v1502
    %1545 = vmatpush1.msra.mxu0 %v1501
    %1546 = vmatprep.subr.mxu0 %v1504
    %1547 = vmatpush1.msra.mxu0 %v1503
    %1548 = vmatprep.subr.mxu0 %v1506
    %1549 = vmatpush1.msra.mxu0 %v1505
    %1550 = vmatprep.subr.mxu0 %v1508
    %1551 = vmatpush1.msra.mxu0 %v1507
    %1552 = vmatprep.subr.mxu0 %v1510
    %1553 = vmatpush1.msra.mxu0 %v1509
    %1554 = vmatprep.subr.mxu0 %v1512
    %1555 = vmatpush1.msra.mxu0 %v1511
    %1556 = vmatprep.subr.mxu0 %v1514
    %1557 = vmatpush1.msra.mxu0 %v1513
    %1558 = vmatprep.subr.mxu0 %v1516
    %1559 = vmatpush1.msra.mxu0 %v1515
    %1560 = vmatprep.subr.mxu0 %v1518
    %1561 = vmatpush1.msra.mxu0 %v1517
    %1562 = vmatprep.subr.mxu0 %v1520
    %1563 = vmatpush1.msra.mxu0 %v1519
    %1564 = vmatprep.subr.mxu0 %v1522
    %1565 = vmatpush1.msra.mxu0 %v1521
    %1566 = vmatprep.subr.mxu0 %v1524
    %1567 = vmatpush1.msra.mxu0 %v1523
    %1568 = vmatprep.subr.mxu0 %v1526
    %1569 = vmatpush1.msra.mxu0 %v1525
    %1570 = vmatprep.subr.mxu0 %v1528
    %1571 = vmatpush1.msra.mxu0 %v1527
    %1572 = vmatprep.subr.mxu0 %v1530
    %1573 = vmatpush1.msra.mxu0 %v1529
    %1574 = vmatprep.subr.mxu0 0.0
    %1575 = vmatpush1.msra.mxu0 0.0
    %1576 = vmatprep.subr.mxu0 0.0
    %1577 = vmatpush1.msra.mxu0 0.0
    %1578 = vmatprep.subr.mxu0 0.0
    %1579 = vmatpush1.msra.mxu0 0.0
    %1580 = vmatprep.subr.mxu0 0.0
    %1581 = vmatpush1.msra.mxu0 0.0
    %1582 = vmatprep.subr.mxu0 0.0
    %1583 = vmatpush1.msra.mxu0 0.0
    %1584 = vmatprep.subr.mxu0 0.0
    %1585 = vmatpush1.msra.mxu0 0.0
    %1586 = vmatprep.subr.mxu0 0.0
    %1587 = vmatpush1.msra.mxu0 0.0
    %1588 = vmatprep.subr.mxu0 0.0
    %1589 = vmatpush1.msra.mxu0 0.0
    %1590 = vmatprep.subr.mxu0 0.0
    %1591 = vmatpush1.msra.mxu0 0.0
    %1592 = vmatprep.subr.mxu0 0.0
    %1593 = vmatpush1.msra.mxu0 0.0
    %1594 = vmatprep.subr.mxu0 0.0
    %1595 = vmatpush1.msra.mxu0 0.0
    %1596 = vmatprep.subr.mxu0 0.0
    %1597 = vmatpush1.msra.mxu0 0.0
    %1598 = vmatprep.mubr.f32.mxu0 %v1532
    %1599 = vmatmul.mubr.f32.gmra.mrb[0].mxu0 %v810
    %v1600 = vpop.f32.mrb[0].mxu0
    %v1601 = vadd.f32 0.0, %v1600
    %v1602 = vpop.f32.mrb[0].mxu0
    %v1603 = vadd.f32 0.0, %v1602
    %1604 = vdwg.mxu0
    %v1605 = vadd.f32 %v1486, %v1601
    %v1606 = vadd.f32 %v1488, %v1603
    %v1607 = vld [vmem:[%s4] sm:$0x3]
    %v1609 = vlaneseq
    %v1610 = vshrl.u32 %v1609, 7
    %v1611 = vsub.s32 0, %v1610
    %v1612 = vrot.slane %v1607, %v1611
    %v1613 = vlaneseq
    %v1614 = vshrl.u32 %v1613, 7
    %v1615 = vsub.s32 1, %v1614
    %v1616 = vrot.slane %v1607, %v1615
    %v1619 = vadd.f32 %v1605, %v1612
    %v1620 = vadd.f32 %v1606, %v1616
    %v1621 = vmax.f32 %v1619, 0.0
    %v1622 = vmax.f32 %v1620, 0.0
    %1623 = vmatprep.subr.mxu0 %v1302
    %1624 = vmatpush1.msra.mxu0 %v1301
    %1625 = vmatprep.subr.mxu0 %v1304
    %1626 = vmatpush1.msra.mxu0 %v1303
    %1627 = vmatprep.subr.mxu0 %v1306
    %1628 = vmatpush1.msra.mxu0 %v1305
    %1629 = vmatprep.subr.mxu0 %v1308
    %1630 = vmatpush1.msra.mxu0 %v1307
    %1631 = vmatprep.subr.mxu0 %v1310
    %1632 = vmatpush1.msra.mxu0 %v1309
    %1633 = vmatprep.subr.mxu0 %v1312
    %1634 = vmatpush1.msra.mxu0 %v1311
    %1635 = vmatprep.subr.mxu0 %v1314
    %1636 = vmatpush1.msra.mxu0 %v1313
    %1637 = vmatprep.subr.mxu0 %v1316
    %1638 = vmatpush1.msra.mxu0 %v1315
    %1639 = vmatprep.subr.mxu0 %v1318
    %1640 = vmatpush1.msra.mxu0 %v1317
    %1641 = vmatprep.subr.mxu0 %v1320
    %1642 = vmatpush1.msra.mxu0 %v1319
    %1643 = vmatprep.subr.mxu0 %v1322
    %1644 = vmatpush1.msra.mxu0 %v1321
    %1645 = vmatprep.subr.mxu0 %v1324
    %1646 = vmatpush1.msra.mxu0 %v1323
    %1647 = vmatprep.subr.mxu0 %v1326
    %1648 = vmatpush1.msra.mxu0 %v1325
    %1649 = vmatprep.subr.mxu0 %v1328
    %1650 = vmatpush1.msra.mxu0 %v1327
    %1651 = vmatprep.subr.mxu0 %v1330
    %1652 = vmatpush1.msra.mxu0 %v1329
    %1653 = vmatprep.subr.mxu0 %v1332
    %1654 = vmatpush1.msra.mxu0 %v1331
    %1655 = vmatprep.subr.mxu0 %v1334
    %1656 = vmatpush1.msra.mxu0 %v1333
    %1657 = vmatprep.subr.mxu0 %v1336
    %1658 = vmatpush1.msra.mxu0 %v1335
    %1659 = vmatprep.subr.mxu0 %v1338
    %1660 = vmatpush1.msra.mxu0 %v1337
    %1661 = vmatprep.subr.mxu0 %v1340
    %1662 = vmatpush1.msra.mxu0 %v1339
    %1663 = vmatprep.subr.mxu0 0.0
    %1664 = vmatpush1.msra.mxu0 0.0
    %1665 = vmatprep.subr.mxu0 0.0
    %1666 = vmatpush1.msra.mxu0 0.0
    %1667 = vmatprep.subr.mxu0 0.0
    %1668 = vmatpush1.msra.mxu0 0.0
    %1669 = vmatprep.subr.mxu0 0.0
    %1670 = vmatpush1.msra.mxu0 0.0
    %1671 = vmatprep.subr.mxu0 0.0
    %1672 = vmatpush1.msra.mxu0 0.0
    %1673 = vmatprep.subr.mxu0 0.0
    %1674 = vmatpush1.msra.mxu0 0.0
    %1675 = vmatprep.subr.mxu0 0.0
    %1676 = vmatpush1.msra.mxu0 0.0
    %1677 = vmatprep.subr.mxu0 0.0
    %1678 = vmatpush1.msra.mxu0 0.0
    %1679 = vmatprep.subr.mxu0 0.0
    %1680 = vmatpush1.msra.mxu0 0.0
    %1681 = vmatprep.subr.mxu0 0.0
    %1682 = vmatpush1.msra.mxu0 0.0
    %1683 = vmatprep.subr.mxu0 0.0
    %1684 = vmatpush1.msra.mxu0 0.0
    %1685 = vmatprep.subr.mxu0 0.0
    %1686 = vmatpush1.msra.mxu0 0.0
    %1687 = vmatprep.mubr.f32.mxu0 %v1532
    %1688 = vmatmul.mubr.f32.gmra.mrb[0].mxu0 %v810
    %v1689 = vpop.f32.mrb[0].mxu0
    %v1690 = vadd.f32 0.0, %v1689
    %v1691 = vpop.f32.mrb[0].mxu0
    %v1692 = vadd.f32 0.0, %v1691
    %1693 = vdwg.mxu0
    %1694 = vmatprep.subr.mxu0 %v1261
    %1695 = vmatpush1.msra.mxu0 %v1260
    %1696 = vmatprep.subr.mxu0 %v1263
    %1697 = vmatpush1.msra.mxu0 %v1262
    %1698 = vmatprep.subr.mxu0 %v1265
    %1699 = vmatpush1.msra.mxu0 %v1264
    %1700 = vmatprep.subr.mxu0 %v1267
    %1701 = vmatpush1.msra.mxu0 %v1266
    %1702 = vmatprep.subr.mxu0 %v1269
    %1703 = vmatpush1.msra.mxu0 %v1268
    %1704 = vmatprep.subr.mxu0 %v1271
    %1705 = vmatpush1.msra.mxu0 %v1270
    %1706 = vmatprep.subr.mxu0 %v1273
    %1707 = vmatpush1.msra.mxu0 %v1272
    %1708 = vmatprep.subr.mxu0 %v1275
    %1709 = vmatpush1.msra.mxu0 %v1274
    %1710 = vmatprep.subr.mxu0 %v1277
    %1711 = vmatpush1.msra.mxu0 %v1276
    %1712 = vmatprep.subr.mxu0 %v1279
    %1713 = vmatpush1.msra.mxu0 %v1278
    %1714 = vmatprep.subr.mxu0 %v1281
    %1715 = vmatpush1.msra.mxu0 %v1280
    %1716 = vmatprep.subr.mxu0 %v1283
    %1717 = vmatpush1.msra.mxu0 %v1282
    %1718 = vmatprep.subr.mxu0 %v1285
    %1719 = vmatpush1.msra.mxu0 %v1284
    %1720 = vmatprep.subr.mxu0 %v1287
    %1721 = vmatpush1.msra.mxu0 %v1286
    %1722 = vmatprep.subr.mxu0 %v1289
    %1723 = vmatpush1.msra.mxu0 %v1288
    %1724 = vmatprep.subr.mxu0 %v1291
    %1725 = vmatpush1.msra.mxu0 %v1290
    %1726 = vmatprep.subr.mxu0 %v1293
    %1727 = vmatpush1.msra.mxu0 %v1292
    %1728 = vmatprep.subr.mxu0 %v1295
    %1729 = vmatpush1.msra.mxu0 %v1294
    %1730 = vmatprep.subr.mxu0 %v1297
    %1731 = vmatpush1.msra.mxu0 %v1296
    %1732 = vmatprep.subr.mxu0 %v1299
    %1733 = vmatpush1.msra.mxu0 %v1298
    %1734 = vmatprep.subr.mxu0 0.0
    %1735 = vmatpush1.msra.mxu0 0.0
    %1736 = vmatprep.subr.mxu0 0.0
    %1737 = vmatpush1.msra.mxu0 0.0
    %1738 = vmatprep.subr.mxu0 0.0
    %1739 = vmatpush1.msra.mxu0 0.0
    %1740 = vmatprep.subr.mxu0 0.0
    %1741 = vmatpush1.msra.mxu0 0.0
    %1742 = vmatprep.subr.mxu0 0.0
    %1743 = vmatpush1.msra.mxu0 0.0
    %1744 = vmatprep.subr.mxu0 0.0
    %1745 = vmatpush1.msra.mxu0 0.0
    %1746 = vmatprep.subr.mxu0 0.0
    %1747 = vmatpush1.msra.mxu0 0.0
    %1748 = vmatprep.subr.mxu0 0.0
    %1749 = vmatpush1.msra.mxu0 0.0
    %1750 = vmatprep.subr.mxu0 0.0
    %1751 = vmatpush1.msra.mxu0 0.0
    %1752 = vmatprep.subr.mxu0 0.0
    %1753 = vmatpush1.msra.mxu0 0.0
    %1754 = vmatprep.subr.mxu0 0.0
    %1755 = vmatpush1.msra.mxu0 0.0
    %1756 = vmatprep.subr.mxu0 0.0
    %1757 = vmatpush1.msra.mxu0 0.0
    %1758 = vmatprep.mubr.f32.mxu0 %v1343
    %1759 = vmatmul.mubr.f32.gmra.mrb[0].mxu0 %v586
    %v1760 = vpop.f32.mrb[0].mxu0
    %v1761 = vadd.f32 %v1690, %v1760
    %v1762 = vpop.f32.mrb[0].mxu0
    %v1763 = vadd.f32 %v1692, %v1762
    %1764 = vdwg.mxu0
    %v1766 = vsel %vm1341, %v1035, 0
    %1768 = vmatprep.subr.mxu0 %v1492
    %1769 = vmatpush1.msra.mxu0 %v1491
    %1770 = vmatprep.subr.mxu0 %v1494
    %1771 = vmatpush1.msra.mxu0 %v1493
    %1772 = vmatprep.subr.mxu0 %v1496
    %1773 = vmatpush1.msra.mxu0 %v1495
    %1774 = vmatprep.subr.mxu0 %v1498
    %1775 = vmatpush1.msra.mxu0 %v1497
    %1776 = vmatprep.subr.mxu0 %v1500
    %1777 = vmatpush1.msra.mxu0 %v1499
    %1778 = vmatprep.subr.mxu0 %v1502
    %1779 = vmatpush1.msra.mxu0 %v1501
    %1780 = vmatprep.subr.mxu0 %v1504
    %1781 = vmatpush1.msra.mxu0 %v1503
    %1782 = vmatprep.subr.mxu0 %v1506
    %1783 = vmatpush1.msra.mxu0 %v1505
    %1784 = vmatprep.subr.mxu0 %v1508
    %1785 = vmatpush1.msra.mxu0 %v1507
    %1786 = vmatprep.subr.mxu0 %v1510
    %1787 = vmatpush1.msra.mxu0 %v1509
    %1788 = vmatprep.subr.mxu0 %v1512
    %1789 = vmatpush1.msra.mxu0 %v1511
    %1790 = vmatprep.subr.mxu0 %v1514
    %1791 = vmatpush1.msra.mxu0 %v1513
    %1792 = vmatprep.subr.mxu0 %v1516
    %1793 = vmatpush1.msra.mxu0 %v1515
    %1794 = vmatprep.subr.mxu0 %v1518
    %1795 = vmatpush1.msra.mxu0 %v1517
    %1796 = vmatprep.subr.mxu0 %v1520
    %1797 = vmatpush1.msra.mxu0 %v1519
    %1798 = vmatprep.subr.mxu0 %v1522
    %1799 = vmatpush1.msra.mxu0 %v1521
    %1800 = vmatprep.subr.mxu0 %v1524
    %1801 = vmatpush1.msra.mxu0 %v1523
    %1802 = vmatprep.subr.mxu0 %v1526
    %1803 = vmatpush1.msra.mxu0 %v1525
    %1804 = vmatprep.subr.mxu0 %v1528
    %1805 = vmatpush1.msra.mxu0 %v1527
    %1806 = vmatprep.subr.mxu0 %v1530
    %1807 = vmatpush1.msra.mxu0 %v1529
    %1808 = vmatprep.subr.mxu0 0.0
    %1809 = vmatpush1.msra.mxu0 0.0
    %1810 = vmatprep.subr.mxu0 0.0
    %1811 = vmatpush1.msra.mxu0 0.0
    %1812 = vmatprep.subr.mxu0 0.0
    %1813 = vmatpush1.msra.mxu0 0.0
    %1814 = vmatprep.subr.mxu0 0.0
    %1815 = vmatpush1.msra.mxu0 0.0
    %1816 = vmatprep.subr.mxu0 0.0
    %1817 = vmatpush1.msra.mxu0 0.0
    %1818 = vmatprep.subr.mxu0 0.0
    %1819 = vmatpush1.msra.mxu0 0.0
    %1820 = vmatprep.subr.mxu0 0.0
    %1821 = vmatpush1.msra.mxu0 0.0
    %1822 = vmatprep.subr.mxu0 0.0
    %1823 = vmatpush1.msra.mxu0 0.0
    %1824 = vmatprep.subr.mxu0 0.0
    %1825 = vmatpush1.msra.mxu0 0.0
    %1826 = vmatprep.subr.mxu0 0.0
    %1827 = vmatpush1.msra.mxu0 0.0
    %1828 = vmatprep.subr.mxu0 0.0
    %1829 = vmatpush1.msra.mxu0 0.0
    %1830 = vmatprep.subr.mxu0 0.0
    %1831 = vmatpush1.msra.mxu0 0.0
    %1832 = vmatprep.mubr.f32.mxu0 %v1766
    %1833 = vmatmul.mubr.f32.gmra.mrb[0].mxu0 %v1034
    %v1834 = vpop.f32.mrb[0].mxu0
    %v1835 = vadd.f32 0.0, %v1834
    %v1836 = vpop.f32.mrb[0].mxu0
    %v1837 = vadd.f32 0.0, %v1836
    %1838 = vdwg.mxu0
    %v1839 = vadd.f32 %v1761, %v1835
    %v1840 = vadd.f32 %v1763, %v1837
    %v1841 = vadd.f32 %v1839, %v1612
    %v1842 = vadd.f32 %v1840, %v1616
    %v1843 = vmax.f32 %v1841, 0.0
    %v1844 = vmax.f32 %v1842, 0.0
    %1845 = vmatprep.subr.mxu0 %v1302
    %1846 = vmatpush1.msra.mxu0 %v1301
    %1847 = vmatprep.subr.mxu0 %v1304
    %1848 = vmatpush1.msra.mxu0 %v1303
    %1849 = vmatprep.subr.mxu0 %v1306
    %1850 = vmatpush1.msra.mxu0 %v1305
    %1851 = vmatprep.subr.mxu0 %v1308
    %1852 = vmatpush1.msra.mxu0 %v1307
    %1853 = vmatprep.subr.mxu0 %v1310
    %1854 = vmatpush1.msra.mxu0 %v1309
    %1855 = vmatprep.subr.mxu0 %v1312
    %1856 = vmatpush1.msra.mxu0 %v1311
    %1857 = vmatprep.subr.mxu0 %v1314
    %1858 = vmatpush1.msra.mxu0 %v1313
    %1859 = vmatprep.subr.mxu0 %v1316
    %1860 = vmatpush1.msra.mxu0 %v1315
    %1861 = vmatprep.subr.mxu0 %v1318
    %1862 = vmatpush1.msra.mxu0 %v1317
    %1863 = vmatprep.subr.mxu0 %v1320
    %1864 = vmatpush1.msra.mxu0 %v1319
    %1865 = vmatprep.subr.mxu0 %v1322
    %1866 = vmatpush1.msra.mxu0 %v1321
    %1867 = vmatprep.subr.mxu0 %v1324
    %1868 = vmatpush1.msra.mxu0 %v1323
    %1869 = vmatprep.subr.mxu0 %v1326
    %1870 = vmatpush1.msra.mxu0 %v1325
    %1871 = vmatprep.subr.mxu0 %v1328
    %1872 = vmatpush1.msra.mxu0 %v1327
    %1873 = vmatprep.subr.mxu0 %v1330
    %1874 = vmatpush1.msra.mxu0 %v1329
    %1875 = vmatprep.subr.mxu0 %v1332
    %1876 = vmatpush1.msra.mxu0 %v1331
    %1877 = vmatprep.subr.mxu0 %v1334
    %1878 = vmatpush1.msra.mxu0 %v1333
    %1879 = vmatprep.subr.mxu0 %v1336
    %1880 = vmatpush1.msra.mxu0 %v1335
    %1881 = vmatprep.subr.mxu0 %v1338
    %1882 = vmatpush1.msra.mxu0 %v1337
    %1883 = vmatprep.subr.mxu0 %v1340
    %1884 = vmatpush1.msra.mxu0 %v1339
    %1885 = vmatprep.subr.mxu0 0.0
    %1886 = vmatpush1.msra.mxu0 0.0
    %1887 = vmatprep.subr.mxu0 0.0
    %1888 = vmatpush1.msra.mxu0 0.0
    %1889 = vmatprep.subr.mxu0 0.0
    %1890 = vmatpush1.msra.mxu0 0.0
    %1891 = vmatprep.subr.mxu0 0.0
    %1892 = vmatpush1.msra.mxu0 0.0
    %1893 = vmatprep.subr.mxu0 0.0
    %1894 = vmatpush1.msra.mxu0 0.0
    %1895 = vmatprep.subr.mxu0 0.0
    %1896 = vmatpush1.msra.mxu0 0.0
    %1897 = vmatprep.subr.mxu0 0.0
    %1898 = vmatpush1.msra.mxu0 0.0
    %1899 = vmatprep.subr.mxu0 0.0
    %1900 = vmatpush1.msra.mxu0 0.0
    %1901 = vmatprep.subr.mxu0 0.0
    %1902 = vmatpush1.msra.mxu0 0.0
    %1903 = vmatprep.subr.mxu0 0.0
    %1904 = vmatpush1.msra.mxu0 0.0
    %1905 = vmatprep.subr.mxu0 0.0
    %1906 = vmatpush1.msra.mxu0 0.0
    %1907 = vmatprep.subr.mxu0 0.0
    %1908 = vmatpush1.msra.mxu0 0.0
    %1909 = vmatprep.mubr.f32.mxu0 %v1766
    %1910 = vmatmul.mubr.f32.gmra.mrb[0].mxu0 %v1034
    %v1911 = vpop.f32.mrb[0].mxu0
    %v1912 = vadd.f32 0.0, %v1911
    %v1913 = vpop.f32.mrb[0].mxu0
    %v1914 = vadd.f32 0.0, %v1913
    %1915 = vdwg.mxu0
    %1916 = vmatprep.subr.mxu0 %v1261
    %1917 = vmatpush1.msra.mxu0 %v1260
    %1918 = vmatprep.subr.mxu0 %v1263
    %1919 = vmatpush1.msra.mxu0 %v1262
    %1920 = vmatprep.subr.mxu0 %v1265
    %1921 = vmatpush1.msra.mxu0 %v1264
    %1922 = vmatprep.subr.mxu0 %v1267
    %1923 = vmatpush1.msra.mxu0 %v1266
    %1924 = vmatprep.subr.mxu0 %v1269
    %1925 = vmatpush1.msra.mxu0 %v1268
    %1926 = vmatprep.subr.mxu0 %v1271
    %1927 = vmatpush1.msra.mxu0 %v1270
    %1928 = vmatprep.subr.mxu0 %v1273
    %1929 = vmatpush1.msra.mxu0 %v1272
    %1930 = vmatprep.subr.mxu0 %v1275
    %1931 = vmatpush1.msra.mxu0 %v1274
    %1932 = vmatprep.subr.mxu0 %v1277
    %1933 = vmatpush1.msra.mxu0 %v1276
    %1934 = vmatprep.subr.mxu0 %v1279
    %1935 = vmatpush1.msra.mxu0 %v1278
    %1936 = vmatprep.subr.mxu0 %v1281
    %1937 = vmatpush1.msra.mxu0 %v1280
    %1938 = vmatprep.subr.mxu0 %v1283
    %1939 = vmatpush1.msra.mxu0 %v1282
    %1940 = vmatprep.subr.mxu0 %v1285
    %1941 = vmatpush1.msra.mxu0 %v1284
    %1942 = vmatprep.subr.mxu0 %v1287
    %1943 = vmatpush1.msra.mxu0 %v1286
    %1944 = vmatprep.subr.mxu0 %v1289
    %1945 = vmatpush1.msra.mxu0 %v1288
    %1946 = vmatprep.subr.mxu0 %v1291
    %1947 = vmatpush1.msra.mxu0 %v1290
    %1948 = vmatprep.subr.mxu0 %v1293
    %1949 = vmatpush1.msra.mxu0 %v1292
    %1950 = vmatprep.subr.mxu0 %v1295
    %1951 = vmatpush1.msra.mxu0 %v1294
    %1952 = vmatprep.subr.mxu0 %v1297
    %1953 = vmatpush1.msra.mxu0 %v1296
    %1954 = vmatprep.subr.mxu0 %v1299
    %1955 = vmatpush1.msra.mxu0 %v1298
    %1956 = vmatprep.subr.mxu0 0.0
    %1957 = vmatpush1.msra.mxu0 0.0
    %1958 = vmatprep.subr.mxu0 0.0
    %1959 = vmatpush1.msra.mxu0 0.0
    %1960 = vmatprep.subr.mxu0 0.0
    %1961 = vmatpush1.msra.mxu0 0.0
    %1962 = vmatprep.subr.mxu0 0.0
    %1963 = vmatpush1.msra.mxu0 0.0
    %1964 = vmatprep.subr.mxu0 0.0
    %1965 = vmatpush1.msra.mxu0 0.0
    %1966 = vmatprep.subr.mxu0 0.0
    %1967 = vmatpush1.msra.mxu0 0.0
    %1968 = vmatprep.subr.mxu0 0.0
    %1969 = vmatpush1.msra.mxu0 0.0
    %1970 = vmatprep.subr.mxu0 0.0
    %1971 = vmatpush1.msra.mxu0 0.0
    %1972 = vmatprep.subr.mxu0 0.0
    %1973 = vmatpush1.msra.mxu0 0.0
    %1974 = vmatprep.subr.mxu0 0.0
    %1975 = vmatpush1.msra.mxu0 0.0
    %1976 = vmatprep.subr.mxu0 0.0
    %1977 = vmatpush1.msra.mxu0 0.0
    %1978 = vmatprep.subr.mxu0 0.0
    %1979 = vmatpush1.msra.mxu0 0.0
    %1980 = vmatprep.mubr.f32.mxu0 %v1532
    %1981 = vmatmul.mubr.f32.gmra.mrb[0].mxu0 %v810
    %v1982 = vpop.f32.mrb[0].mxu0
    %v1983 = vadd.f32 %v1912, %v1982
    %v1984 = vpop.f32.mrb[0].mxu0
    %v1985 = vadd.f32 %v1914, %v1984
    %1986 = vdwg.mxu0
    %v1988 = vsel %vm1341, %v1259, 0
    %1990 = vmatprep.subr.mxu0 %v1492
    %1991 = vmatpush1.msra.mxu0 %v1491
    %1992 = vmatprep.subr.mxu0 %v1494
    %1993 = vmatpush1.msra.mxu0 %v1493
    %1994 = vmatprep.subr.mxu0 %v1496
    %1995 = vmatpush1.msra.mxu0 %v1495
    %1996 = vmatprep.subr.mxu0 %v1498
    %1997 = vmatpush1.msra.mxu0 %v1497
    %1998 = vmatprep.subr.mxu0 %v1500
    %1999 = vmatpush1.msra.mxu0 %v1499
    %2000 = vmatprep.subr.mxu0 %v1502
    %2001 = vmatpush1.msra.mxu0 %v1501
    %2002 = vmatprep.subr.mxu0 %v1504
    %2003 = vmatpush1.msra.mxu0 %v1503
    %2004 = vmatprep.subr.mxu0 %v1506
    %2005 = vmatpush1.msra.mxu0 %v1505
    %2006 = vmatprep.subr.mxu0 %v1508
    %2007 = vmatpush1.msra.mxu0 %v1507
    %2008 = vmatprep.subr.mxu0 %v1510
    %2009 = vmatpush1.msra.mxu0 %v1509
    %2010 = vmatprep.subr.mxu0 %v1512
    %2011 = vmatpush1.msra.mxu0 %v1511
    %2012 = vmatprep.subr.mxu0 %v1514
    %2013 = vmatpush1.msra.mxu0 %v1513
    %2014 = vmatprep.subr.mxu0 %v1516
    %2015 = vmatpush1.msra.mxu0 %v1515
    %2016 = vmatprep.subr.mxu0 %v1518
    %2017 = vmatpush1.msra.mxu0 %v1517
    %2018 = vmatprep.subr.mxu0 %v1520
    %2019 = vmatpush1.msra.mxu0 %v1519
    %2020 = vmatprep.subr.mxu0 %v1522
    %2021 = vmatpush1.msra.mxu0 %v1521
    %2022 = vmatprep.subr.mxu0 %v1524
    %2023 = vmatpush1.msra.mxu0 %v1523
    %2024 = vmatprep.subr.mxu0 %v1526
    %2025 = vmatpush1.msra.mxu0 %v1525
    %2026 = vmatprep.subr.mxu0 %v1528
    %2027 = vmatpush1.msra.mxu0 %v1527
    %2028 = vmatprep.subr.mxu0 %v1530
    %2029 = vmatpush1.msra.mxu0 %v1529
    %2030 = vmatprep.subr.mxu0 0.0
    %2031 = vmatpush1.msra.mxu0 0.0
    %2032 = vmatprep.subr.mxu0 0.0
    %2033 = vmatpush1.msra.mxu0 0.0
    %2034 = vmatprep.subr.mxu0 0.0
    %2035 = vmatpush1.msra.mxu0 0.0
    %2036 = vmatprep.subr.mxu0 0.0
    %2037 = vmatpush1.msra.mxu0 0.0
    %2038 = vmatprep.subr.mxu0 0.0
    %2039 = vmatpush1.msra.mxu0 0.0
    %2040 = vmatprep.subr.mxu0 0.0
    %2041 = vmatpush1.msra.mxu0 0.0
    %2042 = vmatprep.subr.mxu0 0.0
    %2043 = vmatpush1.msra.mxu0 0.0
    %2044 = vmatprep.subr.mxu0 0.0
    %2045 = vmatpush1.msra.mxu0 0.0
    %2046 = vmatprep.subr.mxu0 0.0
    %2047 = vmatpush1.msra.mxu0 0.0
    %2048 = vmatprep.subr.mxu0 0.0
    %2049 = vmatpush1.msra.mxu0 0.0
    %2050 = vmatprep.subr.mxu0 0.0
    %2051 = vmatpush1.msra.mxu0 0.0
    %2052 = vmatprep.subr.mxu0 0.0
    %2053 = vmatpush1.msra.mxu0 0.0
    %2054 = vmatprep.mubr.f32.mxu0 %v1988
    %2055 = vmatmul.mubr.f32.gmra.mrb[0].mxu0 %v1258
    %v2056 = vpop.f32.mrb[0].mxu0
    %v2057 = vadd.f32 0.0, %v2056
    %v2058 = vpop.f32.mrb[0].mxu0
    %v2059 = vadd.f32 0.0, %v2058
    %2060 = vdwg.mxu0
    %v2061 = vadd.f32 %v1983, %v2057
    %v2062 = vadd.f32 %v1985, %v2059
    %v2063 = vadd.f32 %v2061, %v1612
    %v2064 = vadd.f32 %v2062, %v1616
    %v2065 = vmax.f32 %v2063, 0.0
    %v2066 = vmax.f32 %v2064, 0.0
    %v2067 = vld [vmem:[#allocation4] sm:$0xff]
    %v2068 = vld [vmem:[#allocation4 + $0x8] sm:$0xff]
    %v2069 = vld [vmem:[#allocation4 + $0x10] sm:$0xff]
    %v2070 = vld [vmem:[#allocation4 + $0x18] sm:$0xff]
    %v2071 = vld [vmem:[#allocation4 + $0x20] sm:$0xff]
    %v2072 = vld [vmem:[#allocation4 + $0x28] sm:$0xff]
    %v2073 = vld [vmem:[#allocation4 + $0x30] sm:$0xff]
    %v2074 = vld [vmem:[#allocation4 + $0x38] sm:$0xff]
    %v2075 = vld [vmem:[#allocation4 + $0x40] sm:$0xff]
    %v2076 = vld [vmem:[#allocation4 + $0x48] sm:$0xff]
    %v2077 = vld [vmem:[#allocation4 + $0x50] sm:$0xff]
    %v2078 = vld [vmem:[#allocation4 + $0x58] sm:$0xff]
    %v2079 = vld [vmem:[#allocation4 + $0x60] sm:$0xff]
    %v2080 = vld [vmem:[#allocation4 + $0x68] sm:$0xff]
    %v2081 = vld [vmem:[#allocation4 + $0x70] sm:$0xff]
    %v2082 = vld [vmem:[#allocation4 + $0x78] sm:$0xff]
    %v2083 = vld [vmem:[#allocation4 + $0x80] sm:$0xff]
    %v2084 = vld [vmem:[#allocation4 + $0x88] sm:$0xff]
    %v2085 = vld [vmem:[#allocation4 + $0x90] sm:$0xff]
    %v2086 = vld [vmem:[#allocation4 + $0x98] sm:$0xff]
    %v2087 = vld [vmem:[#allocation4 + $0xa0] sm:$0xff]
    %v2088 = vld [vmem:[#allocation4 + $0xa8] sm:$0xff]
    %v2089 = vld [vmem:[#allocation4 + $0xb0] sm:$0xff]
    %v2090 = vld [vmem:[#allocation4 + $0xb8] sm:$0xff]
    %s2091 = scalar_lea.vmem [#allocation4], 192
    %v2092 = vld [vmem:[%s2091] sm:$0xff]
    %v2093 = vld [vmem:[%s2091 + $0x8] sm:$0xff]
    %v2094 = vld [vmem:[%s2091 + $0x10] sm:$0xff]
    %v2095 = vld [vmem:[%s2091 + $0x18] sm:$0xff]
    %v2096 = vld [vmem:[%s2091 + $0x20] sm:$0xff]
    %v2097 = vld [vmem:[%s2091 + $0x28] sm:$0xff]
    %v2098 = vld [vmem:[%s2091 + $0x30] sm:$0xff]
    %v2099 = vld [vmem:[%s2091 + $0x38] sm:$0xff]
    %v2100 = vld [vmem:[%s2091 + $0x40] sm:$0xff]
    %v2101 = vld [vmem:[%s2091 + $0x48] sm:$0xff]
    %v2102 = vld [vmem:[%s2091 + $0x50] sm:$0xff]
    %v2103 = vld [vmem:[%s2091 + $0x58] sm:$0xff]
    %v2104 = vld [vmem:[%s2091 + $0x60] sm:$0xff]
    %v2105 = vld [vmem:[%s2091 + $0x68] sm:$0xff]
    %v2106 = vld [vmem:[%s2091 + $0x70] sm:$0xff]
    %v2107 = vld [vmem:[%s2091 + $0x78] sm:$0xff]
    %v2108 = vld [vmem:[%s2091 + $0x80] sm:$0xff]
    %v2109 = vld [vmem:[%s2091 + $0x88] sm:$0xff]
    %v2110 = vld [vmem:[%s2091 + $0x90] sm:$0xff]
    %v2111 = vld [vmem:[%s2091 + $0x98] sm:$0xff]
    %v2112 = vld [vmem:[%s2091 + $0xa0] sm:$0xff]
    %v2113 = vld [vmem:[%s2091 + $0xa8] sm:$0xff]
    %v2114 = vld [vmem:[%s2091 + $0xb0] sm:$0xff]
    %v2115 = vld [vmem:[%s2091 + $0xb8] sm:$0xff]
    %vm2116 = vcmask 523264
    %v2118 = vsel %vm2116, %v1844, 0
    %2120 = vmatprep.subr.mxu0 0.0
    %2121 = vmatpush1.msra.mxu0 %v2092
    %2122 = vmatprep.subr.mxu0 0.0
    %2123 = vmatpush1.msra.mxu0 %v2093
    %2124 = vmatprep.subr.mxu0 0.0
    %2125 = vmatpush1.msra.mxu0 %v2094
    %2126 = vmatprep.subr.mxu0 0.0
    %2127 = vmatpush1.msra.mxu0 %v2095
    %2128 = vmatprep.subr.mxu0 0.0
    %2129 = vmatpush1.msra.mxu0 %v2096
    %2130 = vmatprep.subr.mxu0 0.0
    %2131 = vmatpush1.msra.mxu0 %v2097
    %2132 = vmatprep.subr.mxu0 0.0
    %2133 = vmatpush1.msra.mxu0 %v2098
    %2134 = vmatprep.subr.mxu0 0.0
    %2135 = vmatpush1.msra.mxu0 %v2099
    %2136 = vmatprep.subr.mxu0 0.0
    %2137 = vmatpush1.msra.mxu0 %v2100
    %2138 = vmatprep.subr.mxu0 0.0
    %2139 = vmatpush1.msra.mxu0 %v2101
    %2140 = vmatprep.subr.mxu0 0.0
    %2141 = vmatpush1.msra.mxu0 %v2102
    %2142 = vmatprep.subr.mxu0 0.0
    %2143 = vmatpush1.msra.mxu0 %v2103
    %2144 = vmatprep.subr.mxu0 0.0
    %2145 = vmatpush1.msra.mxu0 %v2104
    %2146 = vmatprep.subr.mxu0 0.0
    %2147 = vmatpush1.msra.mxu0 %v2105
    %2148 = vmatprep.subr.mxu0 0.0
    %2149 = vmatpush1.msra.mxu0 %v2106
    %2150 = vmatprep.subr.mxu0 0.0
    %2151 = vmatpush1.msra.mxu0 %v2107
    %2152 = vmatprep.subr.mxu0 0.0
    %2153 = vmatpush1.msra.mxu0 %v2108
    %2154 = vmatprep.subr.mxu0 0.0
    %2155 = vmatpush1.msra.mxu0 %v2109
    %2156 = vmatprep.subr.mxu0 0.0
    %2157 = vmatpush1.msra.mxu0 %v2110
    %2158 = vmatprep.subr.mxu0 0.0
    %2159 = vmatpush1.msra.mxu0 %v2111
    %2160 = vmatprep.subr.mxu0 0.0
    %2161 = vmatpush1.msra.mxu0 %v2112
    %2162 = vmatprep.subr.mxu0 0.0
    %2163 = vmatpush1.msra.mxu0 %v2113
    %2164 = vmatprep.subr.mxu0 0.0
    %2165 = vmatpush1.msra.mxu0 %v2114
    %2166 = vmatprep.subr.mxu0 0.0
    %2167 = vmatpush1.msra.mxu0 %v2115
    %2168 = vmatprep.subr.mxu0 0.0
    %2169 = vmatpush1.msra.mxu0 0.0
    %2170 = vmatprep.subr.mxu0 0.0
    %2171 = vmatpush1.msra.mxu0 0.0
    %2172 = vmatprep.subr.mxu0 0.0
    %2173 = vmatpush1.msra.mxu0 0.0
    %2174 = vmatprep.subr.mxu0 0.0
    %2175 = vmatpush1.msra.mxu0 0.0
    %2176 = vmatprep.subr.mxu0 0.0
    %2177 = vmatpush1.msra.mxu0 0.0
    %2178 = vmatprep.subr.mxu0 0.0
    %2179 = vmatpush1.msra.mxu0 0.0
    %2180 = vmatprep.subr.mxu0 0.0
    %2181 = vmatpush1.msra.mxu0 0.0
    %2182 = vmatprep.subr.mxu0 0.0
    %2183 = vmatpush1.msra.mxu0 0.0
    %2184 = vmatprep.mubr.f32.mxu0 %v2118
    %2185 = vmatmul.mubr.f32.gmra.mrb[0].mxu0 %v1843
    %v2186 = vpop.f32.mrb[0].mxu0
    %v2187 = vadd.f32 0.0, %v2186
    %v2188 = vpop.f32.mrb[0].mxu0
    %2189 = vdwg.mxu0
    %v2191 = vsel %vm2116, %v1622, 0
    %2193 = vmatprep.subr.mxu0 0.0
    %2194 = vmatpush1.msra.mxu0 %v2067
    %2195 = vmatprep.subr.mxu0 0.0
    %2196 = vmatpush1.msra.mxu0 %v2068
    %2197 = vmatprep.subr.mxu0 0.0
    %2198 = vmatpush1.msra.mxu0 %v2069
    %2199 = vmatprep.subr.mxu0 0.0
    %2200 = vmatpush1.msra.mxu0 %v2070
    %2201 = vmatprep.subr.mxu0 0.0
    %2202 = vmatpush1.msra.mxu0 %v2071
    %2203 = vmatprep.subr.mxu0 0.0
    %2204 = vmatpush1.msra.mxu0 %v2072
    %2205 = vmatprep.subr.mxu0 0.0
    %2206 = vmatpush1.msra.mxu0 %v2073
    %2207 = vmatprep.subr.mxu0 0.0
    %2208 = vmatpush1.msra.mxu0 %v2074
    %2209 = vmatprep.subr.mxu0 0.0
    %2210 = vmatpush1.msra.mxu0 %v2075
    %2211 = vmatprep.subr.mxu0 0.0
    %2212 = vmatpush1.msra.mxu0 %v2076
    %2213 = vmatprep.subr.mxu0 0.0
    %2214 = vmatpush1.msra.mxu0 %v2077
    %2215 = vmatprep.subr.mxu0 0.0
    %2216 = vmatpush1.msra.mxu0 %v2078
    %2217 = vmatprep.subr.mxu0 0.0
    %2218 = vmatpush1.msra.mxu0 %v2079
    %2219 = vmatprep.subr.mxu0 0.0
    %2220 = vmatpush1.msra.mxu0 %v2080
    %2221 = vmatprep.subr.mxu0 0.0
    %2222 = vmatpush1.msra.mxu0 %v2081
    %2223 = vmatprep.subr.mxu0 0.0
    %2224 = vmatpush1.msra.mxu0 %v2082
    %2225 = vmatprep.subr.mxu0 0.0
    %2226 = vmatpush1.msra.mxu0 %v2083
    %2227 = vmatprep.subr.mxu0 0.0
    %2228 = vmatpush1.msra.mxu0 %v2084
    %2229 = vmatprep.subr.mxu0 0.0
    %2230 = vmatpush1.msra.mxu0 %v2085
    %2231 = vmatprep.subr.mxu0 0.0
    %2232 = vmatpush1.msra.mxu0 %v2086
    %2233 = vmatprep.subr.mxu0 0.0
    %2234 = vmatpush1.msra.mxu0 %v2087
    %2235 = vmatprep.subr.mxu0 0.0
    %2236 = vmatpush1.msra.mxu0 %v2088
    %2237 = vmatprep.subr.mxu0 0.0
    %2238 = vmatpush1.msra.mxu0 %v2089
    %2239 = vmatprep.subr.mxu0 0.0
    %2240 = vmatpush1.msra.mxu0 %v2090
    %2241 = vmatprep.subr.mxu0 0.0
    %2242 = vmatpush1.msra.mxu0 0.0
    %2243 = vmatprep.subr.mxu0 0.0
    %2244 = vmatpush1.msra.mxu0 0.0
    %2245 = vmatprep.subr.mxu0 0.0
    %2246 = vmatpush1.msra.mxu0 0.0
    %2247 = vmatprep.subr.mxu0 0.0
    %2248 = vmatpush1.msra.mxu0 0.0
    %2249 = vmatprep.subr.mxu0 0.0
    %2250 = vmatpush1.msra.mxu0 0.0
    %2251 = vmatprep.subr.mxu0 0.0
    %2252 = vmatpush1.msra.mxu0 0.0
    %2253 = vmatprep.subr.mxu0 0.0
    %2254 = vmatpush1.msra.mxu0 0.0
    %2255 = vmatprep.subr.mxu0 0.0
    %2256 = vmatpush1.msra.mxu0 0.0
    %2257 = vmatprep.mubr.f32.mxu0 %v2191
    %2258 = vmatmul.mubr.f32.gmra.mrb[0].mxu0 %v1621
    %v2259 = vpop.f32.mrb[0].mxu0
    %v2260 = vadd.f32 %v2187, %v2259
    %v2261 = vpop.f32.mrb[0].mxu0
    %2262 = vdwg.mxu0
    %s2263 = scalar_lea.vmem [#allocation4], 384
    %v2264 = vld [vmem:[%s2263] sm:$0xff]
    %v2265 = vld [vmem:[%s2263 + $0x8] sm:$0xff]
    %v2266 = vld [vmem:[%s2263 + $0x10] sm:$0xff]
    %v2267 = vld [vmem:[%s2263 + $0x18] sm:$0xff]
    %v2268 = vld [vmem:[%s2263 + $0x20] sm:$0xff]
    %v2269 = vld [vmem:[%s2263 + $0x28] sm:$0xff]
    %v2270 = vld [vmem:[%s2263 + $0x30] sm:$0xff]
    %v2271 = vld [vmem:[%s2263 + $0x38] sm:$0xff]
    %v2272 = vld [vmem:[%s2263 + $0x40] sm:$0xff]
    %v2273 = vld [vmem:[%s2263 + $0x48] sm:$0xff]
    %v2274 = vld [vmem:[%s2263 + $0x50] sm:$0xff]
    %v2275 = vld [vmem:[%s2263 + $0x58] sm:$0xff]
    %v2276 = vld [vmem:[%s2263 + $0x60] sm:$0xff]
    %v2277 = vld [vmem:[%s2263 + $0x68] sm:$0xff]
    %v2278 = vld [vmem:[%s2263 + $0x70] sm:$0xff]
    %v2279 = vld [vmem:[%s2263 + $0x78] sm:$0xff]
    %v2280 = vld [vmem:[%s2263 + $0x80] sm:$0xff]
    %v2281 = vld [vmem:[%s2263 + $0x88] sm:$0xff]
    %v2282 = vld [vmem:[%s2263 + $0x90] sm:$0xff]
    %v2283 = vld [vmem:[%s2263 + $0x98] sm:$0xff]
    %v2284 = vld [vmem:[%s2263 + $0xa0] sm:$0xff]
    %v2285 = vld [vmem:[%s2263 + $0xa8] sm:$0xff]
    %v2286 = vld [vmem:[%s2263 + $0xb0] sm:$0xff]
    %v2287 = vld [vmem:[%s2263 + $0xb8] sm:$0xff]
    %v2289 = vsel %vm2116, %v2066, 0
    %2291 = vmatprep.subr.mxu0 0.0
    %2292 = vmatpush1.msra.mxu0 %v2264
    %2293 = vmatprep.subr.mxu0 0.0
    %2294 = vmatpush1.msra.mxu0 %v2265
    %2295 = vmatprep.subr.mxu0 0.0
    %2296 = vmatpush1.msra.mxu0 %v2266
    %2297 = vmatprep.subr.mxu0 0.0
    %2298 = vmatpush1.msra.mxu0 %v2267
    %2299 = vmatprep.subr.mxu0 0.0
    %2300 = vmatpush1.msra.mxu0 %v2268
    %2301 = vmatprep.subr.mxu0 0.0
    %2302 = vmatpush1.msra.mxu0 %v2269
    %2303 = vmatprep.subr.mxu0 0.0
    %2304 = vmatpush1.msra.mxu0 %v2270
    %2305 = vmatprep.subr.mxu0 0.0
    %2306 = vmatpush1.msra.mxu0 %v2271
    %2307 = vmatprep.subr.mxu0 0.0
    %2308 = vmatpush1.msra.mxu0 %v2272
    %2309 = vmatprep.subr.mxu0 0.0
    %2310 = vmatpush1.msra.mxu0 %v2273
    %2311 = vmatprep.subr.mxu0 0.0
    %2312 = vmatpush1.msra.mxu0 %v2274
    %2313 = vmatprep.subr.mxu0 0.0
    %2314 = vmatpush1.msra.mxu0 %v2275
    %2315 = vmatprep.subr.mxu0 0.0
    %2316 = vmatpush1.msra.mxu0 %v2276
    %2317 = vmatprep.subr.mxu0 0.0
    %2318 = vmatpush1.msra.mxu0 %v2277
    %2319 = vmatprep.subr.mxu0 0.0
    %2320 = vmatpush1.msra.mxu0 %v2278
    %2321 = vmatprep.subr.mxu0 0.0
    %2322 = vmatpush1.msra.mxu0 %v2279
    %2323 = vmatprep.subr.mxu0 0.0
    %2324 = vmatpush1.msra.mxu0 %v2280
    %2325 = vmatprep.subr.mxu0 0.0
    %2326 = vmatpush1.msra.mxu0 %v2281
    %2327 = vmatprep.subr.mxu0 0.0
    %2328 = vmatpush1.msra.mxu0 %v2282
    %2329 = vmatprep.subr.mxu0 0.0
    %2330 = vmatpush1.msra.mxu0 %v2283
    %2331 = vmatprep.subr.mxu0 0.0
    %2332 = vmatpush1.msra.mxu0 %v2284
    %2333 = vmatprep.subr.mxu0 0.0
    %2334 = vmatpush1.msra.mxu0 %v2285
    %2335 = vmatprep.subr.mxu0 0.0
    %2336 = vmatpush1.msra.mxu0 %v2286
    %2337 = vmatprep.subr.mxu0 0.0
    %2338 = vmatpush1.msra.mxu0 %v2287
    %2339 = vmatprep.subr.mxu0 0.0
    %2340 = vmatpush1.msra.mxu0 0.0
    %2341 = vmatprep.subr.mxu0 0.0
    %2342 = vmatpush1.msra.mxu0 0.0
    %2343 = vmatprep.subr.mxu0 0.0
    %2344 = vmatpush1.msra.mxu0 0.0
    %2345 = vmatprep.subr.mxu0 0.0
    %2346 = vmatpush1.msra.mxu0 0.0
    %2347 = vmatprep.subr.mxu0 0.0
    %2348 = vmatpush1.msra.mxu0 0.0
    %2349 = vmatprep.subr.mxu0 0.0
    %2350 = vmatpush1.msra.mxu0 0.0
    %2351 = vmatprep.subr.mxu0 0.0
    %2352 = vmatpush1.msra.mxu0 0.0
    %2353 = vmatprep.subr.mxu0 0.0
    %2354 = vmatpush1.msra.mxu0 0.0
    %2355 = vmatprep.mubr.f32.mxu0 %v2289
    %2356 = vmatmul.mubr.f32.gmra.mrb[0].mxu0 %v2065
    %v2357 = vpop.f32.mrb[0].mxu0
    %v2358 = vadd.f32 0.0, %v2357
    %v2359 = vpop.f32.mrb[0].mxu0
    %2360 = vdwg.mxu0
    %v2361 = vadd.f32 %v2260, %v2358
    %v2362 = vld [vmem:[%s6] sm:$0x1]
    %v2364 = vlaneseq
    %v2365 = vshrl.u32 %v2364, 7
    %v2366 = vsub.s32 0, %v2365
    %v2367 = vrot.slane %v2362, %v2366
    %v2369 = vadd.f32 %v2361, %v2367
    %v2370 = vmax.f32 %v2369, 0.0
    %v2371 = vld [vmem:[#allocation6] sm:$0xff]
    %v2372 = vld [vmem:[#allocation6 + $0x8] sm:$0xff]
    %v2373 = vld [vmem:[#allocation6 + $0x10] sm:$0xff]
    %v2374 = vld [vmem:[#allocation6 + $0x18] sm:$0xff]
    %v2375 = vld [vmem:[#allocation6 + $0x20] sm:$0xff]
    %v2376 = vld [vmem:[#allocation6 + $0x28] sm:$0xff]
    %v2377 = vld [vmem:[#allocation6 + $0x30] sm:$0xff]
    %v2378 = vld [vmem:[#allocation6 + $0x38] sm:$0xff]
    %v2379 = vld [vmem:[#allocation6 + $0x40] sm:$0xff]
    %v2380 = vld [vmem:[#allocation6 + $0x48] sm:$0xff]
    %v2381 = vld [vmem:[#allocation6 + $0x50] sm:$0xff]
    %v2382 = vld [vmem:[#allocation6 + $0x58] sm:$0xff]
    %v2383 = vld [vmem:[#allocation6 + $0x60] sm:$0xff]
    %v2384 = vld [vmem:[#allocation6 + $0x68] sm:$0xff]
    %v2385 = vld [vmem:[#allocation6 + $0x70] sm:$0xff]
    %v2386 = vld [vmem:[#allocation6 + $0x78] sm:$0xff]
    %v2387 = vld [vmem:[%s8] sm:$0x1]
    %v2389 = vlaneseq
    %v2390 = vshrl.u32 %v2389, 7
    %v2391 = vsub.s32 0, %v2390
    %v2392 = vrot.slane %v2387, %v2391
    %2394 = vmatprep.subr.mxu0 0.0
    %2395 = vmatpush1.msra.mxu0 %v2371
    %2396 = vmatprep.subr.mxu0 0.0
    %2397 = vmatpush1.msra.mxu0 %v2372
    %2398 = vmatprep.subr.mxu0 0.0
    %2399 = vmatpush1.msra.mxu0 %v2373
    %2400 = vmatprep.subr.mxu0 0.0
    %2401 = vmatpush1.msra.mxu0 %v2374
    %2402 = vmatprep.subr.mxu0 0.0
    %2403 = vmatpush1.msra.mxu0 %v2375
    %2404 = vmatprep.subr.mxu0 0.0
    %2405 = vmatpush1.msra.mxu0 %v2376
    %2406 = vmatprep.subr.mxu0 0.0
    %2407 = vmatpush1.msra.mxu0 %v2377
    %2408 = vmatprep.subr.mxu0 0.0
    %2409 = vmatpush1.msra.mxu0 %v2378
    %2410 = vmatprep.subr.mxu0 0.0
    %2411 = vmatpush1.msra.mxu0 %v2379
    %2412 = vmatprep.subr.mxu0 0.0
    %2413 = vmatpush1.msra.mxu0 %v2380
    %2414 = vmatprep.subr.mxu0 0.0
    %2415 = vmatpush1.msra.mxu0 %v2381
    %2416 = vmatprep.subr.mxu0 0.0
    %2417 = vmatpush1.msra.mxu0 %v2382
    %2418 = vmatprep.subr.mxu0 0.0
    %2419 = vmatpush1.msra.mxu0 %v2383
    %2420 = vmatprep.subr.mxu0 0.0
    %2421 = vmatpush1.msra.mxu0 %v2384
    %2422 = vmatprep.subr.mxu0 0.0
    %2423 = vmatpush1.msra.mxu0 %v2385
    %2424 = vmatprep.subr.mxu0 0.0
    %2425 = vmatpush1.msra.mxu0 %v2386
    %2426 = vmatprep.subr.mxu0 0.0
    %2427 = vmatpush1.msra.mxu0 0.0
    %2428 = vmatprep.subr.mxu0 0.0
    %2429 = vmatpush1.msra.mxu0 0.0
    %2430 = vmatprep.subr.mxu0 0.0
    %2431 = vmatpush1.msra.mxu0 0.0
    %2432 = vmatprep.subr.mxu0 0.0
    %2433 = vmatpush1.msra.mxu0 0.0
    %2434 = vmatprep.subr.mxu0 0.0
    %2435 = vmatpush1.msra.mxu0 0.0
    %2436 = vmatprep.subr.mxu0 0.0
    %2437 = vmatpush1.msra.mxu0 0.0
    %2438 = vmatprep.subr.mxu0 0.0
    %2439 = vmatpush1.msra.mxu0 0.0
    %2440 = vmatprep.subr.mxu0 0.0
    %2441 = vmatpush1.msra.mxu0 0.0
    %2442 = vmatprep.subr.mxu0 0.0
    %2443 = vmatpush1.msra.mxu0 0.0
    %2444 = vmatprep.subr.mxu0 0.0
    %2445 = vmatpush1.msra.mxu0 0.0
    %2446 = vmatprep.subr.mxu0 0.0
    %2447 = vmatpush1.msra.mxu0 0.0
    %2448 = vmatprep.subr.mxu0 0.0
    %2449 = vmatpush1.msra.mxu0 0.0
    %2450 = vmatprep.subr.mxu0 0.0
    %2451 = vmatpush1.msra.mxu0 0.0
    %2452 = vmatprep.subr.mxu0 0.0
    %2453 = vmatpush1.msra.mxu0 0.0
    %2454 = vmatprep.subr.mxu0 0.0
    %2455 = vmatpush1.msra.mxu0 0.0
    %2456 = vmatprep.subr.mxu0 0.0
    %2457 = vmatpush1.msra.mxu0 0.0
    %2458 = vmatprep.mubr.f32.mxu0 0.0
    %2459 = vmatmul.mubr.f32.gmra.mrb[0].mxu0 %v2370
    %v2460 = vpop.f32.mrb[0].mxu0
    %v2461 = vadd.f32 %v2392, %v2460
    %v2462 = vpop.f32.mrb[0].mxu0
    %2463 = vdwg.mxu0
    %2464 = vst [vmem:[%s9] sm:$0xff] %v2461
    // Predicated region
    $region50: #{dqn_pacman_forward.1} parent=1 // pred_check
      _
    $region51: #{dqn_pacman_forward.1} parent=1 // pred_check_branch
      %2466 = sbr.rel (0) target = $region53
    $region52: #{dqn_pacman_forward.1} parent=1 // pred_region
      _
    $region53: #{dqn_pacman_forward.1} parent=1 // pred_fallthru
      _
    // Predicated region
    $region54: #{dqn_pacman_forward.1} parent=1 // pred_check
      _
    $region55: #{dqn_pacman_forward.1} parent=1 // pred_check_branch
      %2468 = sbr.rel (0) target = $region57
    $region56: #{dqn_pacman_forward.1} parent=1 // pred_region
      _
    $region57: #{dqn_pacman_forward.1} parent=1 // pred_fallthru
      _
    %2469 = vsyncpa [#allocation3], 1
    %2470 = vsyncpa [#allocation5], 1

</llo_original>
